<compile_context>
chip_gen: v7x
topology: tpu7x:2x2x1
jax: 0.10.0
libtpu: 0.0.40
codegen_flags: <defaults>
</compile_context>

<pallas_src>
import functools
import math

import jax
import jax.numpy as jnp
import numpy as np
from jax import lax
from jax.experimental import pallas as pl
from jax.experimental.pallas import tpu as pltpu


def _row_attn_kernel(x_ref, wq_ref, bq_ref, wk_ref, bk_ref, wv_ref, bv_ref,
                     wo_ref, bo_ref, out_ref, probs_ref, *, R, C, E, H, D):
    f32 = jnp.float32
    bf16 = jnp.bfloat16

    # (R, C, E) -> (R*C, E): layout-free merge (C is a multiple of the sublane tile).
    x2 = x_ref[0].reshape(R * C, E)

    # Full-width projections (bf16 in, f32 accumulate).  Scaling already folded
    # into wq/bq by the wrapper; biases are added in f32.
    q = jnp.dot(x2, wq_ref[...], preferred_element_type=f32) + bq_ref[...]
    k = jnp.dot(x2, wk_ref[...], preferred_element_type=f32) + bk_ref[...]
    v = jnp.dot(x2, wv_ref[...], preferred_element_type=f32) + bv_ref[...]

    q3 = q.reshape(R, C, E)
    k3 = k.reshape(R, C, E)
    v3 = v.reshape(R, C, E)

    ctx_parts = []
    for h in range(H):                              # heads fused in one grid step
        sl = slice(h * D, (h + 1) * D)
        qh = q3[:, :, sl].astype(bf16)              # (R, C, D)
        kh = k3[:, :, sl].astype(bf16)
        vh = v3[:, :, sl].astype(bf16)

        # logits[i, j] = sum_{r, d} q[r, i, d] * k[r, j, d]
        # One batched MXU op over the row axis, then a cheap add over axis 0.
        logits = jnp.einsum('rid,rjd->rij', qh, kh,
                            preferred_element_type=f32)
        logits = jnp.sum(logits, axis=0)                          # (C, C) f32

        # Softmax in f32; reciprocal runs on the EUP slot.
        m = jnp.max(logits, axis=-1, keepdims=True)
        e = jnp.exp(logits - m)
        s = jnp.sum(e, axis=-1, keepdims=True)
        p = e * pl.reciprocal(s, approx=True)                     # (C, C) f32
        probs_ref[h, 0] = p

        # context[r, i, d] = sum_j p[i, j] * v[r, j, d]  (batched over rows)
        pb = jnp.broadcast_to(p.astype(bf16)[None], (R, C, C))
        ctx_parts.append(
            jnp.einsum('rij,rjd->rid', pb, vh, preferred_element_type=f32))

    # Assemble the full context once, single full-width out_proj, single store.
    ctx = jnp.concatenate(ctx_parts, axis=-1).reshape(R * C, E)   # (R*C, E) f32
    out = jnp.dot(ctx.astype(bf16), wo_ref[...],
                  preferred_element_type=f32) + bo_ref[...]
    out_ref[0] = out.reshape(R, C, E)


def row_self_attention(x_rcbe, params, num_heads):
    """x_rcbe: (R, C, B, E) float32. Returns (output (R,C,B,E), attn_probs (H,B,C,C))."""
    R, C, B, E = x_rcbe.shape
    H = num_heads
    D = E // H
    scale = (D ** -0.5) / math.sqrt(R)

    wq, bq, wk, bk, wv, bv, wo, bo = params

    # Kernel consumes x as (B, R, C, E); bf16 for the MXU / half the DMA bytes.
    x = jnp.transpose(x_rcbe, (2, 0, 1, 3)).astype(jnp.bfloat16)

    # Fold the attention scaling into the q projection (constant folding at trace
    # time, removes a full VPU pass over q inside the kernel).
    wq_s = (wq * scale).astype(jnp.bfloat16)
    bq_s = (bq * scale).reshape(1, E).astype(jnp.float32)
    wk_b = wk.astype(jnp.bfloat16)
    wv_b = wv.astype(jnp.bfloat16)
    wo_b = wo.astype(jnp.bfloat16)
    bk_r = bk.reshape(1, E).astype(jnp.float32)
    bv_r = bv.reshape(1, E).astype(jnp.float32)
    bo_r = bo.reshape(1, E).astype(jnp.float32)

    kernel = functools.partial(_row_attn_kernel, R=R, C=C, E=E, H=H, D=D)

    w_spec = pl.BlockSpec((E, E), lambda b: (0, 0))
    b_spec = pl.BlockSpec((1, E), lambda b: (0, 0))

    out, probs = pl.pallas_call(
        kernel,
        grid=(B,),
        in_specs=[
            pl.BlockSpec((1, R, C, E), lambda b: (b, 0, 0, 0)),   # x
            w_spec, b_spec,                                       # q proj (scaled)
            w_spec, b_spec,                                       # k proj
            w_spec, b_spec,                                       # v proj
            w_spec, b_spec,                                       # out proj
        ],
        out_specs=[
            pl.BlockSpec((1, R, C, E), lambda b: (b, 0, 0, 0)),   # output (B,R,C,E)
            pl.BlockSpec((H, 1, C, C), lambda b: (0, b, 0, 0)),   # probs (H,B,C,C)
        ],
        out_shape=[
            jax.ShapeDtypeStruct((B, R, C, E), jnp.float32),
            jax.ShapeDtypeStruct((H, B, C, C), jnp.float32),
        ],
        compiler_params=pltpu.CompilerParams(
            dimension_semantics=("parallel",)),
    )(x, wq_s, bq_s, wk_b, bk_r, wv_b, bv_r, wo_b, bo_r)

    output = jnp.transpose(out, (1, 2, 0, 3))       # (R, C, B, E)
    return output, probs                            # probs already (H, B, C, C)


def reference(x_rcbe, params, num_heads):
    R, C, B, E = x_rcbe.shape
    H = num_heads
    D = E // H
    wq, bq, wk, bk, wv, bv, wo, bo = params
    scale = (D ** -0.5) / math.sqrt(R)
    hi = lax.Precision.HIGHEST
    q = (jnp.einsum('rcbe,ef->rcbf', x_rcbe, wq, precision=hi) + bq).reshape(R, C, B, H, D) * scale
    k = (jnp.einsum('rcbe,ef->rcbf', x_rcbe, wk, precision=hi) + bk).reshape(R, C, B, H, D)
    v = (jnp.einsum('rcbe,ef->rcbf', x_rcbe, wv, precision=hi) + bv).reshape(R, C, B, H, D)
    attn = jnp.einsum('rinhd,rjnhd->hnij', q, k, precision=hi)
    probs = jax.nn.softmax(attn, axis=-1)
    ctx = jnp.einsum('hnij,rjnhd->rinhd', probs, v, precision=hi).reshape(R, C, B, E)
    out = jnp.einsum('rcbe,ef->rcbf', ctx, wo, precision=hi) + bo
    return out, probs


if __name__ == "__main__":
    R, C, B, E, H = 8, 16, 2, 32, 4   # rows, cols, batch, embed_dim, heads

    key = jax.random.PRNGKey(0)
    keys = jax.random.split(key, 9)
    x = jax.random.normal(keys[0], (R, C, B, E), dtype=jnp.float32)

    s = 1.0 / math.sqrt(E)
    params = (
        jax.random.normal(keys[1], (E, E), jnp.float32) * s,   # Wq (in, out)
        jax.random.normal(keys[2], (E,), jnp.float32) * 0.1,   # bq
        jax.random.normal(keys[3], (E, E), jnp.float32) * s,   # Wk
        jax.random.normal(keys[4], (E,), jnp.float32) * 0.1,   # bk
        jax.random.normal(keys[5], (E, E), jnp.float32) * s,   # Wv
        jax.random.normal(keys[6], (E,), jnp.float32) * 0.1,   # bv
        jax.random.normal(keys[7], (E, E), jnp.float32) * s,   # Wo
        jax.random.normal(keys[8], (E,), jnp.float32) * 0.1,   # bo
    )

    out, probs = row_self_attention(x, params, H)
    jax.block_until_ready((out, probs))

    out_ref, probs_ref = reference(x, params, H)
    assert out.shape == (R, C, B, E) and probs.shape == (H, B, C, C)
    # Tolerance reflects bf16 MXU matmuls (f32 accumulation / f32 softmax) vs the
    # HIGHEST-precision f32 reference.
    np.testing.assert_allclose(np.asarray(probs), np.asarray(probs_ref), rtol=2e-2, atol=2e-2)
    np.testing.assert_allclose(np.asarray(out), np.asarray(out_ref), rtol=2e-2, atol=2e-2)
    print("KERNEL_OK")
</pallas_src>

<mosaic_0001>
module attributes {stable_mosaic.version = 11 : i64} {
  func.func @_row_attn_kernel(%arg0: i32, %arg1: memref<1x8x16x32xbf16, #tpu.memory_space<vmem>>, %arg2: memref<32x32xbf16, #tpu.memory_space<vmem>>, %arg3: memref<1x32xf32, #tpu.memory_space<vmem>>, %arg4: memref<32x32xbf16, #tpu.memory_space<vmem>>, %arg5: memref<1x32xf32, #tpu.memory_space<vmem>>, %arg6: memref<32x32xbf16, #tpu.memory_space<vmem>>, %arg7: memref<1x32xf32, #tpu.memory_space<vmem>>, %arg8: memref<32x32xbf16, #tpu.memory_space<vmem>>, %arg9: memref<1x32xf32, #tpu.memory_space<vmem>>, %arg10: memref<1x8x16x32xf32, #tpu.memory_space<vmem>>, %arg11: memref<4x1x16x16xf32, #tpu.memory_space<vmem>>) attributes {dimension_semantics = [#tpu.dimension_semantics<parallel>], iteration_bounds = array<i64: 2>, scalar_prefetch = 0 : i64, scratch_operands = 0 : i64, tpu.core_type = #tpu.core_type<tc>, window_params = [{transform_indices = @transform_0, window_bounds = array<i64: 1, 8, 16, 32>}, {pipeline_mode = #tpu.pipeline_mode<synchronous>, transform_indices = @transform_1, window_bounds = array<i64: 32, 32>}, {pipeline_mode = #tpu.pipeline_mode<synchronous>, transform_indices = @transform_2, window_bounds = array<i64: 1, 32>}, {pipeline_mode = #tpu.pipeline_mode<synchronous>, transform_indices = @transform_3, window_bounds = array<i64: 32, 32>}, {pipeline_mode = #tpu.pipeline_mode<synchronous>, transform_indices = @transform_4, window_bounds = array<i64: 1, 32>}, {pipeline_mode = #tpu.pipeline_mode<synchronous>, transform_indices = @transform_5, window_bounds = array<i64: 32, 32>}, {pipeline_mode = #tpu.pipeline_mode<synchronous>, transform_indices = @transform_6, window_bounds = array<i64: 1, 32>}, {pipeline_mode = #tpu.pipeline_mode<synchronous>, transform_indices = @transform_7, window_bounds = array<i64: 32, 32>}, {pipeline_mode = #tpu.pipeline_mode<synchronous>, transform_indices = @transform_8, window_bounds = array<i64: 1, 32>}, {transform_indices = @transform_9, window_bounds = array<i64: 1, 8, 16, 32>}, {transform_indices = @transform_10, window_bounds = array<i64: 4, 1, 16, 16>}]} {
    %c0 = arith.constant 0 : index
    %c0_0 = arith.constant 0 : index
    %c0_1 = arith.constant 0 : index
    %c0_2 = arith.constant 0 : index
    %0 = vector.load %arg1[%c0, %c0_0, %c0_1, %c0_2] : memref<1x8x16x32xbf16, #tpu.memory_space<vmem>>, vector<1x8x16x32xbf16>
    %1 = vector.shape_cast %0 : vector<1x8x16x32xbf16> to vector<8x16x32xbf16>
    %2 = vector.shape_cast %1 : vector<8x16x32xbf16> to vector<128x32xbf16>
    %c0_3 = arith.constant 0 : index
    %c0_4 = arith.constant 0 : index
    %3 = vector.load %arg2[%c0_3, %c0_4] : memref<32x32xbf16, #tpu.memory_space<vmem>>, vector<32x32xbf16>
    %cst = arith.constant dense<0.000000e+00> : vector<128x32xf32>
    %4 = tpu.matmul %2, %3, %cst {dimension_numbers = #tpu.dot_dimension_numbers<[1], [0], [0], [1], [0, 0, 1, 1], [], []>} : vector<128x32xbf16>, vector<32x32xbf16>, vector<128x32xf32> -> vector<128x32xf32>
    %c0_5 = arith.constant 0 : index
    %c0_6 = arith.constant 0 : index
    %5 = vector.load %arg3[%c0_5, %c0_6] : memref<1x32xf32, #tpu.memory_space<vmem>>, vector<1x32xf32>
    %6 = vector.broadcast %5 : vector<1x32xf32> to vector<128x32xf32>
    %7 = arith.addf %4, %6 : vector<128x32xf32>
    %c0_7 = arith.constant 0 : index
    %c0_8 = arith.constant 0 : index
    %8 = vector.load %arg4[%c0_7, %c0_8] : memref<32x32xbf16, #tpu.memory_space<vmem>>, vector<32x32xbf16>
    %cst_9 = arith.constant dense<0.000000e+00> : vector<128x32xf32>
    %9 = tpu.matmul %2, %8, %cst_9 {dimension_numbers = #tpu.dot_dimension_numbers<[1], [0], [0], [1], [0, 0, 1, 1], [], []>} : vector<128x32xbf16>, vector<32x32xbf16>, vector<128x32xf32> -> vector<128x32xf32>
    %c0_10 = arith.constant 0 : index
    %c0_11 = arith.constant 0 : index
    %10 = vector.load %arg5[%c0_10, %c0_11] : memref<1x32xf32, #tpu.memory_space<vmem>>, vector<1x32xf32>
    %11 = vector.broadcast %10 : vector<1x32xf32> to vector<128x32xf32>
    %12 = arith.addf %9, %11 : vector<128x32xf32>
    %c0_12 = arith.constant 0 : index
    %c0_13 = arith.constant 0 : index
    %13 = vector.load %arg6[%c0_12, %c0_13] : memref<32x32xbf16, #tpu.memory_space<vmem>>, vector<32x32xbf16>
    %cst_14 = arith.constant dense<0.000000e+00> : vector<128x32xf32>
    %14 = tpu.matmul %2, %13, %cst_14 {dimension_numbers = #tpu.dot_dimension_numbers<[1], [0], [0], [1], [0, 0, 1, 1], [], []>} : vector<128x32xbf16>, vector<32x32xbf16>, vector<128x32xf32> -> vector<128x32xf32>
    %c0_15 = arith.constant 0 : index
    %c0_16 = arith.constant 0 : index
    %15 = vector.load %arg7[%c0_15, %c0_16] : memref<1x32xf32, #tpu.memory_space<vmem>>, vector<1x32xf32>
    %16 = vector.broadcast %15 : vector<1x32xf32> to vector<128x32xf32>
    %17 = arith.addf %14, %16 : vector<128x32xf32>
    %18 = vector.shape_cast %7 : vector<128x32xf32> to vector<8x16x32xf32>
    %19 = vector.shape_cast %12 : vector<128x32xf32> to vector<8x16x32xf32>
    %20 = vector.shape_cast %17 : vector<128x32xf32> to vector<8x16x32xf32>
    %21 = vector.extract_strided_slice %18 {offsets = [0, 0, 0], sizes = [8, 16, 8], strides = [1, 1, 1]} : vector<8x16x32xf32> to vector<8x16x8xf32>
    %22 = arith.truncf %21 : vector<8x16x8xf32> to vector<8x16x8xbf16>
    %23 = vector.extract_strided_slice %19 {offsets = [0, 0, 0], sizes = [8, 16, 8], strides = [1, 1, 1]} : vector<8x16x32xf32> to vector<8x16x8xf32>
    %24 = arith.truncf %23 : vector<8x16x8xf32> to vector<8x16x8xbf16>
    %25 = vector.extract_strided_slice %20 {offsets = [0, 0, 0], sizes = [8, 16, 8], strides = [1, 1, 1]} : vector<8x16x32xf32> to vector<8x16x8xf32>
    %26 = arith.truncf %25 : vector<8x16x8xf32> to vector<8x16x8xbf16>
    "tpu.trace_start"() <{level = 10 : i32, message = "rid,rjd->rij"}> : () -> ()
    %cst_17 = arith.constant dense<0.000000e+00> : vector<8x16x16xf32>
    %27 = tpu.matmul %22, %24, %cst_17 {dimension_numbers = #tpu.dot_dimension_numbers<[2], [2], [1], [1], [0, 0, 0, 1, 1, 1], [0], [0]>} : vector<8x16x8xbf16>, vector<8x16x8xbf16>, vector<8x16x16xf32> -> vector<8x16x16xf32>
    "tpu.trace_stop"() : () -> ()
    %cst_18 = arith.constant dense<0.000000e+00> : vector<16x16xf32>
    %28 = vector.multi_reduction <add>, %27, %cst_18 [0] : vector<8x16x16xf32> to vector<16x16xf32>
    %cst_19 = arith.constant dense<0xFF800000> : vector<16xf32>
    %29 = vector.multi_reduction <maximumf>, %28, %cst_19 [1] : vector<16x16xf32> to vector<16xf32>
    %30 = vector.shape_cast %29 : vector<16xf32> to vector<16x1xf32>
    %31 = vector.broadcast %30 : vector<16x1xf32> to vector<16x16xf32>
    %32 = arith.subf %28, %31 : vector<16x16xf32>
    %33 = math.exp %32 : vector<16x16xf32>
    %cst_20 = arith.constant dense<0.000000e+00> : vector<16xf32>
    %34 = vector.multi_reduction <add>, %33, %cst_20 [1] : vector<16x16xf32> to vector<16xf32>
    %35 = vector.shape_cast %34 : vector<16xf32> to vector<16x1xf32>
    %36 = tpu.reciprocal %35 {approx = true} : vector<16x1xf32> -> vector<16x1xf32>
    %37 = vector.broadcast %36 : vector<16x1xf32> to vector<16x16xf32>
    %38 = arith.mulf %33, %37 : vector<16x16xf32>
    %c0_21 = arith.constant 0 : index
    %c0_22 = arith.constant 0 : index
    %c0_23 = arith.constant 0 : index
    %c0_24 = arith.constant 0 : index
    %39 = vector.load %arg11[%c0_21, %c0_22, %c0_23, %c0_24] : memref<4x1x16x16xf32, #tpu.memory_space<vmem>>, vector<1x1x16x16xf32>
    %40 = vector.shape_cast %39 : vector<1x1x16x16xf32> to vector<16x16xf32>
    %41 = vector.shape_cast %38 : vector<16x16xf32> to vector<1x1x16x16xf32>
    tpu.vector_store %arg11[%c0_21, %c0_22, %c0_23, %c0_24], %41 {strides = array<i32>} : memref<4x1x16x16xf32, #tpu.memory_space<vmem>>, vector<1x1x16x16xf32>,
    %42 = arith.truncf %38 : vector<16x16xf32> to vector<16x16xbf16>
    %43 = vector.shape_cast %42 : vector<16x16xbf16> to vector<1x16x16xbf16>
    %44 = vector.shape_cast %43 : vector<1x16x16xbf16> to vector<1x16x16xbf16>
    %45 = vector.broadcast %44 : vector<1x16x16xbf16> to vector<8x16x16xbf16>
    "tpu.trace_start"() <{level = 10 : i32, message = "rij,rjd->rid"}> : () -> ()
    %cst_25 = arith.constant dense<0.000000e+00> : vector<8x16x8xf32>
    %46 = tpu.matmul %45, %26, %cst_25 {dimension_numbers = #tpu.dot_dimension_numbers<[2], [1], [1], [2], [0, 0, 0, 1, 1, 2], [0], [0]>} : vector<8x16x16xbf16>, vector<8x16x8xbf16>, vector<8x16x8xf32> -> vector<8x16x8xf32>
    "tpu.trace_stop"() : () -> ()
    %47 = vector.extract_strided_slice %18 {offsets = [0, 0, 8], sizes = [8, 16, 8], strides = [1, 1, 1]} : vector<8x16x32xf32> to vector<8x16x8xf32>
    %48 = arith.truncf %47 : vector<8x16x8xf32> to vector<8x16x8xbf16>
    %49 = vector.extract_strided_slice %19 {offsets = [0, 0, 8], sizes = [8, 16, 8], strides = [1, 1, 1]} : vector<8x16x32xf32> to vector<8x16x8xf32>
    %50 = arith.truncf %49 : vector<8x16x8xf32> to vector<8x16x8xbf16>
    %51 = vector.extract_strided_slice %20 {offsets = [0, 0, 8], sizes = [8, 16, 8], strides = [1, 1, 1]} : vector<8x16x32xf32> to vector<8x16x8xf32>
    %52 = arith.truncf %51 : vector<8x16x8xf32> to vector<8x16x8xbf16>
    "tpu.trace_start"() <{level = 10 : i32, message = "rid,rjd->rij"}> : () -> ()
    %cst_26 = arith.constant dense<0.000000e+00> : vector<8x16x16xf32>
    %53 = tpu.matmul %48, %50, %cst_26 {dimension_numbers = #tpu.dot_dimension_numbers<[2], [2], [1], [1], [0, 0, 0, 1, 1, 1], [0], [0]>} : vector<8x16x8xbf16>, vector<8x16x8xbf16>, vector<8x16x16xf32> -> vector<8x16x16xf32>
    "tpu.trace_stop"() : () -> ()
    %cst_27 = arith.constant dense<0.000000e+00> : vector<16x16xf32>
    %54 = vector.multi_reduction <add>, %53, %cst_27 [0] : vector<8x16x16xf32> to vector<16x16xf32>
    %cst_28 = arith.constant dense<0xFF800000> : vector<16xf32>
    %55 = vector.multi_reduction <maximumf>, %54, %cst_28 [1] : vector<16x16xf32> to vector<16xf32>
    %56 = vector.shape_cast %55 : vector<16xf32> to vector<16x1xf32>
    %57 = vector.broadcast %56 : vector<16x1xf32> to vector<16x16xf32>
    %58 = arith.subf %54, %57 : vector<16x16xf32>
    %59 = math.exp %58 : vector<16x16xf32>
    %cst_29 = arith.constant dense<0.000000e+00> : vector<16xf32>
    %60 = vector.multi_reduction <add>, %59, %cst_29 [1] : vector<16x16xf32> to vector<16xf32>
    %61 = vector.shape_cast %60 : vector<16xf32> to vector<16x1xf32>
    %62 = tpu.reciprocal %61 {approx = true} : vector<16x1xf32> -> vector<16x1xf32>
    %63 = vector.broadcast %62 : vector<16x1xf32> to vector<16x16xf32>
    %64 = arith.mulf %59, %63 : vector<16x16xf32>
    %c1 = arith.constant 1 : index
    %c0_30 = arith.constant 0 : index
    %c0_31 = arith.constant 0 : index
    %c0_32 = arith.constant 0 : index
    %65 = vector.load %arg11[%c1, %c0_30, %c0_31, %c0_32] : memref<4x1x16x16xf32, #tpu.memory_space<vmem>>, vector<1x1x16x16xf32>
    %66 = vector.shape_cast %65 : vector<1x1x16x16xf32> to vector<16x16xf32>
    %67 = vector.shape_cast %64 : vector<16x16xf32> to vector<1x1x16x16xf32>
    tpu.vector_store %arg11[%c1, %c0_30, %c0_31, %c0_32], %67 {strides = array<i32>} : memref<4x1x16x16xf32, #tpu.memory_space<vmem>>, vector<1x1x16x16xf32>,
    %68 = arith.truncf %64 : vector<16x16xf32> to vector<16x16xbf16>
    %69 = vector.shape_cast %68 : vector<16x16xbf16> to vector<1x16x16xbf16>
    %70 = vector.shape_cast %69 : vector<1x16x16xbf16> to vector<1x16x16xbf16>
    %71 = vector.broadcast %70 : vector<1x16x16xbf16> to vector<8x16x16xbf16>
    "tpu.trace_start"() <{level = 10 : i32, message = "rij,rjd->rid"}> : () -> ()
    %cst_33 = arith.constant dense<0.000000e+00> : vector<8x16x8xf32>
    %72 = tpu.matmul %71, %52, %cst_33 {dimension_numbers = #tpu.dot_dimension_numbers<[2], [1], [1], [2], [0, 0, 0, 1, 1, 2], [0], [0]>} : vector<8x16x16xbf16>, vector<8x16x8xbf16>, vector<8x16x8xf32> -> vector<8x16x8xf32>
    "tpu.trace_stop"() : () -> ()
    %73 = vector.extract_strided_slice %18 {offsets = [0, 0, 16], sizes = [8, 16, 8], strides = [1, 1, 1]} : vector<8x16x32xf32> to vector<8x16x8xf32>
    %74 = arith.truncf %73 : vector<8x16x8xf32> to vector<8x16x8xbf16>
    %75 = vector.extract_strided_slice %19 {offsets = [0, 0, 16], sizes = [8, 16, 8], strides = [1, 1, 1]} : vector<8x16x32xf32> to vector<8x16x8xf32>
    %76 = arith.truncf %75 : vector<8x16x8xf32> to vector<8x16x8xbf16>
    %77 = vector.extract_strided_slice %20 {offsets = [0, 0, 16], sizes = [8, 16, 8], strides = [1, 1, 1]} : vector<8x16x32xf32> to vector<8x16x8xf32>
    %78 = arith.truncf %77 : vector<8x16x8xf32> to vector<8x16x8xbf16>
    "tpu.trace_start"() <{level = 10 : i32, message = "rid,rjd->rij"}> : () -> ()
    %cst_34 = arith.constant dense<0.000000e+00> : vector<8x16x16xf32>
    %79 = tpu.matmul %74, %76, %cst_34 {dimension_numbers = #tpu.dot_dimension_numbers<[2], [2], [1], [1], [0, 0, 0, 1, 1, 1], [0], [0]>} : vector<8x16x8xbf16>, vector<8x16x8xbf16>, vector<8x16x16xf32> -> vector<8x16x16xf32>
    "tpu.trace_stop"() : () -> ()
    %cst_35 = arith.constant dense<0.000000e+00> : vector<16x16xf32>
    %80 = vector.multi_reduction <add>, %79, %cst_35 [0] : vector<8x16x16xf32> to vector<16x16xf32>
    %cst_36 = arith.constant dense<0xFF800000> : vector<16xf32>
    %81 = vector.multi_reduction <maximumf>, %80, %cst_36 [1] : vector<16x16xf32> to vector<16xf32>
    %82 = vector.shape_cast %81 : vector<16xf32> to vector<16x1xf32>
    %83 = vector.broadcast %82 : vector<16x1xf32> to vector<16x16xf32>
    %84 = arith.subf %80, %83 : vector<16x16xf32>
    %85 = math.exp %84 : vector<16x16xf32>
    %cst_37 = arith.constant dense<0.000000e+00> : vector<16xf32>
    %86 = vector.multi_reduction <add>, %85, %cst_37 [1] : vector<16x16xf32> to vector<16xf32>
    %87 = vector.shape_cast %86 : vector<16xf32> to vector<16x1xf32>
    %88 = tpu.reciprocal %87 {approx = true} : vector<16x1xf32> -> vector<16x1xf32>
    %89 = vector.broadcast %88 : vector<16x1xf32> to vector<16x16xf32>
    %90 = arith.mulf %85, %89 : vector<16x16xf32>
    %c2 = arith.constant 2 : index
    %c0_38 = arith.constant 0 : index
    %c0_39 = arith.constant 0 : index
    %c0_40 = arith.constant 0 : index
    %91 = vector.load %arg11[%c2, %c0_38, %c0_39, %c0_40] : memref<4x1x16x16xf32, #tpu.memory_space<vmem>>, vector<1x1x16x16xf32>
    %92 = vector.shape_cast %91 : vector<1x1x16x16xf32> to vector<16x16xf32>
    %93 = vector.shape_cast %90 : vector<16x16xf32> to vector<1x1x16x16xf32>
    tpu.vector_store %arg11[%c2, %c0_38, %c0_39, %c0_40], %93 {strides = array<i32>} : memref<4x1x16x16xf32, #tpu.memory_space<vmem>>, vector<1x1x16x16xf32>,
    %94 = arith.truncf %90 : vector<16x16xf32> to vector<16x16xbf16>
    %95 = vector.shape_cast %94 : vector<16x16xbf16> to vector<1x16x16xbf16>
    %96 = vector.shape_cast %95 : vector<1x16x16xbf16> to vector<1x16x16xbf16>
    %97 = vector.broadcast %96 : vector<1x16x16xbf16> to vector<8x16x16xbf16>
    "tpu.trace_start"() <{level = 10 : i32, message = "rij,rjd->rid"}> : () -> ()
    %cst_41 = arith.constant dense<0.000000e+00> : vector<8x16x8xf32>
    %98 = tpu.matmul %97, %78, %cst_41 {dimension_numbers = #tpu.dot_dimension_numbers<[2], [1], [1], [2], [0, 0, 0, 1, 1, 2], [0], [0]>} : vector<8x16x16xbf16>, vector<8x16x8xbf16>, vector<8x16x8xf32> -> vector<8x16x8xf32>
    "tpu.trace_stop"() : () -> ()
    %99 = vector.extract_strided_slice %18 {offsets = [0, 0, 24], sizes = [8, 16, 8], strides = [1, 1, 1]} : vector<8x16x32xf32> to vector<8x16x8xf32>
    %100 = arith.truncf %99 : vector<8x16x8xf32> to vector<8x16x8xbf16>
    %101 = vector.extract_strided_slice %19 {offsets = [0, 0, 24], sizes = [8, 16, 8], strides = [1, 1, 1]} : vector<8x16x32xf32> to vector<8x16x8xf32>
    %102 = arith.truncf %101 : vector<8x16x8xf32> to vector<8x16x8xbf16>
    %103 = vector.extract_strided_slice %20 {offsets = [0, 0, 24], sizes = [8, 16, 8], strides = [1, 1, 1]} : vector<8x16x32xf32> to vector<8x16x8xf32>
    %104 = arith.truncf %103 : vector<8x16x8xf32> to vector<8x16x8xbf16>
    "tpu.trace_start"() <{level = 10 : i32, message = "rid,rjd->rij"}> : () -> ()
    %cst_42 = arith.constant dense<0.000000e+00> : vector<8x16x16xf32>
    %105 = tpu.matmul %100, %102, %cst_42 {dimension_numbers = #tpu.dot_dimension_numbers<[2], [2], [1], [1], [0, 0, 0, 1, 1, 1], [0], [0]>} : vector<8x16x8xbf16>, vector<8x16x8xbf16>, vector<8x16x16xf32> -> vector<8x16x16xf32>
    "tpu.trace_stop"() : () -> ()
    %cst_43 = arith.constant dense<0.000000e+00> : vector<16x16xf32>
    %106 = vector.multi_reduction <add>, %105, %cst_43 [0] : vector<8x16x16xf32> to vector<16x16xf32>
    %cst_44 = arith.constant dense<0xFF800000> : vector<16xf32>
    %107 = vector.multi_reduction <maximumf>, %106, %cst_44 [1] : vector<16x16xf32> to vector<16xf32>
    %108 = vector.shape_cast %107 : vector<16xf32> to vector<16x1xf32>
    %109 = vector.broadcast %108 : vector<16x1xf32> to vector<16x16xf32>
    %110 = arith.subf %106, %109 : vector<16x16xf32>
    %111 = math.exp %110 : vector<16x16xf32>
    %cst_45 = arith.constant dense<0.000000e+00> : vector<16xf32>
    %112 = vector.multi_reduction <add>, %111, %cst_45 [1] : vector<16x16xf32> to vector<16xf32>
    %113 = vector.shape_cast %112 : vector<16xf32> to vector<16x1xf32>
    %114 = tpu.reciprocal %113 {approx = true} : vector<16x1xf32> -> vector<16x1xf32>
    %115 = vector.broadcast %114 : vector<16x1xf32> to vector<16x16xf32>
    %116 = arith.mulf %111, %115 : vector<16x16xf32>
    %c3 = arith.constant 3 : index
    %c0_46 = arith.constant 0 : index
    %c0_47 = arith.constant 0 : index
    %c0_48 = arith.constant 0 : index
    %117 = vector.load %arg11[%c3, %c0_46, %c0_47, %c0_48] : memref<4x1x16x16xf32, #tpu.memory_space<vmem>>, vector<1x1x16x16xf32>
    %118 = vector.shape_cast %117 : vector<1x1x16x16xf32> to vector<16x16xf32>
    %119 = vector.shape_cast %116 : vector<16x16xf32> to vector<1x1x16x16xf32>
    tpu.vector_store %arg11[%c3, %c0_46, %c0_47, %c0_48], %119 {strides = array<i32>} : memref<4x1x16x16xf32, #tpu.memory_space<vmem>>, vector<1x1x16x16xf32>,
    %120 = arith.truncf %116 : vector<16x16xf32> to vector<16x16xbf16>
    %121 = vector.shape_cast %120 : vector<16x16xbf16> to vector<1x16x16xbf16>
    %122 = vector.shape_cast %121 : vector<1x16x16xbf16> to vector<1x16x16xbf16>
    %123 = vector.broadcast %122 : vector<1x16x16xbf16> to vector<8x16x16xbf16>
    "tpu.trace_start"() <{level = 10 : i32, message = "rij,rjd->rid"}> : () -> ()
    %cst_49 = arith.constant dense<0.000000e+00> : vector<8x16x8xf32>
    %124 = tpu.matmul %123, %104, %cst_49 {dimension_numbers = #tpu.dot_dimension_numbers<[2], [1], [1], [2], [0, 0, 0, 1, 1, 2], [0], [0]>} : vector<8x16x16xbf16>, vector<8x16x8xbf16>, vector<8x16x8xf32> -> vector<8x16x8xf32>
    "tpu.trace_stop"() : () -> ()
    %125 = tpu.concatenate %46, %72, %98, %124 in 2 : vector<8x16x8xf32>, vector<8x16x8xf32>, vector<8x16x8xf32>, vector<8x16x8xf32> -> vector<8x16x32xf32>
    %126 = vector.shape_cast %125 : vector<8x16x32xf32> to vector<128x32xf32>
    %127 = arith.truncf %126 : vector<128x32xf32> to vector<128x32xbf16>
    %c0_50 = arith.constant 0 : index
    %c0_51 = arith.constant 0 : index
    %128 = vector.load %arg8[%c0_50, %c0_51] : memref<32x32xbf16, #tpu.memory_space<vmem>>, vector<32x32xbf16>
    %cst_52 = arith.constant dense<0.000000e+00> : vector<128x32xf32>
    %129 = tpu.matmul %127, %128, %cst_52 {dimension_numbers = #tpu.dot_dimension_numbers<[1], [0], [0], [1], [0, 0, 1, 1], [], []>} : vector<128x32xbf16>, vector<32x32xbf16>, vector<128x32xf32> -> vector<128x32xf32>
    %c0_53 = arith.constant 0 : index
    %c0_54 = arith.constant 0 : index
    %130 = vector.load %arg9[%c0_53, %c0_54] : memref<1x32xf32, #tpu.memory_space<vmem>>, vector<1x32xf32>
    %131 = vector.broadcast %130 : vector<1x32xf32> to vector<128x32xf32>
    %132 = arith.addf %129, %131 : vector<128x32xf32>
    %133 = vector.shape_cast %132 : vector<128x32xf32> to vector<8x16x32xf32>
    %c0_55 = arith.constant 0 : index
    %c0_56 = arith.constant 0 : index
    %c0_57 = arith.constant 0 : index
    %c0_58 = arith.constant 0 : index
    %134 = vector.load %arg10[%c0_55, %c0_56, %c0_57, %c0_58] : memref<1x8x16x32xf32, #tpu.memory_space<vmem>>, vector<1x8x16x32xf32>
    %135 = vector.shape_cast %134 : vector<1x8x16x32xf32> to vector<8x16x32xf32>
    %136 = vector.shape_cast %133 : vector<8x16x32xf32> to vector<1x8x16x32xf32>
    tpu.vector_store %arg10[%c0_55, %c0_56, %c0_57, %c0_58], %136 {strides = array<i32>} : memref<1x8x16x32xf32, #tpu.memory_space<vmem>>, vector<1x8x16x32xf32>,
    return
  }
  func.func @transform_0(%arg0: i32) -> (i32, i32, i32, i32) {
    %c0_i32 = arith.constant 0 : i32
    %c0_i32_0 = arith.constant 0 : i32
    %c0_i32_1 = arith.constant 0 : i32
    %c0_i32_2 = arith.constant 0 : i32
    return %arg0, %c0_i32, %c0_i32_0, %c0_i32_1 : i32, i32, i32, i32
  }
  func.func @transform_1(%arg0: i32) -> (i32, i32) {
    %c0_i32 = arith.constant 0 : i32
    %c0_i32_0 = arith.constant 0 : i32
    %c0_i32_1 = arith.constant 0 : i32
    return %c0_i32, %c0_i32_0 : i32, i32
  }
  func.func @transform_2(%arg0: i32) -> (i32, i32) {
    %c0_i32 = arith.constant 0 : i32
    %c0_i32_0 = arith.constant 0 : i32
    %c0_i32_1 = arith.constant 0 : i32
    return %c0_i32, %c0_i32_0 : i32, i32
  }
  func.func @transform_3(%arg0: i32) -> (i32, i32) {
    %c0_i32 = arith.constant 0 : i32
    %c0_i32_0 = arith.constant 0 : i32
    %c0_i32_1 = arith.constant 0 : i32
    return %c0_i32, %c0_i32_0 : i32, i32
  }
  func.func @transform_4(%arg0: i32) -> (i32, i32) {
    %c0_i32 = arith.constant 0 : i32
    %c0_i32_0 = arith.constant 0 : i32
    %c0_i32_1 = arith.constant 0 : i32
    return %c0_i32, %c0_i32_0 : i32, i32
  }
  func.func @transform_5(%arg0: i32) -> (i32, i32) {
    %c0_i32 = arith.constant 0 : i32
    %c0_i32_0 = arith.constant 0 : i32
    %c0_i32_1 = arith.constant 0 : i32
    return %c0_i32, %c0_i32_0 : i32, i32
  }
  func.func @transform_6(%arg0: i32) -> (i32, i32) {
    %c0_i32 = arith.constant 0 : i32
    %c0_i32_0 = arith.constant 0 : i32
    %c0_i32_1 = arith.constant 0 : i32
    return %c0_i32, %c0_i32_0 : i32, i32
  }
  func.func @transform_7(%arg0: i32) -> (i32, i32) {
    %c0_i32 = arith.constant 0 : i32
    %c0_i32_0 = arith.constant 0 : i32
    %c0_i32_1 = arith.constant 0 : i32
    return %c0_i32, %c0_i32_0 : i32, i32
  }
  func.func @transform_8(%arg0: i32) -> (i32, i32) {
    %c0_i32 = arith.constant 0 : i32
    %c0_i32_0 = arith.constant 0 : i32
    %c0_i32_1 = arith.constant 0 : i32
    return %c0_i32, %c0_i32_0 : i32, i32
  }
  func.func @transform_9(%arg0: i32) -> (i32, i32, i32, i32) {
    %c0_i32 = arith.constant 0 : i32
    %c0_i32_0 = arith.constant 0 : i32
    %c0_i32_1 = arith.constant 0 : i32
    %c0_i32_2 = arith.constant 0 : i32
    return %arg0, %c0_i32, %c0_i32_0, %c0_i32_1 : i32, i32, i32, i32
  }
  func.func @transform_10(%arg0: i32) -> (i32, i32, i32, i32) {
    %c0_i32 = arith.constant 0 : i32
    %c0_i32_0 = arith.constant 0 : i32
    %c0_i32_1 = arith.constant 0 : i32
    %c0_i32_2 = arith.constant 0 : i32
    return %c0_i32, %arg0, %c0_i32_0, %c0_i32_1 : i32, i32, i32, i32
  }
}

</mosaic_0001>

<llo_original>
// kernel: tpu_custom_call.1
$region0: #{tpu_custom_call.1}
  #allocation0 [shape = 'u32[]', space=smem, size = 0x4, offset = 0x4, fixed_abs, tag = 'smem constant byte address 0x4 - core index']
  #allocation1 [shape = 'u32[144,128]{1,0:T(1,128)}', space=vmem, size = 0x12000, scoped, tag = 'internal scratch']
  #allocation13 [shape = 's32[]', space=sflag, size = 0x4, offset = 0, fixed_abs, tag = 'sflag constant byte address 0x0 - dummy sync flag']
  %s0 = inlined_call_operand.hbm [shape: bf16[2,8,16,32], index: 0, kind: input, shape index: {}]
  %s1 = inlined_call_operand.hbm [shape: bf16[32,32], index: 1, kind: input, shape index: {}]
  %s2 = inlined_call_operand.vmem [shape: f32[1,32], index: 2, kind: input, shape index: {}]
  %s3 = inlined_call_operand.hbm [shape: bf16[32,32], index: 3, kind: input, shape index: {}]
  %s4 = inlined_call_operand.vmem [shape: f32[1,32], index: 4, kind: input, shape index: {}]
  %s5 = inlined_call_operand.vmem [shape: bf16[32,32], index: 5, kind: input, shape index: {}]
  %s6 = inlined_call_operand.vmem [shape: f32[1,32], index: 6, kind: input, shape index: {}]
  %s7 = inlined_call_operand.hbm [shape: bf16[32,32], index: 7, kind: input, shape index: {}]
  %s8 = inlined_call_operand.vmem [shape: f32[1,32], index: 8, kind: input, shape index: {}]
  %s9 = inlined_call_operand.hbm [shape: f32[2,8,16,32], index: 9, kind: output, shape index: {0}]
  %s10 = inlined_call_operand.hbm [shape: f32[4,2,16,16], index: 10, kind: output, shape index: {1}]
  %11 = xla_tuple %s9, %s10
  %s12 = sld [smem:[#allocation0]]
  $region93: #{tpu_custom_call.1} parent=0
    _
  %s14 = ssub.s32 1, %s12
  %s15 = scalar_select 0, %s14, %s12
  $region1: #{tpu_custom_call.1} parent=0
    #allocation2 [shape = 'u8[65536]{0}', space=vmem, size = 0x10000, scoped, tag = 'input window, operand 0']
    #allocation3 [shape = 's32[2]{0}', space=sflag, size = 0x8, scoped, tag = 'scoped memory for tpu_custom_call.1']
    #allocation4 [shape = 's32[2]{0}', space=sflag, size = 0x8, scoped, tag = 'scoped memory for tpu_custom_call.1']
    #allocation5 [shape = 'u8[8192]{0}', space=vmem, size = 0x2000, scoped, tag = 'input window, operand 1, single buffered']
    #allocation6 [shape = 's32[1]{0}', space=sflag, size = 0x4, scoped, tag = 'scoped memory for tpu_custom_call.1']
    #allocation7 [shape = 'u8[8192]{0}', space=vmem, size = 0x2000, scoped, tag = 'input window, operand 3, single buffered']
    #allocation8 [shape = 'u8[8192]{0}', space=vmem, size = 0x2000, scoped, tag = 'input window, operand 7, single buffered']
    #allocation9 [shape = 's32[1]{0}', space=sflag, size = 0x4, scoped, tag = 'scoped memory for tpu_custom_call.1']
    #allocation10 [shape = 'u8[131072]{0}', space=vmem, size = 0x20000, scoped, tag = 'output window, operand 0']
    #allocation11 [shape = 'u8[65536]{0}', space=vmem, size = 0x10000, scoped, tag = 'output window, operand 1']
    #allocation12 [shape = 's32[2]{0}', space=sflag, size = 0x8, scoped, tag = 'scoped memory for tpu_custom_call.1']
    %16 = vsyncpa [#allocation3], 0
    %s17 = scalar_lea.sflag [#allocation3], 1
    %18 = vsyncpa %s17, 0
    %19 = vsyncpa [#allocation6], 0
    %20 = vsyncpa [#allocation9], 0
    %21 = vsyncpa [#allocation4], 0
    %s22 = scalar_lea.sflag [#allocation4], 1
    %23 = vsyncpa %s22, 0
    %24 = vsyncpa [#allocation12], 0
    %s25 = scalar_lea.sflag [#allocation12], 1
    %26 = vsyncpa %s25, 0
    loop: start=0, step=1, limit=4
    $region2: #{tpu_custom_call.1} parent=1 // loop_pre_header
      _
    $region3: #{tpu_custom_call.1} parent=1 // loop_header
      %s28 = sphi 0, %s32
      %p29 = scmp.ge.s32.totalorder %s28, 4
      %s38 = sphi 0, %s40
      %s41 = sphi 0, %s38
      %s42 = sphi 0, %s41
      %s58 = sphi 0, %s42
      %s62 = sphi 0, %s62
      %s64 = sphi 0, %s62
      %s65 = sphi 0, %s64
      %s79 = sphi 0, %s65
      %s83 = sphi 0, %s83
      %s85 = sphi 0, %s83
      %s86 = sphi 0, %s85
      %s100 = sphi 0, %s86
      %s104 = sphi 0, %s104
      %s106 = sphi 0, %s104
      %s107 = sphi 0, %s106
      %s121 = sphi 0, %s107
      %s125 = sphi 0, %s125
      %s127 = sphi 0, %s125
      %s128 = sphi 0, %s127
      %s142 = sphi 0, %s128
      %s146 = sphi 0, %s146
      %s148 = sphi 0, %s146
      %s149 = sphi 0, %s148
      %s163 = sphi 0, %s149
      %s167 = sphi 0, %s167
      %s169 = sphi 0, %s167
      %s170 = sphi 0, %s169
      %s184 = sphi 0, %s170
      %s188 = sphi 0, %s188
      %s190 = sphi 0, %s188
      %s191 = sphi 0, %s190
      %s205 = sphi 0, %s191
      %s209 = sphi 0, %s209
      %s211 = sphi 0, %s209
      %s212 = sphi 0, %s211
      %s226 = sphi 0, %s212
      %s232 = sphi 0, %s234
      %s235 = sphi 0, %s232
      %s236 = sphi 0, %s235
      %s252 = sphi 0, %s236
      %s258 = sphi 0, %s260
      %s261 = sphi 0, %s258
      %s262 = sphi 0, %s261
      %s278 = sphi 0, %s262
    $region4: #{tpu_custom_call.1} parent=1 // loop_header_branch
      %31 = sbr.rel (%p29) target = $region8
    $region5: #{tpu_custom_call.1} parent=1 // loop_body
      %s33 = ssub.s32 %s28, 1
      %s34 = ssub.s32 %s28, 2
      %s35 = sadd.s32 %s28, 1
      %s36 = ssub.s32 %s28, %s35
      %p37 = scmp.eq.s32.totalorder %s36, 0
      %s39 = sadd.s32 %s38, 1
      %s40 = scalar_select %p37, %s38, %s39
      %p43 = pneg %p37
      %p44 = scmp.eq.s32.totalorder %s28, 1
      %p45 = por %p43, %p44
      %p46 = scmp.ne.s32.totalorder %s38, %s41
      %p47 = scmp.eq.s32.totalorder %s28, 0
      %p48 = por %p46, %p47
      %p49 = scmp.ne.s32.totalorder %s38, %s41
      %p50 = scmp.eq.s32.totalorder %s33, 1
      %p51 = por %p49, %p50
      %p52 = scmp.ne.s32.totalorder %s41, %s42
      %p53 = scmp.eq.s32.totalorder %s33, 0
      %p54 = por %p52, %p53
      %p55 = scmp.ne.s32.totalorder %s41, %s42
      %p56 = scmp.eq.s32.totalorder %s34, 1
      %p57 = por %p55, %p56
      %p59 = scmp.ne.s32.totalorder %s42, %s58
      %p60 = scmp.eq.s32.totalorder %s34, 0
      %p61 = por %p59, %p60
      %s63 = sadd.s32 %s62, 1
      %p66 = scmp.eq.s32.totalorder %s28, 1
      %p67 = scmp.ne.s32.totalorder %s62, %s64
      %p68 = scmp.eq.s32.totalorder %s28, 0
      %p69 = por %p67, %p68
      %p70 = scmp.ne.s32.totalorder %s62, %s64
      %p71 = scmp.eq.s32.totalorder %s33, 1
      %p72 = por %p70, %p71
      %p73 = scmp.ne.s32.totalorder %s64, %s65
      %p74 = scmp.eq.s32.totalorder %s33, 0
      %p75 = por %p73, %p74
      %p76 = scmp.ne.s32.totalorder %s64, %s65
      %p77 = scmp.eq.s32.totalorder %s34, 1
      %p78 = por %p76, %p77
      %p80 = scmp.ne.s32.totalorder %s65, %s79
      %p81 = scmp.eq.s32.totalorder %s34, 0
      %p82 = por %p80, %p81
      %s84 = sadd.s32 %s83, 1
      %p87 = scmp.eq.s32.totalorder %s28, 1
      %p88 = scmp.ne.s32.totalorder %s83, %s85
      %p89 = scmp.eq.s32.totalorder %s28, 0
      %p90 = por %p88, %p89
      %p91 = scmp.ne.s32.totalorder %s83, %s85
      %p92 = scmp.eq.s32.totalorder %s33, 1
      %p93 = por %p91, %p92
      %p94 = scmp.ne.s32.totalorder %s85, %s86
      %p95 = scmp.eq.s32.totalorder %s33, 0
      %p96 = por %p94, %p95
      %p97 = scmp.ne.s32.totalorder %s85, %s86
      %p98 = scmp.eq.s32.totalorder %s34, 1
      %p99 = por %p97, %p98
      %p101 = scmp.ne.s32.totalorder %s86, %s100
      %p102 = scmp.eq.s32.totalorder %s34, 0
      %p103 = por %p101, %p102
      %s105 = sadd.s32 %s104, 1
      %p108 = scmp.eq.s32.totalorder %s28, 1
      %p109 = scmp.ne.s32.totalorder %s104, %s106
      %p110 = scmp.eq.s32.totalorder %s28, 0
      %p111 = por %p109, %p110
      %p112 = scmp.ne.s32.totalorder %s104, %s106
      %p113 = scmp.eq.s32.totalorder %s33, 1
      %p114 = por %p112, %p113
      %p115 = scmp.ne.s32.totalorder %s106, %s107
      %p116 = scmp.eq.s32.totalorder %s33, 0
      %p117 = por %p115, %p116
      %p118 = scmp.ne.s32.totalorder %s106, %s107
      %p119 = scmp.eq.s32.totalorder %s34, 1
      %p120 = por %p118, %p119
      %p122 = scmp.ne.s32.totalorder %s107, %s121
      %p123 = scmp.eq.s32.totalorder %s34, 0
      %p124 = por %p122, %p123
      %s126 = sadd.s32 %s125, 1
      %p129 = scmp.eq.s32.totalorder %s28, 1
      %p130 = scmp.ne.s32.totalorder %s125, %s127
      %p131 = scmp.eq.s32.totalorder %s28, 0
      %p132 = por %p130, %p131
      %p133 = scmp.ne.s32.totalorder %s125, %s127
      %p134 = scmp.eq.s32.totalorder %s33, 1
      %p135 = por %p133, %p134
      %p136 = scmp.ne.s32.totalorder %s127, %s128
      %p137 = scmp.eq.s32.totalorder %s33, 0
      %p138 = por %p136, %p137
      %p139 = scmp.ne.s32.totalorder %s127, %s128
      %p140 = scmp.eq.s32.totalorder %s34, 1
      %p141 = por %p139, %p140
      %p143 = scmp.ne.s32.totalorder %s128, %s142
      %p144 = scmp.eq.s32.totalorder %s34, 0
      %p145 = por %p143, %p144
      %s147 = sadd.s32 %s146, 1
      %p150 = scmp.eq.s32.totalorder %s28, 1
      %p151 = scmp.ne.s32.totalorder %s146, %s148
      %p152 = scmp.eq.s32.totalorder %s28, 0
      %p153 = por %p151, %p152
      %p154 = scmp.ne.s32.totalorder %s146, %s148
      %p155 = scmp.eq.s32.totalorder %s33, 1
      %p156 = por %p154, %p155
      %p157 = scmp.ne.s32.totalorder %s148, %s149
      %p158 = scmp.eq.s32.totalorder %s33, 0
      %p159 = por %p157, %p158
      %p160 = scmp.ne.s32.totalorder %s148, %s149
      %p161 = scmp.eq.s32.totalorder %s34, 1
      %p162 = por %p160, %p161
      %p164 = scmp.ne.s32.totalorder %s149, %s163
      %p165 = scmp.eq.s32.totalorder %s34, 0
      %p166 = por %p164, %p165
      %s168 = sadd.s32 %s167, 1
      %p171 = scmp.eq.s32.totalorder %s28, 1
      %p172 = scmp.ne.s32.totalorder %s167, %s169
      %p173 = scmp.eq.s32.totalorder %s28, 0
      %p174 = por %p172, %p173
      %p175 = scmp.ne.s32.totalorder %s167, %s169
      %p176 = scmp.eq.s32.totalorder %s33, 1
      %p177 = por %p175, %p176
      %p178 = scmp.ne.s32.totalorder %s169, %s170
      %p179 = scmp.eq.s32.totalorder %s33, 0
      %p180 = por %p178, %p179
      %p181 = scmp.ne.s32.totalorder %s169, %s170
      %p182 = scmp.eq.s32.totalorder %s34, 1
      %p183 = por %p181, %p182
      %p185 = scmp.ne.s32.totalorder %s170, %s184
      %p186 = scmp.eq.s32.totalorder %s34, 0
      %p187 = por %p185, %p186
      %s189 = sadd.s32 %s188, 1
      %p192 = scmp.eq.s32.totalorder %s28, 1
      %p193 = scmp.ne.s32.totalorder %s188, %s190
      %p194 = scmp.eq.s32.totalorder %s28, 0
      %p195 = por %p193, %p194
      %p196 = scmp.ne.s32.totalorder %s188, %s190
      %p197 = scmp.eq.s32.totalorder %s33, 1
      %p198 = por %p196, %p197
      %p199 = scmp.ne.s32.totalorder %s190, %s191
      %p200 = scmp.eq.s32.totalorder %s33, 0
      %p201 = por %p199, %p200
      %p202 = scmp.ne.s32.totalorder %s190, %s191
      %p203 = scmp.eq.s32.totalorder %s34, 1
      %p204 = por %p202, %p203
      %p206 = scmp.ne.s32.totalorder %s191, %s205
      %p207 = scmp.eq.s32.totalorder %s34, 0
      %p208 = por %p206, %p207
      %s210 = sadd.s32 %s209, 1
      %p213 = scmp.eq.s32.totalorder %s28, 1
      %p214 = scmp.ne.s32.totalorder %s209, %s211
      %p215 = scmp.eq.s32.totalorder %s28, 0
      %p216 = por %p214, %p215
      %p217 = scmp.ne.s32.totalorder %s209, %s211
      %p218 = scmp.eq.s32.totalorder %s33, 1
      %p219 = por %p217, %p218
      %p220 = scmp.ne.s32.totalorder %s211, %s212
      %p221 = scmp.eq.s32.totalorder %s33, 0
      %p222 = por %p220, %p221
      %p223 = scmp.ne.s32.totalorder %s211, %s212
      %p224 = scmp.eq.s32.totalorder %s34, 1
      %p225 = por %p223, %p224
      %p227 = scmp.ne.s32.totalorder %s212, %s226
      %p228 = scmp.eq.s32.totalorder %s34, 0
      %p229 = por %p227, %p228
      %s230 = ssub.s32 %s28, %s35
      %p231 = scmp.eq.s32.totalorder %s230, 0
      %s233 = sadd.s32 %s232, 1
      %s234 = scalar_select %p231, %s232, %s233
      %p237 = pneg %p231
      %p238 = scmp.eq.s32.totalorder %s28, 1
      %p239 = por %p237, %p238
      %p240 = scmp.ne.s32.totalorder %s232, %s235
      %p241 = scmp.eq.s32.totalorder %s28, 0
      %p242 = por %p240, %p241
      %p243 = scmp.ne.s32.totalorder %s232, %s235
      %p244 = scmp.eq.s32.totalorder %s33, 1
      %p245 = por %p243, %p244
      %p246 = scmp.ne.s32.totalorder %s235, %s236
      %p247 = scmp.eq.s32.totalorder %s33, 0
      %p248 = por %p246, %p247
      %p249 = scmp.ne.s32.totalorder %s235, %s236
      %p250 = scmp.eq.s32.totalorder %s34, 1
      %p251 = por %p249, %p250
      %p253 = scmp.ne.s32.totalorder %s236, %s252
      %p254 = scmp.eq.s32.totalorder %s34, 0
      %p255 = por %p253, %p254
      %s256 = ssub.s32 %s28, %s35
      %p257 = scmp.eq.s32.totalorder %s256, 0
      %s259 = sadd.s32 %s258, 1
      %s260 = scalar_select %p257, %s258, %s259
      %p263 = pneg %p257
      %p264 = scmp.eq.s32.totalorder %s28, 1
      %p265 = por %p263, %p264
      %p266 = scmp.ne.s32.totalorder %s258, %s261
      %p267 = scmp.eq.s32.totalorder %s28, 0
      %p268 = por %p266, %p267
      %p269 = scmp.ne.s32.totalorder %s258, %s261
      %p270 = scmp.eq.s32.totalorder %s33, 1
      %p271 = por %p269, %p270
      %p272 = scmp.ne.s32.totalorder %s261, %s262
      %p273 = scmp.eq.s32.totalorder %s33, 0
      %p274 = por %p272, %p273
      %p275 = scmp.ne.s32.totalorder %s261, %s262
      %p276 = scmp.eq.s32.totalorder %s34, 1
      %p277 = por %p275, %p276
      %p279 = scmp.ne.s32.totalorder %s262, %s278
      %p280 = scmp.eq.s32.totalorder %s34, 0
      %p281 = por %p279, %p280
      %p282 = scmp.le.s32.totalorder 1, %s28
      %p283 = scmp.lt.s32.totalorder %s28, 3
      %p284 = pnand %p282, %p283
      %p285 = pneg %p284
      // Predicated region
      $region9: #{tpu_custom_call.1} parent=5 // pred_check
        _
      $region10: #{tpu_custom_call.1} parent=5 // pred_check_branch
        %287 = sbr.rel (%p284) target = $region12
      $region11: #{tpu_custom_call.1} parent=5 // pred_region
        %s288 = ssub.s32 %s28, 1
        // Predicated region
        $region13: #{tpu_custom_call.1} parent=11 // pred_check
          %p289 = pneg %p75
        $region14: #{tpu_custom_call.1} parent=11 // pred_check_branch
          %291 = sbr.rel (%p289) target = $region16
        $region15: #{tpu_custom_call.1} parent=11 // pred_region
          %s293 = ssub.s32 256, 256
          %294 = vsyncadd [#allocation6], %s293
          %s295 = sshll.u32 [#allocation5], 4
          %s296 = int_to_ptr.vmem [resolvable:$true] %s295
          %301 = dma.hbm_to_vmem [thread:$0]  %s1, 256, %s296, [#allocation6], 64, 64, 4
        $region16: #{tpu_custom_call.1} parent=11 // pred_fallthru
          _
        // Predicated region
        $region17: #{tpu_custom_call.1} parent=11 // pred_check
          %p302 = pneg %p96
        $region18: #{tpu_custom_call.1} parent=11 // pred_check_branch
          %304 = sbr.rel (%p302) target = $region20
        $region19: #{tpu_custom_call.1} parent=11 // pred_region
          _
        $region20: #{tpu_custom_call.1} parent=11 // pred_fallthru
          _
        // Predicated region
        $region21: #{tpu_custom_call.1} parent=11 // pred_check
          %p305 = pneg %p117
        $region22: #{tpu_custom_call.1} parent=11 // pred_check_branch
          %307 = sbr.rel (%p305) target = $region24
        $region23: #{tpu_custom_call.1} parent=11 // pred_region
          %s309 = ssub.s32 256, 256
          %310 = vsyncadd [#allocation6], %s309
          %s311 = sshll.u32 [#allocation7], 4
          %s312 = int_to_ptr.vmem [resolvable:$true] %s311
          %317 = dma.hbm_to_vmem [thread:$0]  %s3, 256, %s312, [#allocation6], 64, 64, 4
        $region24: #{tpu_custom_call.1} parent=11 // pred_fallthru
          _
        // Predicated region
        $region25: #{tpu_custom_call.1} parent=11 // pred_check
          %p318 = pneg %p138
        $region26: #{tpu_custom_call.1} parent=11 // pred_check_branch
          %320 = sbr.rel (%p318) target = $region28
        $region27: #{tpu_custom_call.1} parent=11 // pred_region
          _
        $region28: #{tpu_custom_call.1} parent=11 // pred_fallthru
          _
        // Predicated region
        $region29: #{tpu_custom_call.1} parent=11 // pred_check
          %p321 = pneg %p159
        $region30: #{tpu_custom_call.1} parent=11 // pred_check_branch
          %323 = sbr.rel (%p321) target = $region32
        $region31: #{tpu_custom_call.1} parent=11 // pred_region
          _
        $region32: #{tpu_custom_call.1} parent=11 // pred_fallthru
          _
        // Predicated region
        $region33: #{tpu_custom_call.1} parent=11 // pred_check
          %p324 = pneg %p180
        $region34: #{tpu_custom_call.1} parent=11 // pred_check_branch
          %326 = sbr.rel (%p324) target = $region36
        $region35: #{tpu_custom_call.1} parent=11 // pred_region
          _
        $region36: #{tpu_custom_call.1} parent=11 // pred_fallthru
          _
        // Predicated region
        $region37: #{tpu_custom_call.1} parent=11 // pred_check
          %p327 = pneg %p201
        $region38: #{tpu_custom_call.1} parent=11 // pred_check_branch
          %329 = sbr.rel (%p327) target = $region40
        $region39: #{tpu_custom_call.1} parent=11 // pred_region
          %s331 = ssub.s32 256, 256
          %332 = vsyncadd [#allocation9], %s331
          %s333 = sshll.u32 [#allocation8], 4
          %s334 = int_to_ptr.vmem [resolvable:$true] %s333
          %339 = dma.hbm_to_vmem [thread:$0]  %s7, 256, %s334, [#allocation9], 64, 64, 4
        $region40: #{tpu_custom_call.1} parent=11 // pred_fallthru
          _
        // Predicated region
        $region41: #{tpu_custom_call.1} parent=11 // pred_check
          %p340 = pneg %p222
        $region42: #{tpu_custom_call.1} parent=11 // pred_check_branch
          %342 = sbr.rel (%p340) target = $region44
        $region43: #{tpu_custom_call.1} parent=11 // pred_region
          _
        $region44: #{tpu_custom_call.1} parent=11 // pred_fallthru
          _
      $region12: #{tpu_custom_call.1} parent=5 // pred_fallthru
        _
      %p343 = scmp.lt.s32.totalorder %s28, 2
      // Predicated region
      $region45: #{tpu_custom_call.1} parent=5 // pred_check
        %p344 = pneg %p343
      $region46: #{tpu_custom_call.1} parent=5 // pred_check_branch
        %346 = sbr.rel (%p344) target = $region48
      $region47: #{tpu_custom_call.1} parent=5 // pred_region
        // Predicated region
        $region49: #{tpu_custom_call.1} parent=47 // pred_check
          %p347 = pneg %p48
        $region50: #{tpu_custom_call.1} parent=47 // pred_check_branch
          %349 = sbr.rel (%p347) target = $region52
        $region51: #{tpu_custom_call.1} parent=47 // pred_region
          %s350 = sand.u32 %s38, 1
          %s351 = scalar_lea.sflag [#allocation3], %s350
          %s352 = sand.u32 %s38, 1
          %s353 = smul.addr %s352, 64
          %s354 = scalar_lea.vmem [#allocation2], %s353
          %s356 = ssub.s32 1024, 1024
          %357 = vsyncadd %s351, %s356
          %s358 = smul.addr %s28, 16
          %s359 = smul.addr %s358, 64
          %s360 = scalar_lea.hbm %s0, %s359
          %s361 = sshll.u32 %s354, 4
          %s362 = int_to_ptr.vmem [resolvable:$true] %s361
          %367 = dma.hbm_to_vmem [thread:$0]  %s360, 1024, %s362, %s351, 64, 64, 4
        $region52: #{tpu_custom_call.1} parent=47 // pred_fallthru
          _
      $region48: #{tpu_custom_call.1} parent=5 // pred_fallthru
        _
      %p368 = scmp.le.s32.totalorder 1, %s28
      %p369 = scmp.lt.s32.totalorder %s28, 3
      %p370 = pnand %p368, %p369
      %p371 = pneg %p370
      // Predicated region
      $region53: #{tpu_custom_call.1} parent=5 // pred_check
        _
      $region54: #{tpu_custom_call.1} parent=5 // pred_check_branch
        %373 = sbr.rel (%p370) target = $region56
      $region55: #{tpu_custom_call.1} parent=5 // pred_region
        %s374 = ssub.s32 %s28, 1
        %s375 = sand.u32 %s41, 1
        %s376 = scalar_lea.sflag [#allocation3], %s375
        %s377 = sand.u32 %s41, 1
        %s378 = smul.addr %s377, 64
        %s379 = scalar_lea.vmem [#allocation2], %s378
        // Predicated region
        $region57: #{tpu_custom_call.1} parent=55 // pred_check
          %p380 = pneg %p54
        $region58: #{tpu_custom_call.1} parent=55 // pred_check_branch
          %382 = sbr.rel (%p380) target = $region60
        $region59: #{tpu_custom_call.1} parent=55 // pred_region
          %383 = dma.done %s376, 1024
        $region60: #{tpu_custom_call.1} parent=55 // pred_fallthru
          _
        // Predicated region
        $region61: #{tpu_custom_call.1} parent=55 // pred_check
          %p384 = pneg %p75
        $region62: #{tpu_custom_call.1} parent=55 // pred_check_branch
          %386 = sbr.rel (%p384) target = $region64
        $region63: #{tpu_custom_call.1} parent=55 // pred_region
          %387 = dma.done [#allocation6], 256
        $region64: #{tpu_custom_call.1} parent=55 // pred_fallthru
          _
        // Predicated region
        $region65: #{tpu_custom_call.1} parent=55 // pred_check
          %p388 = pneg %p117
        $region66: #{tpu_custom_call.1} parent=55 // pred_check_branch
          %390 = sbr.rel (%p388) target = $region68
        $region67: #{tpu_custom_call.1} parent=55 // pred_region
          %391 = dma.done [#allocation6], 256
        $region68: #{tpu_custom_call.1} parent=55 // pred_fallthru
          _
        // Predicated region
        $region69: #{tpu_custom_call.1} parent=55 // pred_check
          %p392 = pneg %p201
        $region70: #{tpu_custom_call.1} parent=55 // pred_check_branch
          %394 = sbr.rel (%p392) target = $region72
        $region71: #{tpu_custom_call.1} parent=55 // pred_region
          %395 = dma.done [#allocation9], 256
        $region72: #{tpu_custom_call.1} parent=55 // pred_fallthru
          _
        %s396 = sand.u32 %s41, 1
        %s397 = scalar_lea.sflag [#allocation3], %s396
        %s398 = sand.u32 %s41, 1
        %s399 = smul.addr %s398, 64
        %s400 = scalar_lea.vmem [#allocation2], %s399
        %p401 = pneg %p54
        %p402 = pneg %p51
        %p403 = pneg %p75
        %p404 = pneg %p72
        %p405 = pneg %p96
        %p406 = pneg %p93
        %p407 = pneg %p117
        %p408 = pneg %p114
        %p409 = pneg %p138
        %p410 = pneg %p135
        %p411 = pneg %p159
        %p412 = pneg %p156
        %p413 = pneg %p180
        %p414 = pneg %p177
        %p415 = pneg %p201
        %p416 = pneg %p198
        %p417 = pneg %p222
        %p418 = pneg %p219
        %p419 = pneg %p248
        %p420 = pneg %p245
        %s421 = sand.u32 %s235, 1
        %s422 = scalar_lea.sflag [#allocation4], %s421
        %s423 = sand.u32 %s235, 1
        %s424 = smul.addr %s423, 128
        %s425 = scalar_lea.vmem [#allocation10], %s424
        %p426 = pneg %p274
        %p427 = pneg %p271
        %s428 = sand.u32 %s261, 1
        %s429 = scalar_lea.sflag [#allocation12], %s428
        %s430 = sand.u32 %s261, 1
        %s431 = smul.addr %s430, 64
        %s432 = scalar_lea.vmem [#allocation11], %s431
        %v434 = vld [vmem:[%s379] sm:$0xf]
        %v435 = vld [vmem:[%s379 + $0x4] sm:$0xf]
        %v436 = vld [vmem:[%s379 + $0x8] sm:$0xf]
        %v437 = vld [vmem:[%s379 + $0xc] sm:$0xf]
        %v438 = vld [vmem:[%s379 + $0x10] sm:$0xf]
        %v439 = vld [vmem:[%s379 + $0x14] sm:$0xf]
        %v440 = vld [vmem:[%s379 + $0x18] sm:$0xf]
        %v441 = vld [vmem:[%s379 + $0x1c] sm:$0xf]
        %v442 = vld [vmem:[%s379 + $0x20] sm:$0xf]
        %v443 = vld [vmem:[%s379 + $0x24] sm:$0xf]
        %v444 = vld [vmem:[%s379 + $0x28] sm:$0xf]
        %v445 = vld [vmem:[%s379 + $0x2c] sm:$0xf]
        %v446 = vld [vmem:[%s379 + $0x30] sm:$0xf]
        %v447 = vld [vmem:[%s379 + $0x34] sm:$0xf]
        %v448 = vld [vmem:[%s379 + $0x38] sm:$0xf]
        %v449 = vld [vmem:[%s379 + $0x3c] sm:$0xf]
        %v450 = vld [vmem:[#allocation5] sm:$0xf]
        %v451 = vld [vmem:[#allocation5 + $0x4] sm:$0xf]
        %v452 = vld [vmem:[#allocation5 + $0x8] sm:$0xf]
        %v453 = vld [vmem:[#allocation5 + $0xc] sm:$0xf]
        %v454 = vld [vmem:[%s2] sm:$0x1]
        %v456 = vlaneseq
        %v457 = vshrl.u32 %v456, 7
        %v458 = vsub.s32 0, %v457
        %v459 = vrot.slane %v454, %v458
        %v477 = vunpack.c.l.b16 %v434
        %v478 = vunpack.c.l.b16 %v435
        %v479 = vunpack.c.l.b16 %v436
        %v480 = vunpack.c.l.b16 %v437
        %v481 = vunpack.c.l.b16 %v438
        %v482 = vunpack.c.l.b16 %v439
        %v483 = vunpack.c.l.b16 %v440
        %v484 = vunpack.c.l.b16 %v441
        %v485 = vunpack.c.l.b16 %v442
        %v486 = vunpack.c.l.b16 %v443
        %v487 = vunpack.c.l.b16 %v444
        %v488 = vunpack.c.l.b16 %v445
        %v489 = vunpack.c.l.b16 %v446
        %v490 = vunpack.c.l.b16 %v447
        %v491 = vunpack.c.l.b16 %v448
        %v492 = vunpack.c.l.b16 %v449
        %v493 = vpack.c.b16 %v478, %v477
        %v494 = vpack.c.b16 %v480, %v479
        %v495 = vpack.c.b16 %v482, %v481
        %v496 = vpack.c.b16 %v484, %v483
        %v497 = vpack.c.b16 %v486, %v485
        %v498 = vpack.c.b16 %v488, %v487
        %v499 = vpack.c.b16 %v490, %v489
        %v500 = vpack.c.b16 %v492, %v491
        %v505 = vunpack.c.l.b16 %v450
        %v506 = vunpack.c.l.b16 %v451
        %v507 = vunpack.c.l.b16 %v452
        %v508 = vunpack.c.l.b16 %v453
        %v509 = vpack.c.b16 %v506, %v505
        %v510 = vpack.c.b16 %v508, %v507
        %vm513 = vcmask 261120
        %v515 = vsel %vm513, %v493, 0
        %v518 = vsel %vm513, %v494, 0
        %v521 = vsel %vm513, %v495, 0
        %v524 = vsel %vm513, %v496, 0
        %v527 = vsel %vm513, %v497, 0
        %v530 = vsel %vm513, %v498, 0
        %v533 = vsel %vm513, %v499, 0
        %v536 = vsel %vm513, %v500, 0
        %538 = vmatprep.subr.bf16.mxu0 0
        %539 = vmatpush1.bf16.msra.mxu0 %v509
        %540 = vmatprep.subr.bf16.mxu0 0
        %541 = vmatpush1.bf16.msra.mxu0 %v510
        %542 = vmatprep.subr.bf16.mxu0 0
        %543 = vmatpush1.bf16.msra.mxu0 0
        %544 = vmatprep.subr.bf16.mxu0 0
        %545 = vmatpush1.bf16.msra.mxu0 0
        %546 = vmatprep.subr.bf16.mxu0 0
        %547 = vmatpush1.bf16.msra.mxu0 0
        %548 = vmatprep.subr.bf16.mxu0 0
        %549 = vmatpush1.bf16.msra.mxu0 0
        %550 = vmatprep.subr.bf16.mxu0 0
        %551 = vmatpush1.bf16.msra.mxu0 0
        %552 = vmatprep.subr.bf16.mxu0 0
        %553 = vmatpush1.bf16.msra.mxu0 0
        %554 = vmatprep.subr.bf16.mxu0 0
        %555 = vmatpush1.bf16.msra.mxu0 0
        %556 = vmatprep.subr.bf16.mxu0 0
        %557 = vmatpush1.bf16.msra.mxu0 0
        %558 = vmatprep.subr.bf16.mxu0 0
        %559 = vmatpush1.bf16.msra.mxu0 0
        %560 = vmatprep.subr.bf16.mxu0 0
        %561 = vmatpush1.bf16.msra.mxu0 0
        %562 = vmatprep.subr.bf16.mxu0 0
        %563 = vmatpush1.bf16.msra.mxu0 0
        %564 = vmatprep.subr.bf16.mxu0 0
        %565 = vmatpush1.bf16.msra.mxu0 0
        %566 = vmatprep.subr.bf16.mxu0 0
        %567 = vmatpush1.bf16.msra.mxu0 0
        %568 = vmatprep.subr.bf16.mxu0 0
        %569 = vmatpush1.bf16.msra.mxu0 0
        %570 = vmatprep.mubr.bf16.mxu0 0
        %571 = vmatmul.mubr.bf16.gmra.mrb[0].mxu0 %v515
        %v572 = vpop.f32.mrb[0].mxu0
        %v573 = vadd.f32 %v459, %v572
        %v574 = vpop.f32.mrb[0].mxu0
        %v575 = vpop.f32.mrb[0].mxu0
        %v576 = vadd.f32 %v459, %v575
        %v577 = vpop.f32.mrb[0].mxu0
        %578 = vmatprep.mubr.bf16.mxu0 0
        %579 = vmatmul.mubr.bf16.gmra.mrb[0].mxu0 %v518
        %v580 = vpop.f32.mrb[0].mxu0
        %v581 = vadd.f32 %v459, %v580
        %v582 = vpop.f32.mrb[0].mxu0
        %v583 = vpop.f32.mrb[0].mxu0
        %v584 = vadd.f32 %v459, %v583
        %v585 = vpop.f32.mrb[0].mxu0
        %586 = vmatprep.mubr.bf16.mxu0 0
        %587 = vmatmul.mubr.bf16.gmra.mrb[0].mxu0 %v521
        %v588 = vpop.f32.mrb[0].mxu0
        %v589 = vadd.f32 %v459, %v588
        %v590 = vpop.f32.mrb[0].mxu0
        %v591 = vpop.f32.mrb[0].mxu0
        %v592 = vadd.f32 %v459, %v591
        %v593 = vpop.f32.mrb[0].mxu0
        %594 = vmatprep.mubr.bf16.mxu0 0
        %595 = vmatmul.mubr.bf16.gmra.mrb[0].mxu0 %v524
        %v596 = vpop.f32.mrb[0].mxu0
        %v597 = vadd.f32 %v459, %v596
        %v598 = vpop.f32.mrb[0].mxu0
        %v599 = vpop.f32.mrb[0].mxu0
        %v600 = vadd.f32 %v459, %v599
        %v601 = vpop.f32.mrb[0].mxu0
        %602 = vmatprep.mubr.bf16.mxu0 0
        %603 = vmatmul.mubr.bf16.gmra.mrb[0].mxu0 %v527
        %v604 = vpop.f32.mrb[0].mxu0
        %v605 = vadd.f32 %v459, %v604
        %v606 = vpop.f32.mrb[0].mxu0
        %v607 = vpop.f32.mrb[0].mxu0
        %v608 = vadd.f32 %v459, %v607
        %v609 = vpop.f32.mrb[0].mxu0
        %610 = vmatprep.mubr.bf16.mxu0 0
        %611 = vmatmul.mubr.bf16.gmra.mrb[0].mxu0 %v530
        %v612 = vpop.f32.mrb[0].mxu0
        %v613 = vadd.f32 %v459, %v612
        %v614 = vpop.f32.mrb[0].mxu0
        %v615 = vpop.f32.mrb[0].mxu0
        %v616 = vadd.f32 %v459, %v615
        %v617 = vpop.f32.mrb[0].mxu0
        %618 = vmatprep.mubr.bf16.mxu0 0
        %619 = vmatmul.mubr.bf16.gmra.mrb[0].mxu0 %v533
        %v620 = vpop.f32.mrb[0].mxu0
        %v621 = vadd.f32 %v459, %v620
        %v622 = vpop.f32.mrb[0].mxu0
        %v623 = vpop.f32.mrb[0].mxu0
        %v624 = vadd.f32 %v459, %v623
        %v625 = vpop.f32.mrb[0].mxu0
        %626 = vmatprep.mubr.bf16.mxu0 0
        %627 = vmatmul.mubr.bf16.gmra.mrb[0].mxu0 %v536
        %v628 = vpop.f32.mrb[0].mxu0
        %v629 = vadd.f32 %v459, %v628
        %v630 = vpop.f32.mrb[0].mxu0
        %v631 = vpop.f32.mrb[0].mxu0
        %v632 = vadd.f32 %v459, %v631
        %v633 = vpop.f32.mrb[0].mxu0
        %634 = vdwg.mxu0
        %v635 = vld [vmem:[#allocation7] sm:$0xf]
        %v636 = vld [vmem:[#allocation7 + $0x4] sm:$0xf]
        %v637 = vld [vmem:[#allocation7 + $0x8] sm:$0xf]
        %v638 = vld [vmem:[#allocation7 + $0xc] sm:$0xf]
        %v639 = vld [vmem:[%s4] sm:$0x1]
        %v641 = vlaneseq
        %v642 = vshrl.u32 %v641, 7
        %v643 = vsub.s32 0, %v642
        %v644 = vrot.slane %v639, %v643
        %v650 = vunpack.c.l.b16 %v635
        %v651 = vunpack.c.l.b16 %v636
        %v652 = vunpack.c.l.b16 %v637
        %v653 = vunpack.c.l.b16 %v638
        %v654 = vpack.c.b16 %v651, %v650
        %v655 = vpack.c.b16 %v653, %v652
        %658 = vmatprep.subr.bf16.mxu0 0
        %659 = vmatpush1.bf16.msra.mxu0 %v654
        %660 = vmatprep.subr.bf16.mxu0 0
        %661 = vmatpush1.bf16.msra.mxu0 %v655
        %662 = vmatprep.subr.bf16.mxu0 0
        %663 = vmatpush1.bf16.msra.mxu0 0
        %664 = vmatprep.subr.bf16.mxu0 0
        %665 = vmatpush1.bf16.msra.mxu0 0
        %666 = vmatprep.subr.bf16.mxu0 0
        %667 = vmatpush1.bf16.msra.mxu0 0
        %668 = vmatprep.subr.bf16.mxu0 0
        %669 = vmatpush1.bf16.msra.mxu0 0
        %670 = vmatprep.subr.bf16.mxu0 0
        %671 = vmatpush1.bf16.msra.mxu0 0
        %672 = vmatprep.subr.bf16.mxu0 0
        %673 = vmatpush1.bf16.msra.mxu0 0
        %674 = vmatprep.subr.bf16.mxu0 0
        %675 = vmatpush1.bf16.msra.mxu0 0
        %676 = vmatprep.subr.bf16.mxu0 0
        %677 = vmatpush1.bf16.msra.mxu0 0
        %678 = vmatprep.subr.bf16.mxu0 0
        %679 = vmatpush1.bf16.msra.mxu0 0
        %680 = vmatprep.subr.bf16.mxu0 0
        %681 = vmatpush1.bf16.msra.mxu0 0
        %682 = vmatprep.subr.bf16.mxu0 0
        %683 = vmatpush1.bf16.msra.mxu0 0
        %684 = vmatprep.subr.bf16.mxu0 0
        %685 = vmatpush1.bf16.msra.mxu0 0
        %686 = vmatprep.subr.bf16.mxu0 0
        %687 = vmatpush1.bf16.msra.mxu0 0
        %688 = vmatprep.subr.bf16.mxu0 0
        %689 = vmatpush1.bf16.msra.mxu0 0
        %690 = vmatprep.mubr.bf16.mxu0 0
        %691 = vmatmul.mubr.bf16.gmra.mrb[0].mxu0 %v515
        %v692 = vpop.f32.mrb[0].mxu0
        %v693 = vadd.f32 %v644, %v692
        %v694 = vpop.f32.mrb[0].mxu0
        %v695 = vpop.f32.mrb[0].mxu0
        %v696 = vadd.f32 %v644, %v695
        %v697 = vpop.f32.mrb[0].mxu0
        %698 = vmatprep.mubr.bf16.mxu0 0
        %699 = vmatmul.mubr.bf16.gmra.mrb[0].mxu0 %v518
        %v700 = vpop.f32.mrb[0].mxu0
        %v701 = vadd.f32 %v644, %v700
        %v702 = vpop.f32.mrb[0].mxu0
        %v703 = vpop.f32.mrb[0].mxu0
        %v704 = vadd.f32 %v644, %v703
        %v705 = vpop.f32.mrb[0].mxu0
        %706 = vmatprep.mubr.bf16.mxu0 0
        %707 = vmatmul.mubr.bf16.gmra.mrb[0].mxu0 %v521
        %v708 = vpop.f32.mrb[0].mxu0
        %v709 = vadd.f32 %v644, %v708
        %v710 = vpop.f32.mrb[0].mxu0
        %v711 = vpop.f32.mrb[0].mxu0
        %v712 = vadd.f32 %v644, %v711
        %v713 = vpop.f32.mrb[0].mxu0
        %714 = vmatprep.mubr.bf16.mxu0 0
        %715 = vmatmul.mubr.bf16.gmra.mrb[0].mxu0 %v524
        %v716 = vpop.f32.mrb[0].mxu0
        %v717 = vadd.f32 %v644, %v716
        %v718 = vpop.f32.mrb[0].mxu0
        %v719 = vpop.f32.mrb[0].mxu0
        %v720 = vadd.f32 %v644, %v719
        %v721 = vpop.f32.mrb[0].mxu0
        %722 = vmatprep.mubr.bf16.mxu0 0
        %723 = vmatmul.mubr.bf16.gmra.mrb[0].mxu0 %v527
        %v724 = vpop.f32.mrb[0].mxu0
        %v725 = vadd.f32 %v644, %v724
        %v726 = vpop.f32.mrb[0].mxu0
        %v727 = vpop.f32.mrb[0].mxu0
        %v728 = vadd.f32 %v644, %v727
        %v729 = vpop.f32.mrb[0].mxu0
        %730 = vmatprep.mubr.bf16.mxu0 0
        %731 = vmatmul.mubr.bf16.gmra.mrb[0].mxu0 %v530
        %v732 = vpop.f32.mrb[0].mxu0
        %v733 = vadd.f32 %v644, %v732
        %v734 = vpop.f32.mrb[0].mxu0
        %v735 = vpop.f32.mrb[0].mxu0
        %v736 = vadd.f32 %v644, %v735
        %v737 = vpop.f32.mrb[0].mxu0
        %738 = vmatprep.mubr.bf16.mxu0 0
        %739 = vmatmul.mubr.bf16.gmra.mrb[0].mxu0 %v533
        %v740 = vpop.f32.mrb[0].mxu0
        %v741 = vadd.f32 %v644, %v740
        %v742 = vpop.f32.mrb[0].mxu0
        %v743 = vpop.f32.mrb[0].mxu0
        %v744 = vadd.f32 %v644, %v743
        %v745 = vpop.f32.mrb[0].mxu0
        %746 = vmatprep.mubr.bf16.mxu0 0
        %747 = vmatmul.mubr.bf16.gmra.mrb[0].mxu0 %v536
        %v748 = vpop.f32.mrb[0].mxu0
        %v749 = vadd.f32 %v644, %v748
        %v750 = vpop.f32.mrb[0].mxu0
        %v751 = vpop.f32.mrb[0].mxu0
        %v752 = vadd.f32 %v644, %v751
        %v753 = vpop.f32.mrb[0].mxu0
        %754 = vdwg.mxu0
        %v755 = vld [vmem:[%s5] sm:$0xf]
        %v756 = vld [vmem:[%s5 + $0x4] sm:$0xf]
        %v757 = vld [vmem:[%s5 + $0x8] sm:$0xf]
        %v758 = vld [vmem:[%s5 + $0xc] sm:$0xf]
        %v759 = vld [vmem:[%s6] sm:$0x1]
        %v761 = vlaneseq
        %v762 = vshrl.u32 %v761, 7
        %v763 = vsub.s32 0, %v762
        %v764 = vrot.slane %v759, %v763
        %v770 = vunpack.c.l.b16 %v755
        %v771 = vunpack.c.l.b16 %v756
        %v772 = vunpack.c.l.b16 %v757
        %v773 = vunpack.c.l.b16 %v758
        %v774 = vpack.c.b16 %v771, %v770
        %v775 = vpack.c.b16 %v773, %v772
        %778 = vmatprep.subr.bf16.mxu0 0
        %779 = vmatpush1.bf16.msra.mxu0 %v774
        %780 = vmatprep.subr.bf16.mxu0 0
        %781 = vmatpush1.bf16.msra.mxu0 %v775
        %782 = vmatprep.subr.bf16.mxu0 0
        %783 = vmatpush1.bf16.msra.mxu0 0
        %784 = vmatprep.subr.bf16.mxu0 0
        %785 = vmatpush1.bf16.msra.mxu0 0
        %786 = vmatprep.subr.bf16.mxu0 0
        %787 = vmatpush1.bf16.msra.mxu0 0
        %788 = vmatprep.subr.bf16.mxu0 0
        %789 = vmatpush1.bf16.msra.mxu0 0
        %790 = vmatprep.subr.bf16.mxu0 0
        %791 = vmatpush1.bf16.msra.mxu0 0
        %792 = vmatprep.subr.bf16.mxu0 0
        %793 = vmatpush1.bf16.msra.mxu0 0
        %794 = vmatprep.subr.bf16.mxu0 0
        %795 = vmatpush1.bf16.msra.mxu0 0
        %796 = vmatprep.subr.bf16.mxu0 0
        %797 = vmatpush1.bf16.msra.mxu0 0
        %798 = vmatprep.subr.bf16.mxu0 0
        %799 = vmatpush1.bf16.msra.mxu0 0
        %800 = vmatprep.subr.bf16.mxu0 0
        %801 = vmatpush1.bf16.msra.mxu0 0
        %802 = vmatprep.subr.bf16.mxu0 0
        %803 = vmatpush1.bf16.msra.mxu0 0
        %804 = vmatprep.subr.bf16.mxu0 0
        %805 = vmatpush1.bf16.msra.mxu0 0
        %806 = vmatprep.subr.bf16.mxu0 0
        %807 = vmatpush1.bf16.msra.mxu0 0
        %808 = vmatprep.subr.bf16.mxu0 0
        %809 = vmatpush1.bf16.msra.mxu0 0
        %810 = vmatprep.mubr.bf16.mxu0 0
        %811 = vmatmul.mubr.bf16.gmra.mrb[0].mxu0 %v515
        %v812 = vpop.f32.mrb[0].mxu0
        %v813 = vadd.f32 %v764, %v812
        %v814 = vpop.f32.mrb[0].mxu0
        %v815 = vpop.f32.mrb[0].mxu0
        %v816 = vadd.f32 %v764, %v815
        %v817 = vpop.f32.mrb[0].mxu0
        %818 = vmatprep.mubr.bf16.mxu0 0
        %819 = vmatmul.mubr.bf16.gmra.mrb[0].mxu0 %v518
        %v820 = vpop.f32.mrb[0].mxu0
        %v821 = vadd.f32 %v764, %v820
        %v822 = vpop.f32.mrb[0].mxu0
        %v823 = vpop.f32.mrb[0].mxu0
        %v824 = vadd.f32 %v764, %v823
        %v825 = vpop.f32.mrb[0].mxu0
        %826 = vmatprep.mubr.bf16.mxu0 0
        %827 = vmatmul.mubr.bf16.gmra.mrb[0].mxu0 %v521
        %v828 = vpop.f32.mrb[0].mxu0
        %v829 = vadd.f32 %v764, %v828
        %v830 = vpop.f32.mrb[0].mxu0
        %v831 = vpop.f32.mrb[0].mxu0
        %v832 = vadd.f32 %v764, %v831
        %v833 = vpop.f32.mrb[0].mxu0
        %834 = vmatprep.mubr.bf16.mxu0 0
        %835 = vmatmul.mubr.bf16.gmra.mrb[0].mxu0 %v524
        %v836 = vpop.f32.mrb[0].mxu0
        %v837 = vadd.f32 %v764, %v836
        %v838 = vpop.f32.mrb[0].mxu0
        %v839 = vpop.f32.mrb[0].mxu0
        %v840 = vadd.f32 %v764, %v839
        %v841 = vpop.f32.mrb[0].mxu0
        %842 = vmatprep.mubr.bf16.mxu0 0
        %843 = vmatmul.mubr.bf16.gmra.mrb[0].mxu0 %v527
        %v844 = vpop.f32.mrb[0].mxu0
        %v845 = vadd.f32 %v764, %v844
        %v846 = vpop.f32.mrb[0].mxu0
        %v847 = vpop.f32.mrb[0].mxu0
        %v848 = vadd.f32 %v764, %v847
        %v849 = vpop.f32.mrb[0].mxu0
        %850 = vmatprep.mubr.bf16.mxu0 0
        %851 = vmatmul.mubr.bf16.gmra.mrb[0].mxu0 %v530
        %v852 = vpop.f32.mrb[0].mxu0
        %v853 = vadd.f32 %v764, %v852
        %v854 = vpop.f32.mrb[0].mxu0
        %v855 = vpop.f32.mrb[0].mxu0
        %v856 = vadd.f32 %v764, %v855
        %v857 = vpop.f32.mrb[0].mxu0
        %858 = vmatprep.mubr.bf16.mxu0 0
        %859 = vmatmul.mubr.bf16.gmra.mrb[0].mxu0 %v533
        %v860 = vpop.f32.mrb[0].mxu0
        %v861 = vadd.f32 %v764, %v860
        %v862 = vpop.f32.mrb[0].mxu0
        %v863 = vpop.f32.mrb[0].mxu0
        %v864 = vadd.f32 %v764, %v863
        %v865 = vpop.f32.mrb[0].mxu0
        %866 = vmatprep.mubr.bf16.mxu0 0
        %867 = vmatmul.mubr.bf16.gmra.mrb[0].mxu0 %v536
        %v868 = vpop.f32.mrb[0].mxu0
        %v869 = vadd.f32 %v764, %v868
        %v870 = vpop.f32.mrb[0].mxu0
        %v871 = vpop.f32.mrb[0].mxu0
        %v872 = vadd.f32 %v764, %v871
        %v873 = vpop.f32.mrb[0].mxu0
        %874 = vdwg.mxu0
        %v875 = vpack.c.bf16 %v576, %v573
        %v876 = vpack.c.bf16 %v584, %v581
        %v877 = vpack.c.bf16 %v592, %v589
        %v878 = vpack.c.bf16 %v600, %v597
        %v879 = vpack.c.bf16 %v608, %v605
        %v880 = vpack.c.bf16 %v616, %v613
        %v881 = vpack.c.bf16 %v624, %v621
        %v882 = vpack.c.bf16 %v632, %v629
        %v883 = vpack.c.bf16 %v696, %v693
        %v884 = vpack.c.bf16 %v704, %v701
        %v885 = vpack.c.bf16 %v712, %v709
        %v886 = vpack.c.bf16 %v720, %v717
        %v887 = vpack.c.bf16 %v728, %v725
        %v888 = vpack.c.bf16 %v736, %v733
        %v889 = vpack.c.bf16 %v744, %v741
        %v890 = vpack.c.bf16 %v752, %v749
        %v891 = vpack.c.bf16 %v816, %v813
        %v892 = vpack.c.bf16 %v824, %v821
        %v893 = vpack.c.bf16 %v832, %v829
        %v894 = vpack.c.bf16 %v840, %v837
        %v895 = vpack.c.bf16 %v848, %v845
        %v896 = vpack.c.bf16 %v856, %v853
        %v897 = vpack.c.bf16 %v864, %v861
        %v898 = vpack.c.bf16 %v872, %v869
        %vm899 = vcmask 64512
        %v901 = vsel %vm899, %v875, 0
        %v904 = vsel %vm899, %v883, 0
        %906 = vmatprep.subr.bf16.mxu0 0
        %907 = vmatpush1.bf16.xpose.msra.mxu0 %v904
        %908 = vmatprep.subr.bf16.mxu0 0
        %909 = vmatpush1.bf16.xpose.msra.mxu0 0
        %910 = vmatprep.subr.bf16.mxu0 0
        %911 = vmatpush1.bf16.xpose.msra.mxu0 0
        %912 = vmatprep.subr.bf16.mxu0 0
        %913 = vmatpush1.bf16.xpose.msra.mxu0 0
        %914 = vmatprep.subr.bf16.mxu0 0
        %915 = vmatpush1.bf16.xpose.msra.mxu0 0
        %916 = vmatprep.subr.bf16.mxu0 0
        %917 = vmatpush1.bf16.xpose.msra.mxu0 0
        %918 = vmatprep.subr.bf16.mxu0 0
        %919 = vmatpush1.bf16.xpose.msra.mxu0 0
        %920 = vmatprep.subr.bf16.mxu0 0
        %921 = vmatpush1.bf16.xpose.msra.mxu0 0
        %922 = vmatprep.subr.bf16.mxu0 0
        %923 = vmatpush1.bf16.xpose.msra.mxu0 0
        %924 = vmatprep.subr.bf16.mxu0 0
        %925 = vmatpush1.bf16.xpose.msra.mxu0 0
        %926 = vmatprep.subr.bf16.mxu0 0
        %927 = vmatpush1.bf16.xpose.msra.mxu0 0
        %928 = vmatprep.subr.bf16.mxu0 0
        %929 = vmatpush1.bf16.xpose.msra.mxu0 0
        %930 = vmatprep.subr.bf16.mxu0 0
        %931 = vmatpush1.bf16.xpose.msra.mxu0 0
        %932 = vmatprep.subr.bf16.mxu0 0
        %933 = vmatpush1.bf16.xpose.msra.mxu0 0
        %934 = vmatprep.subr.bf16.mxu0 0
        %935 = vmatpush1.bf16.xpose.msra.mxu0 0
        %936 = vmatprep.subr.bf16.mxu0 0
        %937 = vmatpush1.bf16.xpose.msra.mxu0 0
        %938 = vmatprep.mubr.bf16.mxu0 0
        %939 = vmatmul.mubr.bf16.gmra.mrb[0].mxu0 %v901
        %v940 = vpop.f32.mrb[0].mxu0
        %v941 = vadd.f32 0.0, %v940
        %v942 = vpop.f32.mrb[0].mxu0
        %v943 = vpop.f32.mrb[0].mxu0
        %v944 = vadd.f32 0.0, %v943
        %v945 = vpop.f32.mrb[0].mxu0
        %946 = vdwg.mxu0
        %v948 = vsel %vm899, %v876, 0
        %v951 = vsel %vm899, %v884, 0
        %953 = vmatprep.subr.bf16.mxu0 0
        %954 = vmatpush1.bf16.xpose.msra.mxu0 %v951
        %955 = vmatprep.subr.bf16.mxu0 0
        %956 = vmatpush1.bf16.xpose.msra.mxu0 0
        %957 = vmatprep.subr.bf16.mxu0 0
        %958 = vmatpush1.bf16.xpose.msra.mxu0 0
        %959 = vmatprep.subr.bf16.mxu0 0
        %960 = vmatpush1.bf16.xpose.msra.mxu0 0
        %961 = vmatprep.subr.bf16.mxu0 0
        %962 = vmatpush1.bf16.xpose.msra.mxu0 0
        %963 = vmatprep.subr.bf16.mxu0 0
        %964 = vmatpush1.bf16.xpose.msra.mxu0 0
        %965 = vmatprep.subr.bf16.mxu0 0
        %966 = vmatpush1.bf16.xpose.msra.mxu0 0
        %967 = vmatprep.subr.bf16.mxu0 0
        %968 = vmatpush1.bf16.xpose.msra.mxu0 0
        %969 = vmatprep.subr.bf16.mxu0 0
        %970 = vmatpush1.bf16.xpose.msra.mxu0 0
        %971 = vmatprep.subr.bf16.mxu0 0
        %972 = vmatpush1.bf16.xpose.msra.mxu0 0
        %973 = vmatprep.subr.bf16.mxu0 0
        %974 = vmatpush1.bf16.xpose.msra.mxu0 0
        %975 = vmatprep.subr.bf16.mxu0 0
        %976 = vmatpush1.bf16.xpose.msra.mxu0 0
        %977 = vmatprep.subr.bf16.mxu0 0
        %978 = vmatpush1.bf16.xpose.msra.mxu0 0
        %979 = vmatprep.subr.bf16.mxu0 0
        %980 = vmatpush1.bf16.xpose.msra.mxu0 0
        %981 = vmatprep.subr.bf16.mxu0 0
        %982 = vmatpush1.bf16.xpose.msra.mxu0 0
        %983 = vmatprep.subr.bf16.mxu0 0
        %984 = vmatpush1.bf16.xpose.msra.mxu0 0
        %985 = vmatprep.mubr.bf16.mxu0 0
        %986 = vmatmul.mubr.bf16.gmra.mrb[0].mxu0 %v948
        %v987 = vpop.f32.mrb[0].mxu0
        %v988 = vadd.f32 0.0, %v987
        %v989 = vpop.f32.mrb[0].mxu0
        %v990 = vpop.f32.mrb[0].mxu0
        %v991 = vadd.f32 0.0, %v990
        %v992 = vpop.f32.mrb[0].mxu0
        %993 = vdwg.mxu0
        %v995 = vsel %vm899, %v877, 0
        %v998 = vsel %vm899, %v885, 0
        %1000 = vmatprep.subr.bf16.mxu0 0
        %1001 = vmatpush1.bf16.xpose.msra.mxu0 %v998
        %1002 = vmatprep.subr.bf16.mxu0 0
        %1003 = vmatpush1.bf16.xpose.msra.mxu0 0
        %1004 = vmatprep.subr.bf16.mxu0 0
        %1005 = vmatpush1.bf16.xpose.msra.mxu0 0
        %1006 = vmatprep.subr.bf16.mxu0 0
        %1007 = vmatpush1.bf16.xpose.msra.mxu0 0
        %1008 = vmatprep.subr.bf16.mxu0 0
        %1009 = vmatpush1.bf16.xpose.msra.mxu0 0
        %1010 = vmatprep.subr.bf16.mxu0 0
        %1011 = vmatpush1.bf16.xpose.msra.mxu0 0
        %1012 = vmatprep.subr.bf16.mxu0 0
        %1013 = vmatpush1.bf16.xpose.msra.mxu0 0
        %1014 = vmatprep.subr.bf16.mxu0 0
        %1015 = vmatpush1.bf16.xpose.msra.mxu0 0
        %1016 = vmatprep.subr.bf16.mxu0 0
        %1017 = vmatpush1.bf16.xpose.msra.mxu0 0
        %1018 = vmatprep.subr.bf16.mxu0 0
        %1019 = vmatpush1.bf16.xpose.msra.mxu0 0
        %1020 = vmatprep.subr.bf16.mxu0 0
        %1021 = vmatpush1.bf16.xpose.msra.mxu0 0
        %1022 = vmatprep.subr.bf16.mxu0 0
        %1023 = vmatpush1.bf16.xpose.msra.mxu0 0
        %1024 = vmatprep.subr.bf16.mxu0 0
        %1025 = vmatpush1.bf16.xpose.msra.mxu0 0
        %1026 = vmatprep.subr.bf16.mxu0 0
        %1027 = vmatpush1.bf16.xpose.msra.mxu0 0
        %1028 = vmatprep.subr.bf16.mxu0 0
        %1029 = vmatpush1.bf16.xpose.msra.mxu0 0
        %1030 = vmatprep.subr.bf16.mxu0 0
        %1031 = vmatpush1.bf16.xpose.msra.mxu0 0
        %1032 = vmatprep.mubr.bf16.mxu0 0
        %1033 = vmatmul.mubr.bf16.gmra.mrb[0].mxu0 %v995
        %v1034 = vpop.f32.mrb[0].mxu0
        %v1035 = vadd.f32 0.0, %v1034
        %v1036 = vpop.f32.mrb[0].mxu0
        %v1037 = vpop.f32.mrb[0].mxu0
        %v1038 = vadd.f32 0.0, %v1037
        %v1039 = vpop.f32.mrb[0].mxu0
        %1040 = vdwg.mxu0
        %v1042 = vsel %vm899, %v878, 0
        %v1045 = vsel %vm899, %v886, 0
        %1047 = vmatprep.subr.bf16.mxu0 0
        %1048 = vmatpush1.bf16.xpose.msra.mxu0 %v1045
        %1049 = vmatprep.subr.bf16.mxu0 0
        %1050 = vmatpush1.bf16.xpose.msra.mxu0 0
        %1051 = vmatprep.subr.bf16.mxu0 0
        %1052 = vmatpush1.bf16.xpose.msra.mxu0 0
        %1053 = vmatprep.subr.bf16.mxu0 0
        %1054 = vmatpush1.bf16.xpose.msra.mxu0 0
        %1055 = vmatprep.subr.bf16.mxu0 0
        %1056 = vmatpush1.bf16.xpose.msra.mxu0 0
        %1057 = vmatprep.subr.bf16.mxu0 0
        %1058 = vmatpush1.bf16.xpose.msra.mxu0 0
        %1059 = vmatprep.subr.bf16.mxu0 0
        %1060 = vmatpush1.bf16.xpose.msra.mxu0 0
        %1061 = vmatprep.subr.bf16.mxu0 0
        %1062 = vmatpush1.bf16.xpose.msra.mxu0 0
        %1063 = vmatprep.subr.bf16.mxu0 0
        %1064 = vmatpush1.bf16.xpose.msra.mxu0 0
        %1065 = vmatprep.subr.bf16.mxu0 0
        %1066 = vmatpush1.bf16.xpose.msra.mxu0 0
        %1067 = vmatprep.subr.bf16.mxu0 0
        %1068 = vmatpush1.bf16.xpose.msra.mxu0 0
        %1069 = vmatprep.subr.bf16.mxu0 0
        %1070 = vmatpush1.bf16.xpose.msra.mxu0 0
        %1071 = vmatprep.subr.bf16.mxu0 0
        %1072 = vmatpush1.bf16.xpose.msra.mxu0 0
        %1073 = vmatprep.subr.bf16.mxu0 0
        %1074 = vmatpush1.bf16.xpose.msra.mxu0 0
        %1075 = vmatprep.subr.bf16.mxu0 0
        %1076 = vmatpush1.bf16.xpose.msra.mxu0 0
        %1077 = vmatprep.subr.bf16.mxu0 0
        %1078 = vmatpush1.bf16.xpose.msra.mxu0 0
        %1079 = vmatprep.mubr.bf16.mxu0 0
        %1080 = vmatmul.mubr.bf16.gmra.mrb[0].mxu0 %v1042
        %v1081 = vpop.f32.mrb[0].mxu0
        %v1082 = vadd.f32 0.0, %v1081
        %v1083 = vpop.f32.mrb[0].mxu0
        %v1084 = vpop.f32.mrb[0].mxu0
        %v1085 = vadd.f32 0.0, %v1084
        %v1086 = vpop.f32.mrb[0].mxu0
        %1087 = vdwg.mxu0
        %v1089 = vsel %vm899, %v879, 0
        %v1092 = vsel %vm899, %v887, 0
        %1094 = vmatprep.subr.bf16.mxu0 0
        %1095 = vmatpush1.bf16.xpose.msra.mxu0 %v1092
        %1096 = vmatprep.subr.bf16.mxu0 0
        %1097 = vmatpush1.bf16.xpose.msra.mxu0 0
        %1098 = vmatprep.subr.bf16.mxu0 0
        %1099 = vmatpush1.bf16.xpose.msra.mxu0 0
        %1100 = vmatprep.subr.bf16.mxu0 0
        %1101 = vmatpush1.bf16.xpose.msra.mxu0 0
        %1102 = vmatprep.subr.bf16.mxu0 0
        %1103 = vmatpush1.bf16.xpose.msra.mxu0 0
        %1104 = vmatprep.subr.bf16.mxu0 0
        %1105 = vmatpush1.bf16.xpose.msra.mxu0 0
        %1106 = vmatprep.subr.bf16.mxu0 0
        %1107 = vmatpush1.bf16.xpose.msra.mxu0 0
        %1108 = vmatprep.subr.bf16.mxu0 0
        %1109 = vmatpush1.bf16.xpose.msra.mxu0 0
        %1110 = vmatprep.subr.bf16.mxu0 0
        %1111 = vmatpush1.bf16.xpose.msra.mxu0 0
        %1112 = vmatprep.subr.bf16.mxu0 0
        %1113 = vmatpush1.bf16.xpose.msra.mxu0 0
        %1114 = vmatprep.subr.bf16.mxu0 0
        %1115 = vmatpush1.bf16.xpose.msra.mxu0 0
        %1116 = vmatprep.subr.bf16.mxu0 0
        %1117 = vmatpush1.bf16.xpose.msra.mxu0 0
        %1118 = vmatprep.subr.bf16.mxu0 0
        %1119 = vmatpush1.bf16.xpose.msra.mxu0 0
        %1120 = vmatprep.subr.bf16.mxu0 0
        %1121 = vmatpush1.bf16.xpose.msra.mxu0 0
        %1122 = vmatprep.subr.bf16.mxu0 0
        %1123 = vmatpush1.bf16.xpose.msra.mxu0 0
        %1124 = vmatprep.subr.bf16.mxu0 0
        %1125 = vmatpush1.bf16.xpose.msra.mxu0 0
        %1126 = vmatprep.mubr.bf16.mxu0 0
        %1127 = vmatmul.mubr.bf16.gmra.mrb[0].mxu0 %v1089
        %v1128 = vpop.f32.mrb[0].mxu0
        %v1129 = vadd.f32 0.0, %v1128
        %v1130 = vpop.f32.mrb[0].mxu0
        %v1131 = vpop.f32.mrb[0].mxu0
        %v1132 = vadd.f32 0.0, %v1131
        %v1133 = vpop.f32.mrb[0].mxu0
        %1134 = vdwg.mxu0
        %v1136 = vsel %vm899, %v880, 0
        %v1139 = vsel %vm899, %v888, 0
        %1141 = vmatprep.subr.bf16.mxu0 0
        %1142 = vmatpush1.bf16.xpose.msra.mxu0 %v1139
        %1143 = vmatprep.subr.bf16.mxu0 0
        %1144 = vmatpush1.bf16.xpose.msra.mxu0 0
        %1145 = vmatprep.subr.bf16.mxu0 0
        %1146 = vmatpush1.bf16.xpose.msra.mxu0 0
        %1147 = vmatprep.subr.bf16.mxu0 0
        %1148 = vmatpush1.bf16.xpose.msra.mxu0 0
        %1149 = vmatprep.subr.bf16.mxu0 0
        %1150 = vmatpush1.bf16.xpose.msra.mxu0 0
        %1151 = vmatprep.subr.bf16.mxu0 0
        %1152 = vmatpush1.bf16.xpose.msra.mxu0 0
        %1153 = vmatprep.subr.bf16.mxu0 0
        %1154 = vmatpush1.bf16.xpose.msra.mxu0 0
        %1155 = vmatprep.subr.bf16.mxu0 0
        %1156 = vmatpush1.bf16.xpose.msra.mxu0 0
        %1157 = vmatprep.subr.bf16.mxu0 0
        %1158 = vmatpush1.bf16.xpose.msra.mxu0 0
        %1159 = vmatprep.subr.bf16.mxu0 0
        %1160 = vmatpush1.bf16.xpose.msra.mxu0 0
        %1161 = vmatprep.subr.bf16.mxu0 0
        %1162 = vmatpush1.bf16.xpose.msra.mxu0 0
        %1163 = vmatprep.subr.bf16.mxu0 0
        %1164 = vmatpush1.bf16.xpose.msra.mxu0 0
        %1165 = vmatprep.subr.bf16.mxu0 0
        %1166 = vmatpush1.bf16.xpose.msra.mxu0 0
        %1167 = vmatprep.subr.bf16.mxu0 0
        %1168 = vmatpush1.bf16.xpose.msra.mxu0 0
        %1169 = vmatprep.subr.bf16.mxu0 0
        %1170 = vmatpush1.bf16.xpose.msra.mxu0 0
        %1171 = vmatprep.subr.bf16.mxu0 0
        %1172 = vmatpush1.bf16.xpose.msra.mxu0 0
        %1173 = vmatprep.mubr.bf16.mxu0 0
        %1174 = vmatmul.mubr.bf16.gmra.mrb[0].mxu0 %v1136
        %v1175 = vpop.f32.mrb[0].mxu0
        %v1176 = vadd.f32 0.0, %v1175
        %v1177 = vpop.f32.mrb[0].mxu0
        %v1178 = vpop.f32.mrb[0].mxu0
        %v1179 = vadd.f32 0.0, %v1178
        %v1180 = vpop.f32.mrb[0].mxu0
        %1181 = vdwg.mxu0
        %v1183 = vsel %vm899, %v881, 0
        %v1186 = vsel %vm899, %v889, 0
        %1188 = vmatprep.subr.bf16.mxu0 0
        %1189 = vmatpush1.bf16.xpose.msra.mxu0 %v1186
        %1190 = vmatprep.subr.bf16.mxu0 0
        %1191 = vmatpush1.bf16.xpose.msra.mxu0 0
        %1192 = vmatprep.subr.bf16.mxu0 0
        %1193 = vmatpush1.bf16.xpose.msra.mxu0 0
        %1194 = vmatprep.subr.bf16.mxu0 0
        %1195 = vmatpush1.bf16.xpose.msra.mxu0 0
        %1196 = vmatprep.subr.bf16.mxu0 0
        %1197 = vmatpush1.bf16.xpose.msra.mxu0 0
        %1198 = vmatprep.subr.bf16.mxu0 0
        %1199 = vmatpush1.bf16.xpose.msra.mxu0 0
        %1200 = vmatprep.subr.bf16.mxu0 0
        %1201 = vmatpush1.bf16.xpose.msra.mxu0 0
        %1202 = vmatprep.subr.bf16.mxu0 0
        %1203 = vmatpush1.bf16.xpose.msra.mxu0 0
        %1204 = vmatprep.subr.bf16.mxu0 0
        %1205 = vmatpush1.bf16.xpose.msra.mxu0 0
        %1206 = vmatprep.subr.bf16.mxu0 0
        %1207 = vmatpush1.bf16.xpose.msra.mxu0 0
        %1208 = vmatprep.subr.bf16.mxu0 0
        %1209 = vmatpush1.bf16.xpose.msra.mxu0 0
        %1210 = vmatprep.subr.bf16.mxu0 0
        %1211 = vmatpush1.bf16.xpose.msra.mxu0 0
        %1212 = vmatprep.subr.bf16.mxu0 0
        %1213 = vmatpush1.bf16.xpose.msra.mxu0 0
        %1214 = vmatprep.subr.bf16.mxu0 0
        %1215 = vmatpush1.bf16.xpose.msra.mxu0 0
        %1216 = vmatprep.subr.bf16.mxu0 0
        %1217 = vmatpush1.bf16.xpose.msra.mxu0 0
        %1218 = vmatprep.subr.bf16.mxu0 0
        %1219 = vmatpush1.bf16.xpose.msra.mxu0 0
        %1220 = vmatprep.mubr.bf16.mxu0 0
        %1221 = vmatmul.mubr.bf16.gmra.mrb[0].mxu0 %v1183
        %v1222 = vpop.f32.mrb[0].mxu0
        %v1223 = vadd.f32 0.0, %v1222
        %v1224 = vpop.f32.mrb[0].mxu0
        %v1225 = vpop.f32.mrb[0].mxu0
        %v1226 = vadd.f32 0.0, %v1225
        %v1227 = vpop.f32.mrb[0].mxu0
        %1228 = vdwg.mxu0
        %v1230 = vsel %vm899, %v882, 0
        %v1233 = vsel %vm899, %v890, 0
        %1235 = vmatprep.subr.bf16.mxu0 0
        %1236 = vmatpush1.bf16.xpose.msra.mxu0 %v1233
        %1237 = vmatprep.subr.bf16.mxu0 0
        %1238 = vmatpush1.bf16.xpose.msra.mxu0 0
        %1239 = vmatprep.subr.bf16.mxu0 0
        %1240 = vmatpush1.bf16.xpose.msra.mxu0 0
        %1241 = vmatprep.subr.bf16.mxu0 0
        %1242 = vmatpush1.bf16.xpose.msra.mxu0 0
        %1243 = vmatprep.subr.bf16.mxu0 0
        %1244 = vmatpush1.bf16.xpose.msra.mxu0 0
        %1245 = vmatprep.subr.bf16.mxu0 0
        %1246 = vmatpush1.bf16.xpose.msra.mxu0 0
        %1247 = vmatprep.subr.bf16.mxu0 0
        %1248 = vmatpush1.bf16.xpose.msra.mxu0 0
        %1249 = vmatprep.subr.bf16.mxu0 0
        %1250 = vmatpush1.bf16.xpose.msra.mxu0 0
        %1251 = vmatprep.subr.bf16.mxu0 0
        %1252 = vmatpush1.bf16.xpose.msra.mxu0 0
        %1253 = vmatprep.subr.bf16.mxu0 0
        %1254 = vmatpush1.bf16.xpose.msra.mxu0 0
        %1255 = vmatprep.subr.bf16.mxu0 0
        %1256 = vmatpush1.bf16.xpose.msra.mxu0 0
        %1257 = vmatprep.subr.bf16.mxu0 0
        %1258 = vmatpush1.bf16.xpose.msra.mxu0 0
        %1259 = vmatprep.subr.bf16.mxu0 0
        %1260 = vmatpush1.bf16.xpose.msra.mxu0 0
        %1261 = vmatprep.subr.bf16.mxu0 0
        %1262 = vmatpush1.bf16.xpose.msra.mxu0 0
        %1263 = vmatprep.subr.bf16.mxu0 0
        %1264 = vmatpush1.bf16.xpose.msra.mxu0 0
        %1265 = vmatprep.subr.bf16.mxu0 0
        %1266 = vmatpush1.bf16.xpose.msra.mxu0 0
        %1267 = vmatprep.mubr.bf16.mxu0 0
        %1268 = vmatmul.mubr.bf16.gmra.mrb[0].mxu0 %v1230
        %v1269 = vpop.f32.mrb[0].mxu0
        %v1270 = vadd.f32 0.0, %v1269
        %v1271 = vpop.f32.mrb[0].mxu0
        %v1272 = vpop.f32.mrb[0].mxu0
        %v1273 = vadd.f32 0.0, %v1272
        %v1274 = vpop.f32.mrb[0].mxu0
        %1275 = vdwg.mxu0
        %vm1276 = vcmask 130048
        %v1277 = vsel %vm1276, %v941, 0.0
        %v1278 = vsel %vm1276, %v988, 0.0
        %v1279 = vadd.f32 %v1277, %v1278
        %v1280 = vsel %vm1276, %v1035, 0.0
        %v1281 = vadd.f32 %v1279, %v1280
        %v1282 = vsel %vm1276, %v1082, 0.0
        %v1283 = vadd.f32 %v1281, %v1282
        %v1284 = vsel %vm1276, %v1129, 0.0
        %v1285 = vadd.f32 %v1283, %v1284
        %v1286 = vsel %vm1276, %v1176, 0.0
        %v1287 = vadd.f32 %v1285, %v1286
        %v1288 = vsel %vm1276, %v1223, 0.0
        %v1289 = vadd.f32 %v1287, %v1288
        %v1290 = vsel %vm1276, %v1270, 0.0
        %v1291 = vadd.f32 %v1289, %v1290
        %v1292 = vsel %vm1276, %v944, 0.0
        %v1293 = vsel %vm1276, %v991, 0.0
        %v1294 = vadd.f32 %v1292, %v1293
        %v1295 = vsel %vm1276, %v1038, 0.0
        %v1296 = vadd.f32 %v1294, %v1295
        %v1297 = vsel %vm1276, %v1085, 0.0
        %v1298 = vadd.f32 %v1296, %v1297
        %v1299 = vsel %vm1276, %v1132, 0.0
        %v1300 = vadd.f32 %v1298, %v1299
        %v1301 = vsel %vm1276, %v1179, 0.0
        %v1302 = vadd.f32 %v1300, %v1301
        %v1303 = vsel %vm1276, %v1226, 0.0
        %v1304 = vadd.f32 %v1302, %v1303
        %v1305 = vsel %vm1276, %v1273, 0.0
        %v1306 = vadd.f32 %v1304, %v1305
        %v1307 = vsel %vm1276, %v1291, -inf
        %1308 = vmax.xlane.f32.xlu0 %v1307
        %v1309 = vpop.xlane.xlu0 %1308
        %v1310 = vsel %vm1276, %v1306, -inf
        %1311 = vmax.xlane.f32.xlu0 %v1310
        %v1312 = vpop.xlane.xlu0 %1311
        %v1313 = vsub.f32 %v1291, %v1309
        %v1314 = vsub.f32 %v1306, %v1312
        %v1315 = vmul.f32 %v1313, 1.442695
        %v1316 = vpow.pop %v1315
        %v1317 = vmul.f32 %v1314, 1.442695
        %v1318 = vpow.pop %v1317
        %v1319 = vsel %vm1276, %v1316, 0.0
        %1320 = vadd.xlane.f32.xlu0 %v1319
        %v1321 = vpop.xlane.xlu0 %1320
        %v1322 = vsel %vm1276, %v1318, 0.0
        %1323 = vadd.xlane.f32.xlu0 %v1322
        %v1324 = vpop.xlane.xlu0 %1323
        %v1325 = vrcp.pop %v1321
        %v1326 = vrcp.pop %v1324
        %v1327 = vmul.f32 %v1316, %v1325
        %v1328 = vmul.f32 %v1318, %v1326
        %1329 = vst.msk [vmem:[%s432] sm:$0xff] %vm1276, %v1327
        %1330 = vst.msk [vmem:[%s432 + $0x8] sm:$0xff] %vm1276, %v1328
        %v1331 = vpack.c.bf16 %v1328, %v1327
        %v1333 = vsel %vm1276, %v1331, 0
        %1335 = vmatprep.subr.bf16.mxu0 0
        %1336 = vmatpush1.bf16.msra.mxu0 %v891
        %1337 = vmatprep.subr.bf16.mxu0 0
        %1338 = vmatpush1.bf16.msra.mxu0 0
        %1339 = vmatprep.subr.bf16.mxu0 0
        %1340 = vmatpush1.bf16.msra.mxu0 0
        %1341 = vmatprep.subr.bf16.mxu0 0
        %1342 = vmatpush1.bf16.msra.mxu0 0
        %1343 = vmatprep.subr.bf16.mxu0 0
        %1344 = vmatpush1.bf16.msra.mxu0 0
        %1345 = vmatprep.subr.bf16.mxu0 0
        %1346 = vmatpush1.bf16.msra.mxu0 0
        %1347 = vmatprep.subr.bf16.mxu0 0
        %1348 = vmatpush1.bf16.msra.mxu0 0
        %1349 = vmatprep.subr.bf16.mxu0 0
        %1350 = vmatpush1.bf16.msra.mxu0 0
        %1351 = vmatprep.subr.bf16.mxu0 0
        %1352 = vmatpush1.bf16.msra.mxu0 0
        %1353 = vmatprep.subr.bf16.mxu0 0
        %1354 = vmatpush1.bf16.msra.mxu0 0
        %1355 = vmatprep.subr.bf16.mxu0 0
        %1356 = vmatpush1.bf16.msra.mxu0 0
        %1357 = vmatprep.subr.bf16.mxu0 0
        %1358 = vmatpush1.bf16.msra.mxu0 0
        %1359 = vmatprep.subr.bf16.mxu0 0
        %1360 = vmatpush1.bf16.msra.mxu0 0
        %1361 = vmatprep.subr.bf16.mxu0 0
        %1362 = vmatpush1.bf16.msra.mxu0 0
        %1363 = vmatprep.subr.bf16.mxu0 0
        %1364 = vmatpush1.bf16.msra.mxu0 0
        %1365 = vmatprep.subr.bf16.mxu0 0
        %1366 = vmatpush1.bf16.msra.mxu0 0
        %1367 = vmatprep.mubr.bf16.mxu0 0
        %1368 = vmatmul.mubr.bf16.gmra.mrb[0].mxu0 %v1333
        %v1369 = vpop.f32.mrb[0].mxu0
        %v1370 = vadd.f32 0.0, %v1369
        %v1371 = vpop.f32.mrb[0].mxu0
        %v1372 = vpop.f32.mrb[0].mxu0
        %v1373 = vadd.f32 0.0, %v1372
        %v1374 = vpop.f32.mrb[0].mxu0
        %1375 = vdwg.mxu0
        %1376 = vmatprep.subr.bf16.mxu0 0
        %1377 = vmatpush1.bf16.msra.mxu0 %v892
        %1378 = vmatprep.subr.bf16.mxu0 0
        %1379 = vmatpush1.bf16.msra.mxu0 0
        %1380 = vmatprep.subr.bf16.mxu0 0
        %1381 = vmatpush1.bf16.msra.mxu0 0
        %1382 = vmatprep.subr.bf16.mxu0 0
        %1383 = vmatpush1.bf16.msra.mxu0 0
        %1384 = vmatprep.subr.bf16.mxu0 0
        %1385 = vmatpush1.bf16.msra.mxu0 0
        %1386 = vmatprep.subr.bf16.mxu0 0
        %1387 = vmatpush1.bf16.msra.mxu0 0
        %1388 = vmatprep.subr.bf16.mxu0 0
        %1389 = vmatpush1.bf16.msra.mxu0 0
        %1390 = vmatprep.subr.bf16.mxu0 0
        %1391 = vmatpush1.bf16.msra.mxu0 0
        %1392 = vmatprep.subr.bf16.mxu0 0
        %1393 = vmatpush1.bf16.msra.mxu0 0
        %1394 = vmatprep.subr.bf16.mxu0 0
        %1395 = vmatpush1.bf16.msra.mxu0 0
        %1396 = vmatprep.subr.bf16.mxu0 0
        %1397 = vmatpush1.bf16.msra.mxu0 0
        %1398 = vmatprep.subr.bf16.mxu0 0
        %1399 = vmatpush1.bf16.msra.mxu0 0
        %1400 = vmatprep.subr.bf16.mxu0 0
        %1401 = vmatpush1.bf16.msra.mxu0 0
        %1402 = vmatprep.subr.bf16.mxu0 0
        %1403 = vmatpush1.bf16.msra.mxu0 0
        %1404 = vmatprep.subr.bf16.mxu0 0
        %1405 = vmatpush1.bf16.msra.mxu0 0
        %1406 = vmatprep.subr.bf16.mxu0 0
        %1407 = vmatpush1.bf16.msra.mxu0 0
        %1408 = vmatprep.mubr.bf16.mxu0 0
        %1409 = vmatmul.mubr.bf16.gmra.mrb[0].mxu0 %v1333
        %v1410 = vpop.f32.mrb[0].mxu0
        %v1411 = vadd.f32 0.0, %v1410
        %v1412 = vpop.f32.mrb[0].mxu0
        %v1413 = vpop.f32.mrb[0].mxu0
        %v1414 = vadd.f32 0.0, %v1413
        %v1415 = vpop.f32.mrb[0].mxu0
        %1416 = vdwg.mxu0
        %1417 = vmatprep.subr.bf16.mxu0 0
        %1418 = vmatpush1.bf16.msra.mxu0 %v893
        %1419 = vmatprep.subr.bf16.mxu0 0
        %1420 = vmatpush1.bf16.msra.mxu0 0
        %1421 = vmatprep.subr.bf16.mxu0 0
        %1422 = vmatpush1.bf16.msra.mxu0 0
        %1423 = vmatprep.subr.bf16.mxu0 0
        %1424 = vmatpush1.bf16.msra.mxu0 0
        %1425 = vmatprep.subr.bf16.mxu0 0
        %1426 = vmatpush1.bf16.msra.mxu0 0
        %1427 = vmatprep.subr.bf16.mxu0 0
        %1428 = vmatpush1.bf16.msra.mxu0 0
        %1429 = vmatprep.subr.bf16.mxu0 0
        %1430 = vmatpush1.bf16.msra.mxu0 0
        %1431 = vmatprep.subr.bf16.mxu0 0
        %1432 = vmatpush1.bf16.msra.mxu0 0
        %1433 = vmatprep.subr.bf16.mxu0 0
        %1434 = vmatpush1.bf16.msra.mxu0 0
        %1435 = vmatprep.subr.bf16.mxu0 0
        %1436 = vmatpush1.bf16.msra.mxu0 0
        %1437 = vmatprep.subr.bf16.mxu0 0
        %1438 = vmatpush1.bf16.msra.mxu0 0
        %1439 = vmatprep.subr.bf16.mxu0 0
        %1440 = vmatpush1.bf16.msra.mxu0 0
        %1441 = vmatprep.subr.bf16.mxu0 0
        %1442 = vmatpush1.bf16.msra.mxu0 0
        %1443 = vmatprep.subr.bf16.mxu0 0
        %1444 = vmatpush1.bf16.msra.mxu0 0
        %1445 = vmatprep.subr.bf16.mxu0 0
        %1446 = vmatpush1.bf16.msra.mxu0 0
        %1447 = vmatprep.subr.bf16.mxu0 0
        %1448 = vmatpush1.bf16.msra.mxu0 0
        %1449 = vmatprep.mubr.bf16.mxu0 0
        %1450 = vmatmul.mubr.bf16.gmra.mrb[0].mxu0 %v1333
        %v1451 = vpop.f32.mrb[0].mxu0
        %v1452 = vadd.f32 0.0, %v1451
        %v1453 = vpop.f32.mrb[0].mxu0
        %v1454 = vpop.f32.mrb[0].mxu0
        %v1455 = vadd.f32 0.0, %v1454
        %v1456 = vpop.f32.mrb[0].mxu0
        %1457 = vdwg.mxu0
        %1458 = vmatprep.subr.bf16.mxu0 0
        %1459 = vmatpush1.bf16.msra.mxu0 %v894
        %1460 = vmatprep.subr.bf16.mxu0 0
        %1461 = vmatpush1.bf16.msra.mxu0 0
        %1462 = vmatprep.subr.bf16.mxu0 0
        %1463 = vmatpush1.bf16.msra.mxu0 0
        %1464 = vmatprep.subr.bf16.mxu0 0
        %1465 = vmatpush1.bf16.msra.mxu0 0
        %1466 = vmatprep.subr.bf16.mxu0 0
        %1467 = vmatpush1.bf16.msra.mxu0 0
        %1468 = vmatprep.subr.bf16.mxu0 0
        %1469 = vmatpush1.bf16.msra.mxu0 0
        %1470 = vmatprep.subr.bf16.mxu0 0
        %1471 = vmatpush1.bf16.msra.mxu0 0
        %1472 = vmatprep.subr.bf16.mxu0 0
        %1473 = vmatpush1.bf16.msra.mxu0 0
        %1474 = vmatprep.subr.bf16.mxu0 0
        %1475 = vmatpush1.bf16.msra.mxu0 0
        %1476 = vmatprep.subr.bf16.mxu0 0
        %1477 = vmatpush1.bf16.msra.mxu0 0
        %1478 = vmatprep.subr.bf16.mxu0 0
        %1479 = vmatpush1.bf16.msra.mxu0 0
        %1480 = vmatprep.subr.bf16.mxu0 0
        %1481 = vmatpush1.bf16.msra.mxu0 0
        %1482 = vmatprep.subr.bf16.mxu0 0
        %1483 = vmatpush1.bf16.msra.mxu0 0
        %1484 = vmatprep.subr.bf16.mxu0 0
        %1485 = vmatpush1.bf16.msra.mxu0 0
        %1486 = vmatprep.subr.bf16.mxu0 0
        %1487 = vmatpush1.bf16.msra.mxu0 0
        %1488 = vmatprep.subr.bf16.mxu0 0
        %1489 = vmatpush1.bf16.msra.mxu0 0
        %1490 = vmatprep.mubr.bf16.mxu0 0
        %1491 = vmatmul.mubr.bf16.gmra.mrb[0].mxu0 %v1333
        %v1492 = vpop.f32.mrb[0].mxu0
        %v1493 = vadd.f32 0.0, %v1492
        %v1494 = vpop.f32.mrb[0].mxu0
        %v1495 = vpop.f32.mrb[0].mxu0
        %v1496 = vadd.f32 0.0, %v1495
        %v1497 = vpop.f32.mrb[0].mxu0
        %1498 = vdwg.mxu0
        %1499 = vmatprep.subr.bf16.mxu0 0
        %1500 = vmatpush1.bf16.msra.mxu0 %v895
        %1501 = vmatprep.subr.bf16.mxu0 0
        %1502 = vmatpush1.bf16.msra.mxu0 0
        %1503 = vmatprep.subr.bf16.mxu0 0
        %1504 = vmatpush1.bf16.msra.mxu0 0
        %1505 = vmatprep.subr.bf16.mxu0 0
        %1506 = vmatpush1.bf16.msra.mxu0 0
        %1507 = vmatprep.subr.bf16.mxu0 0
        %1508 = vmatpush1.bf16.msra.mxu0 0
        %1509 = vmatprep.subr.bf16.mxu0 0
        %1510 = vmatpush1.bf16.msra.mxu0 0
        %1511 = vmatprep.subr.bf16.mxu0 0
        %1512 = vmatpush1.bf16.msra.mxu0 0
        %1513 = vmatprep.subr.bf16.mxu0 0
        %1514 = vmatpush1.bf16.msra.mxu0 0
        %1515 = vmatprep.subr.bf16.mxu0 0
        %1516 = vmatpush1.bf16.msra.mxu0 0
        %1517 = vmatprep.subr.bf16.mxu0 0
        %1518 = vmatpush1.bf16.msra.mxu0 0
        %1519 = vmatprep.subr.bf16.mxu0 0
        %1520 = vmatpush1.bf16.msra.mxu0 0
        %1521 = vmatprep.subr.bf16.mxu0 0
        %1522 = vmatpush1.bf16.msra.mxu0 0
        %1523 = vmatprep.subr.bf16.mxu0 0
        %1524 = vmatpush1.bf16.msra.mxu0 0
        %1525 = vmatprep.subr.bf16.mxu0 0
        %1526 = vmatpush1.bf16.msra.mxu0 0
        %1527 = vmatprep.subr.bf16.mxu0 0
        %1528 = vmatpush1.bf16.msra.mxu0 0
        %1529 = vmatprep.subr.bf16.mxu0 0
        %1530 = vmatpush1.bf16.msra.mxu0 0
        %1531 = vmatprep.mubr.bf16.mxu0 0
        %1532 = vmatmul.mubr.bf16.gmra.mrb[0].mxu0 %v1333
        %v1533 = vpop.f32.mrb[0].mxu0
        %v1534 = vadd.f32 0.0, %v1533
        %v1535 = vpop.f32.mrb[0].mxu0
        %v1536 = vpop.f32.mrb[0].mxu0
        %v1537 = vadd.f32 0.0, %v1536
        %v1538 = vpop.f32.mrb[0].mxu0
        %1539 = vdwg.mxu0
        %1540 = vmatprep.subr.bf16.mxu0 0
        %1541 = vmatpush1.bf16.msra.mxu0 %v896
        %1542 = vmatprep.subr.bf16.mxu0 0
        %1543 = vmatpush1.bf16.msra.mxu0 0
        %1544 = vmatprep.subr.bf16.mxu0 0
        %1545 = vmatpush1.bf16.msra.mxu0 0
        %1546 = vmatprep.subr.bf16.mxu0 0
        %1547 = vmatpush1.bf16.msra.mxu0 0
        %1548 = vmatprep.subr.bf16.mxu0 0
        %1549 = vmatpush1.bf16.msra.mxu0 0
        %1550 = vmatprep.subr.bf16.mxu0 0
        %1551 = vmatpush1.bf16.msra.mxu0 0
        %1552 = vmatprep.subr.bf16.mxu0 0
        %1553 = vmatpush1.bf16.msra.mxu0 0
        %1554 = vmatprep.subr.bf16.mxu0 0
        %1555 = vmatpush1.bf16.msra.mxu0 0
        %1556 = vmatprep.subr.bf16.mxu0 0
        %1557 = vmatpush1.bf16.msra.mxu0 0
        %1558 = vmatprep.subr.bf16.mxu0 0
        %1559 = vmatpush1.bf16.msra.mxu0 0
        %1560 = vmatprep.subr.bf16.mxu0 0
        %1561 = vmatpush1.bf16.msra.mxu0 0
        %1562 = vmatprep.subr.bf16.mxu0 0
        %1563 = vmatpush1.bf16.msra.mxu0 0
        %1564 = vmatprep.subr.bf16.mxu0 0
        %1565 = vmatpush1.bf16.msra.mxu0 0
        %1566 = vmatprep.subr.bf16.mxu0 0
        %1567 = vmatpush1.bf16.msra.mxu0 0
        %1568 = vmatprep.subr.bf16.mxu0 0
        %1569 = vmatpush1.bf16.msra.mxu0 0
        %1570 = vmatprep.subr.bf16.mxu0 0
        %1571 = vmatpush1.bf16.msra.mxu0 0
        %1572 = vmatprep.mubr.bf16.mxu0 0
        %1573 = vmatmul.mubr.bf16.gmra.mrb[0].mxu0 %v1333
        %v1574 = vpop.f32.mrb[0].mxu0
        %v1575 = vadd.f32 0.0, %v1574
        %v1576 = vpop.f32.mrb[0].mxu0
        %v1577 = vpop.f32.mrb[0].mxu0
        %v1578 = vadd.f32 0.0, %v1577
        %v1579 = vpop.f32.mrb[0].mxu0
        %1580 = vdwg.mxu0
        %1581 = vmatprep.subr.bf16.mxu0 0
        %1582 = vmatpush1.bf16.msra.mxu0 %v897
        %1583 = vmatprep.subr.bf16.mxu0 0
        %1584 = vmatpush1.bf16.msra.mxu0 0
        %1585 = vmatprep.subr.bf16.mxu0 0
        %1586 = vmatpush1.bf16.msra.mxu0 0
        %1587 = vmatprep.subr.bf16.mxu0 0
        %1588 = vmatpush1.bf16.msra.mxu0 0
        %1589 = vmatprep.subr.bf16.mxu0 0
        %1590 = vmatpush1.bf16.msra.mxu0 0
        %1591 = vmatprep.subr.bf16.mxu0 0
        %1592 = vmatpush1.bf16.msra.mxu0 0
        %1593 = vmatprep.subr.bf16.mxu0 0
        %1594 = vmatpush1.bf16.msra.mxu0 0
        %1595 = vmatprep.subr.bf16.mxu0 0
        %1596 = vmatpush1.bf16.msra.mxu0 0
        %1597 = vmatprep.subr.bf16.mxu0 0
        %1598 = vmatpush1.bf16.msra.mxu0 0
        %1599 = vmatprep.subr.bf16.mxu0 0
        %1600 = vmatpush1.bf16.msra.mxu0 0
        %1601 = vmatprep.subr.bf16.mxu0 0
        %1602 = vmatpush1.bf16.msra.mxu0 0
        %1603 = vmatprep.subr.bf16.mxu0 0
        %1604 = vmatpush1.bf16.msra.mxu0 0
        %1605 = vmatprep.subr.bf16.mxu0 0
        %1606 = vmatpush1.bf16.msra.mxu0 0
        %1607 = vmatprep.subr.bf16.mxu0 0
        %1608 = vmatpush1.bf16.msra.mxu0 0
        %1609 = vmatprep.subr.bf16.mxu0 0
        %1610 = vmatpush1.bf16.msra.mxu0 0
        %1611 = vmatprep.subr.bf16.mxu0 0
        %1612 = vmatpush1.bf16.msra.mxu0 0
        %1613 = vmatprep.mubr.bf16.mxu0 0
        %1614 = vmatmul.mubr.bf16.gmra.mrb[0].mxu0 %v1333
        %v1615 = vpop.f32.mrb[0].mxu0
        %v1616 = vadd.f32 0.0, %v1615
        %v1617 = vpop.f32.mrb[0].mxu0
        %v1618 = vpop.f32.mrb[0].mxu0
        %v1619 = vadd.f32 0.0, %v1618
        %v1620 = vpop.f32.mrb[0].mxu0
        %1621 = vdwg.mxu0
        %1622 = vmatprep.subr.bf16.mxu0 0
        %1623 = vmatpush1.bf16.msra.mxu0 %v898
        %1624 = vmatprep.subr.bf16.mxu0 0
        %1625 = vmatpush1.bf16.msra.mxu0 0
        %1626 = vmatprep.subr.bf16.mxu0 0
        %1627 = vmatpush1.bf16.msra.mxu0 0
        %1628 = vmatprep.subr.bf16.mxu0 0
        %1629 = vmatpush1.bf16.msra.mxu0 0
        %1630 = vmatprep.subr.bf16.mxu0 0
        %1631 = vmatpush1.bf16.msra.mxu0 0
        %1632 = vmatprep.subr.bf16.mxu0 0
        %1633 = vmatpush1.bf16.msra.mxu0 0
        %1634 = vmatprep.subr.bf16.mxu0 0
        %1635 = vmatpush1.bf16.msra.mxu0 0
        %1636 = vmatprep.subr.bf16.mxu0 0
        %1637 = vmatpush1.bf16.msra.mxu0 0
        %1638 = vmatprep.subr.bf16.mxu0 0
        %1639 = vmatpush1.bf16.msra.mxu0 0
        %1640 = vmatprep.subr.bf16.mxu0 0
        %1641 = vmatpush1.bf16.msra.mxu0 0
        %1642 = vmatprep.subr.bf16.mxu0 0
        %1643 = vmatpush1.bf16.msra.mxu0 0
        %1644 = vmatprep.subr.bf16.mxu0 0
        %1645 = vmatpush1.bf16.msra.mxu0 0
        %1646 = vmatprep.subr.bf16.mxu0 0
        %1647 = vmatpush1.bf16.msra.mxu0 0
        %1648 = vmatprep.subr.bf16.mxu0 0
        %1649 = vmatpush1.bf16.msra.mxu0 0
        %1650 = vmatprep.subr.bf16.mxu0 0
        %1651 = vmatpush1.bf16.msra.mxu0 0
        %1652 = vmatprep.subr.bf16.mxu0 0
        %1653 = vmatpush1.bf16.msra.mxu0 0
        %1654 = vmatprep.mubr.bf16.mxu0 0
        %1655 = vmatmul.mubr.bf16.gmra.mrb[0].mxu0 %v1333
        %v1656 = vpop.f32.mrb[0].mxu0
        %v1657 = vadd.f32 0.0, %v1656
        %v1658 = vpop.f32.mrb[0].mxu0
        %v1659 = vpop.f32.mrb[0].mxu0
        %v1660 = vadd.f32 0.0, %v1659
        %v1661 = vpop.f32.mrb[0].mxu0
        %1662 = vdwg.mxu0
        %1664 = vrot.lane.b32.xlu0 %v875, 120
        %v1665 = vpop.permute.xlu0 %1664
        %1667 = vrot.lane.b32.xlu0 %v883, 120
        %v1668 = vpop.permute.xlu0 %1667
        %v1670 = vsel %vm899, %v1665, 0
        %v1673 = vsel %vm899, %v1668, 0
        %1675 = vmatprep.subr.bf16.mxu0 0
        %1676 = vmatpush1.bf16.xpose.msra.mxu0 %v1673
        %1677 = vmatprep.subr.bf16.mxu0 0
        %1678 = vmatpush1.bf16.xpose.msra.mxu0 0
        %1679 = vmatprep.subr.bf16.mxu0 0
        %1680 = vmatpush1.bf16.xpose.msra.mxu0 0
        %1681 = vmatprep.subr.bf16.mxu0 0
        %1682 = vmatpush1.bf16.xpose.msra.mxu0 0
        %1683 = vmatprep.subr.bf16.mxu0 0
        %1684 = vmatpush1.bf16.xpose.msra.mxu0 0
        %1685 = vmatprep.subr.bf16.mxu0 0
        %1686 = vmatpush1.bf16.xpose.msra.mxu0 0
        %1687 = vmatprep.subr.bf16.mxu0 0
        %1688 = vmatpush1.bf16.xpose.msra.mxu0 0
        %1689 = vmatprep.subr.bf16.mxu0 0
        %1690 = vmatpush1.bf16.xpose.msra.mxu0 0
        %1691 = vmatprep.subr.bf16.mxu0 0
        %1692 = vmatpush1.bf16.xpose.msra.mxu0 0
        %1693 = vmatprep.subr.bf16.mxu0 0
        %1694 = vmatpush1.bf16.xpose.msra.mxu0 0
        %1695 = vmatprep.subr.bf16.mxu0 0
        %1696 = vmatpush1.bf16.xpose.msra.mxu0 0
        %1697 = vmatprep.subr.bf16.mxu0 0
        %1698 = vmatpush1.bf16.xpose.msra.mxu0 0
        %1699 = vmatprep.subr.bf16.mxu0 0
        %1700 = vmatpush1.bf16.xpose.msra.mxu0 0
        %1701 = vmatprep.subr.bf16.mxu0 0
        %1702 = vmatpush1.bf16.xpose.msra.mxu0 0
        %1703 = vmatprep.subr.bf16.mxu0 0
        %1704 = vmatpush1.bf16.xpose.msra.mxu0 0
        %1705 = vmatprep.subr.bf16.mxu0 0
        %1706 = vmatpush1.bf16.xpose.msra.mxu0 0
        %1707 = vmatprep.mubr.bf16.mxu0 0
        %1708 = vmatmul.mubr.bf16.gmra.mrb[0].mxu0 %v1670
        %v1709 = vpop.f32.mrb[0].mxu0
        %v1710 = vadd.f32 0.0, %v1709
        %v1711 = vpop.f32.mrb[0].mxu0
        %v1712 = vpop.f32.mrb[0].mxu0
        %v1713 = vadd.f32 0.0, %v1712
        %v1714 = vpop.f32.mrb[0].mxu0
        %1715 = vdwg.mxu0
        %1717 = vrot.lane.b32.xlu0 %v876, 120
        %v1718 = vpop.permute.xlu0 %1717
        %1720 = vrot.lane.b32.xlu0 %v884, 120
        %v1721 = vpop.permute.xlu0 %1720
        %v1723 = vsel %vm899, %v1718, 0
        %v1726 = vsel %vm899, %v1721, 0
        %1728 = vmatprep.subr.bf16.mxu0 0
        %1729 = vmatpush1.bf16.xpose.msra.mxu0 %v1726
        %1730 = vmatprep.subr.bf16.mxu0 0
        %1731 = vmatpush1.bf16.xpose.msra.mxu0 0
        %1732 = vmatprep.subr.bf16.mxu0 0
        %1733 = vmatpush1.bf16.xpose.msra.mxu0 0
        %1734 = vmatprep.subr.bf16.mxu0 0
        %1735 = vmatpush1.bf16.xpose.msra.mxu0 0
        %1736 = vmatprep.subr.bf16.mxu0 0
        %1737 = vmatpush1.bf16.xpose.msra.mxu0 0
        %1738 = vmatprep.subr.bf16.mxu0 0
        %1739 = vmatpush1.bf16.xpose.msra.mxu0 0
        %1740 = vmatprep.subr.bf16.mxu0 0
        %1741 = vmatpush1.bf16.xpose.msra.mxu0 0
        %1742 = vmatprep.subr.bf16.mxu0 0
        %1743 = vmatpush1.bf16.xpose.msra.mxu0 0
        %1744 = vmatprep.subr.bf16.mxu0 0
        %1745 = vmatpush1.bf16.xpose.msra.mxu0 0
        %1746 = vmatprep.subr.bf16.mxu0 0
        %1747 = vmatpush1.bf16.xpose.msra.mxu0 0
        %1748 = vmatprep.subr.bf16.mxu0 0
        %1749 = vmatpush1.bf16.xpose.msra.mxu0 0
        %1750 = vmatprep.subr.bf16.mxu0 0
        %1751 = vmatpush1.bf16.xpose.msra.mxu0 0
        %1752 = vmatprep.subr.bf16.mxu0 0
        %1753 = vmatpush1.bf16.xpose.msra.mxu0 0
        %1754 = vmatprep.subr.bf16.mxu0 0
        %1755 = vmatpush1.bf16.xpose.msra.mxu0 0
        %1756 = vmatprep.subr.bf16.mxu0 0
        %1757 = vmatpush1.bf16.xpose.msra.mxu0 0
        %1758 = vmatprep.subr.bf16.mxu0 0
        %1759 = vmatpush1.bf16.xpose.msra.mxu0 0
        %1760 = vmatprep.mubr.bf16.mxu0 0
        %1761 = vmatmul.mubr.bf16.gmra.mrb[0].mxu0 %v1723
        %v1762 = vpop.f32.mrb[0].mxu0
        %v1763 = vadd.f32 0.0, %v1762
        %v1764 = vpop.f32.mrb[0].mxu0
        %v1765 = vpop.f32.mrb[0].mxu0
        %v1766 = vadd.f32 0.0, %v1765
        %v1767 = vpop.f32.mrb[0].mxu0
        %1768 = vdwg.mxu0
        %1770 = vrot.lane.b32.xlu0 %v877, 120
        %v1771 = vpop.permute.xlu0 %1770
        %1773 = vrot.lane.b32.xlu0 %v885, 120
        %v1774 = vpop.permute.xlu0 %1773
        %v1776 = vsel %vm899, %v1771, 0
        %v1779 = vsel %vm899, %v1774, 0
        %1781 = vmatprep.subr.bf16.mxu0 0
        %1782 = vmatpush1.bf16.xpose.msra.mxu0 %v1779
        %1783 = vmatprep.subr.bf16.mxu0 0
        %1784 = vmatpush1.bf16.xpose.msra.mxu0 0
        %1785 = vmatprep.subr.bf16.mxu0 0
        %1786 = vmatpush1.bf16.xpose.msra.mxu0 0
        %1787 = vmatprep.subr.bf16.mxu0 0
        %1788 = vmatpush1.bf16.xpose.msra.mxu0 0
        %1789 = vmatprep.subr.bf16.mxu0 0
        %1790 = vmatpush1.bf16.xpose.msra.mxu0 0
        %1791 = vmatprep.subr.bf16.mxu0 0
        %1792 = vmatpush1.bf16.xpose.msra.mxu0 0
        %1793 = vmatprep.subr.bf16.mxu0 0
        %1794 = vmatpush1.bf16.xpose.msra.mxu0 0
        %1795 = vmatprep.subr.bf16.mxu0 0
        %1796 = vmatpush1.bf16.xpose.msra.mxu0 0
        %1797 = vmatprep.subr.bf16.mxu0 0
        %1798 = vmatpush1.bf16.xpose.msra.mxu0 0
        %1799 = vmatprep.subr.bf16.mxu0 0
        %1800 = vmatpush1.bf16.xpose.msra.mxu0 0
        %1801 = vmatprep.subr.bf16.mxu0 0
        %1802 = vmatpush1.bf16.xpose.msra.mxu0 0
        %1803 = vmatprep.subr.bf16.mxu0 0
        %1804 = vmatpush1.bf16.xpose.msra.mxu0 0
        %1805 = vmatprep.subr.bf16.mxu0 0
        %1806 = vmatpush1.bf16.xpose.msra.mxu0 0
        %1807 = vmatprep.subr.bf16.mxu0 0
        %1808 = vmatpush1.bf16.xpose.msra.mxu0 0
        %1809 = vmatprep.subr.bf16.mxu0 0
        %1810 = vmatpush1.bf16.xpose.msra.mxu0 0
        %1811 = vmatprep.subr.bf16.mxu0 0
        %1812 = vmatpush1.bf16.xpose.msra.mxu0 0
        %1813 = vmatprep.mubr.bf16.mxu0 0
        %1814 = vmatmul.mubr.bf16.gmra.mrb[0].mxu0 %v1776
        %v1815 = vpop.f32.mrb[0].mxu0
        %v1816 = vadd.f32 0.0, %v1815
        %v1817 = vpop.f32.mrb[0].mxu0
        %v1818 = vpop.f32.mrb[0].mxu0
        %v1819 = vadd.f32 0.0, %v1818
        %v1820 = vpop.f32.mrb[0].mxu0
        %1821 = vdwg.mxu0
        %1823 = vrot.lane.b32.xlu0 %v878, 120
        %v1824 = vpop.permute.xlu0 %1823
        %1826 = vrot.lane.b32.xlu0 %v886, 120
        %v1827 = vpop.permute.xlu0 %1826
        %v1829 = vsel %vm899, %v1824, 0
        %v1832 = vsel %vm899, %v1827, 0
        %1834 = vmatprep.subr.bf16.mxu0 0
        %1835 = vmatpush1.bf16.xpose.msra.mxu0 %v1832
        %1836 = vmatprep.subr.bf16.mxu0 0
        %1837 = vmatpush1.bf16.xpose.msra.mxu0 0
        %1838 = vmatprep.subr.bf16.mxu0 0
        %1839 = vmatpush1.bf16.xpose.msra.mxu0 0
        %1840 = vmatprep.subr.bf16.mxu0 0
        %1841 = vmatpush1.bf16.xpose.msra.mxu0 0
        %1842 = vmatprep.subr.bf16.mxu0 0
        %1843 = vmatpush1.bf16.xpose.msra.mxu0 0
        %1844 = vmatprep.subr.bf16.mxu0 0
        %1845 = vmatpush1.bf16.xpose.msra.mxu0 0
        %1846 = vmatprep.subr.bf16.mxu0 0
        %1847 = vmatpush1.bf16.xpose.msra.mxu0 0
        %1848 = vmatprep.subr.bf16.mxu0 0
        %1849 = vmatpush1.bf16.xpose.msra.mxu0 0
        %1850 = vmatprep.subr.bf16.mxu0 0
        %1851 = vmatpush1.bf16.xpose.msra.mxu0 0
        %1852 = vmatprep.subr.bf16.mxu0 0
        %1853 = vmatpush1.bf16.xpose.msra.mxu0 0
        %1854 = vmatprep.subr.bf16.mxu0 0
        %1855 = vmatpush1.bf16.xpose.msra.mxu0 0
        %1856 = vmatprep.subr.bf16.mxu0 0
        %1857 = vmatpush1.bf16.xpose.msra.mxu0 0
        %1858 = vmatprep.subr.bf16.mxu0 0
        %1859 = vmatpush1.bf16.xpose.msra.mxu0 0
        %1860 = vmatprep.subr.bf16.mxu0 0
        %1861 = vmatpush1.bf16.xpose.msra.mxu0 0
        %1862 = vmatprep.subr.bf16.mxu0 0
        %1863 = vmatpush1.bf16.xpose.msra.mxu0 0
        %1864 = vmatprep.subr.bf16.mxu0 0
        %1865 = vmatpush1.bf16.xpose.msra.mxu0 0
        %1866 = vmatprep.mubr.bf16.mxu0 0
        %1867 = vmatmul.mubr.bf16.gmra.mrb[0].mxu0 %v1829
        %v1868 = vpop.f32.mrb[0].mxu0
        %v1869 = vadd.f32 0.0, %v1868
        %v1870 = vpop.f32.mrb[0].mxu0
        %v1871 = vpop.f32.mrb[0].mxu0
        %v1872 = vadd.f32 0.0, %v1871
        %v1873 = vpop.f32.mrb[0].mxu0
        %1874 = vdwg.mxu0
        %1876 = vrot.lane.b32.xlu0 %v879, 120
        %v1877 = vpop.permute.xlu0 %1876
        %1879 = vrot.lane.b32.xlu0 %v887, 120
        %v1880 = vpop.permute.xlu0 %1879
        %v1882 = vsel %vm899, %v1877, 0
        %v1885 = vsel %vm899, %v1880, 0
        %1887 = vmatprep.subr.bf16.mxu0 0
        %1888 = vmatpush1.bf16.xpose.msra.mxu0 %v1885
        %1889 = vmatprep.subr.bf16.mxu0 0
        %1890 = vmatpush1.bf16.xpose.msra.mxu0 0
        %1891 = vmatprep.subr.bf16.mxu0 0
        %1892 = vmatpush1.bf16.xpose.msra.mxu0 0
        %1893 = vmatprep.subr.bf16.mxu0 0
        %1894 = vmatpush1.bf16.xpose.msra.mxu0 0
        %1895 = vmatprep.subr.bf16.mxu0 0
        %1896 = vmatpush1.bf16.xpose.msra.mxu0 0
        %1897 = vmatprep.subr.bf16.mxu0 0
        %1898 = vmatpush1.bf16.xpose.msra.mxu0 0
        %1899 = vmatprep.subr.bf16.mxu0 0
        %1900 = vmatpush1.bf16.xpose.msra.mxu0 0
        %1901 = vmatprep.subr.bf16.mxu0 0
        %1902 = vmatpush1.bf16.xpose.msra.mxu0 0
        %1903 = vmatprep.subr.bf16.mxu0 0
        %1904 = vmatpush1.bf16.xpose.msra.mxu0 0
        %1905 = vmatprep.subr.bf16.mxu0 0
        %1906 = vmatpush1.bf16.xpose.msra.mxu0 0
        %1907 = vmatprep.subr.bf16.mxu0 0
        %1908 = vmatpush1.bf16.xpose.msra.mxu0 0
        %1909 = vmatprep.subr.bf16.mxu0 0
        %1910 = vmatpush1.bf16.xpose.msra.mxu0 0
        %1911 = vmatprep.subr.bf16.mxu0 0
        %1912 = vmatpush1.bf16.xpose.msra.mxu0 0
        %1913 = vmatprep.subr.bf16.mxu0 0
        %1914 = vmatpush1.bf16.xpose.msra.mxu0 0
        %1915 = vmatprep.subr.bf16.mxu0 0
        %1916 = vmatpush1.bf16.xpose.msra.mxu0 0
        %1917 = vmatprep.subr.bf16.mxu0 0
        %1918 = vmatpush1.bf16.xpose.msra.mxu0 0
        %1919 = vmatprep.mubr.bf16.mxu0 0
        %1920 = vmatmul.mubr.bf16.gmra.mrb[0].mxu0 %v1882
        %v1921 = vpop.f32.mrb[0].mxu0
        %v1922 = vadd.f32 0.0, %v1921
        %v1923 = vpop.f32.mrb[0].mxu0
        %v1924 = vpop.f32.mrb[0].mxu0
        %v1925 = vadd.f32 0.0, %v1924
        %v1926 = vpop.f32.mrb[0].mxu0
        %1927 = vdwg.mxu0
        %1929 = vrot.lane.b32.xlu0 %v880, 120
        %v1930 = vpop.permute.xlu0 %1929
        %1932 = vrot.lane.b32.xlu0 %v888, 120
        %v1933 = vpop.permute.xlu0 %1932
        %v1935 = vsel %vm899, %v1930, 0
        %v1938 = vsel %vm899, %v1933, 0
        %1940 = vmatprep.subr.bf16.mxu0 0
        %1941 = vmatpush1.bf16.xpose.msra.mxu0 %v1938
        %1942 = vmatprep.subr.bf16.mxu0 0
        %1943 = vmatpush1.bf16.xpose.msra.mxu0 0
        %1944 = vmatprep.subr.bf16.mxu0 0
        %1945 = vmatpush1.bf16.xpose.msra.mxu0 0
        %1946 = vmatprep.subr.bf16.mxu0 0
        %1947 = vmatpush1.bf16.xpose.msra.mxu0 0
        %1948 = vmatprep.subr.bf16.mxu0 0
        %1949 = vmatpush1.bf16.xpose.msra.mxu0 0
        %1950 = vmatprep.subr.bf16.mxu0 0
        %1951 = vmatpush1.bf16.xpose.msra.mxu0 0
        %1952 = vmatprep.subr.bf16.mxu0 0
        %1953 = vmatpush1.bf16.xpose.msra.mxu0 0
        %1954 = vmatprep.subr.bf16.mxu0 0
        %1955 = vmatpush1.bf16.xpose.msra.mxu0 0
        %1956 = vmatprep.subr.bf16.mxu0 0
        %1957 = vmatpush1.bf16.xpose.msra.mxu0 0
        %1958 = vmatprep.subr.bf16.mxu0 0
        %1959 = vmatpush1.bf16.xpose.msra.mxu0 0
        %1960 = vmatprep.subr.bf16.mxu0 0
        %1961 = vmatpush1.bf16.xpose.msra.mxu0 0
        %1962 = vmatprep.subr.bf16.mxu0 0
        %1963 = vmatpush1.bf16.xpose.msra.mxu0 0
        %1964 = vmatprep.subr.bf16.mxu0 0
        %1965 = vmatpush1.bf16.xpose.msra.mxu0 0
        %1966 = vmatprep.subr.bf16.mxu0 0
        %1967 = vmatpush1.bf16.xpose.msra.mxu0 0
        %1968 = vmatprep.subr.bf16.mxu0 0
        %1969 = vmatpush1.bf16.xpose.msra.mxu0 0
        %1970 = vmatprep.subr.bf16.mxu0 0
        %1971 = vmatpush1.bf16.xpose.msra.mxu0 0
        %1972 = vmatprep.mubr.bf16.mxu0 0
        %1973 = vmatmul.mubr.bf16.gmra.mrb[0].mxu0 %v1935
        %v1974 = vpop.f32.mrb[0].mxu0
        %v1975 = vadd.f32 0.0, %v1974
        %v1976 = vpop.f32.mrb[0].mxu0
        %v1977 = vpop.f32.mrb[0].mxu0
        %v1978 = vadd.f32 0.0, %v1977
        %v1979 = vpop.f32.mrb[0].mxu0
        %1980 = vdwg.mxu0
        %1982 = vrot.lane.b32.xlu0 %v881, 120
        %v1983 = vpop.permute.xlu0 %1982
        %1985 = vrot.lane.b32.xlu0 %v889, 120
        %v1986 = vpop.permute.xlu0 %1985
        %v1988 = vsel %vm899, %v1983, 0
        %v1991 = vsel %vm899, %v1986, 0
        %1993 = vmatprep.subr.bf16.mxu0 0
        %1994 = vmatpush1.bf16.xpose.msra.mxu0 %v1991
        %1995 = vmatprep.subr.bf16.mxu0 0
        %1996 = vmatpush1.bf16.xpose.msra.mxu0 0
        %1997 = vmatprep.subr.bf16.mxu0 0
        %1998 = vmatpush1.bf16.xpose.msra.mxu0 0
        %1999 = vmatprep.subr.bf16.mxu0 0
        %2000 = vmatpush1.bf16.xpose.msra.mxu0 0
        %2001 = vmatprep.subr.bf16.mxu0 0
        %2002 = vmatpush1.bf16.xpose.msra.mxu0 0
        %2003 = vmatprep.subr.bf16.mxu0 0
        %2004 = vmatpush1.bf16.xpose.msra.mxu0 0
        %2005 = vmatprep.subr.bf16.mxu0 0
        %2006 = vmatpush1.bf16.xpose.msra.mxu0 0
        %2007 = vmatprep.subr.bf16.mxu0 0
        %2008 = vmatpush1.bf16.xpose.msra.mxu0 0
        %2009 = vmatprep.subr.bf16.mxu0 0
        %2010 = vmatpush1.bf16.xpose.msra.mxu0 0
        %2011 = vmatprep.subr.bf16.mxu0 0
        %2012 = vmatpush1.bf16.xpose.msra.mxu0 0
        %2013 = vmatprep.subr.bf16.mxu0 0
        %2014 = vmatpush1.bf16.xpose.msra.mxu0 0
        %2015 = vmatprep.subr.bf16.mxu0 0
        %2016 = vmatpush1.bf16.xpose.msra.mxu0 0
        %2017 = vmatprep.subr.bf16.mxu0 0
        %2018 = vmatpush1.bf16.xpose.msra.mxu0 0
        %2019 = vmatprep.subr.bf16.mxu0 0
        %2020 = vmatpush1.bf16.xpose.msra.mxu0 0
        %2021 = vmatprep.subr.bf16.mxu0 0
        %2022 = vmatpush1.bf16.xpose.msra.mxu0 0
        %2023 = vmatprep.subr.bf16.mxu0 0
        %2024 = vmatpush1.bf16.xpose.msra.mxu0 0
        %2025 = vmatprep.mubr.bf16.mxu0 0
        %2026 = vmatmul.mubr.bf16.gmra.mrb[0].mxu0 %v1988
        %v2027 = vpop.f32.mrb[0].mxu0
        %v2028 = vadd.f32 0.0, %v2027
        %v2029 = vpop.f32.mrb[0].mxu0
        %v2030 = vpop.f32.mrb[0].mxu0
        %v2031 = vadd.f32 0.0, %v2030
        %v2032 = vpop.f32.mrb[0].mxu0
        %2033 = vdwg.mxu0
        %2035 = vrot.lane.b32.xlu0 %v882, 120
        %v2036 = vpop.permute.xlu0 %2035
        %2038 = vrot.lane.b32.xlu0 %v890, 120
        %v2039 = vpop.permute.xlu0 %2038
        %v2041 = vsel %vm899, %v2036, 0
        %v2044 = vsel %vm899, %v2039, 0
        %2046 = vmatprep.subr.bf16.mxu0 0
        %2047 = vmatpush1.bf16.xpose.msra.mxu0 %v2044
        %2048 = vmatprep.subr.bf16.mxu0 0
        %2049 = vmatpush1.bf16.xpose.msra.mxu0 0
        %2050 = vmatprep.subr.bf16.mxu0 0
        %2051 = vmatpush1.bf16.xpose.msra.mxu0 0
        %2052 = vmatprep.subr.bf16.mxu0 0
        %2053 = vmatpush1.bf16.xpose.msra.mxu0 0
        %2054 = vmatprep.subr.bf16.mxu0 0
        %2055 = vmatpush1.bf16.xpose.msra.mxu0 0
        %2056 = vmatprep.subr.bf16.mxu0 0
        %2057 = vmatpush1.bf16.xpose.msra.mxu0 0
        %2058 = vmatprep.subr.bf16.mxu0 0
        %2059 = vmatpush1.bf16.xpose.msra.mxu0 0
        %2060 = vmatprep.subr.bf16.mxu0 0
        %2061 = vmatpush1.bf16.xpose.msra.mxu0 0
        %2062 = vmatprep.subr.bf16.mxu0 0
        %2063 = vmatpush1.bf16.xpose.msra.mxu0 0
        %2064 = vmatprep.subr.bf16.mxu0 0
        %2065 = vmatpush1.bf16.xpose.msra.mxu0 0
        %2066 = vmatprep.subr.bf16.mxu0 0
        %2067 = vmatpush1.bf16.xpose.msra.mxu0 0
        %2068 = vmatprep.subr.bf16.mxu0 0
        %2069 = vmatpush1.bf16.xpose.msra.mxu0 0
        %2070 = vmatprep.subr.bf16.mxu0 0
        %2071 = vmatpush1.bf16.xpose.msra.mxu0 0
        %2072 = vmatprep.subr.bf16.mxu0 0
        %2073 = vmatpush1.bf16.xpose.msra.mxu0 0
        %2074 = vmatprep.subr.bf16.mxu0 0
        %2075 = vmatpush1.bf16.xpose.msra.mxu0 0
        %2076 = vmatprep.subr.bf16.mxu0 0
        %2077 = vmatpush1.bf16.xpose.msra.mxu0 0
        %2078 = vmatprep.mubr.bf16.mxu0 0
        %2079 = vmatmul.mubr.bf16.gmra.mrb[0].mxu0 %v2041
        %v2080 = vpop.f32.mrb[0].mxu0
        %v2081 = vadd.f32 0.0, %v2080
        %v2082 = vpop.f32.mrb[0].mxu0
        %v2083 = vpop.f32.mrb[0].mxu0
        %v2084 = vadd.f32 0.0, %v2083
        %v2085 = vpop.f32.mrb[0].mxu0
        %2086 = vdwg.mxu0
        %v2087 = vsel %vm1276, %v1710, 0.0
        %v2088 = vsel %vm1276, %v1763, 0.0
        %v2089 = vadd.f32 %v2087, %v2088
        %v2090 = vsel %vm1276, %v1816, 0.0
        %v2091 = vadd.f32 %v2089, %v2090
        %v2092 = vsel %vm1276, %v1869, 0.0
        %v2093 = vadd.f32 %v2091, %v2092
        %v2094 = vsel %vm1276, %v1922, 0.0
        %v2095 = vadd.f32 %v2093, %v2094
        %v2096 = vsel %vm1276, %v1975, 0.0
        %v2097 = vadd.f32 %v2095, %v2096
        %v2098 = vsel %vm1276, %v2028, 0.0
        %v2099 = vadd.f32 %v2097, %v2098
        %v2100 = vsel %vm1276, %v2081, 0.0
        %v2101 = vadd.f32 %v2099, %v2100
        %v2102 = vsel %vm1276, %v1713, 0.0
        %v2103 = vsel %vm1276, %v1766, 0.0
        %v2104 = vadd.f32 %v2102, %v2103
        %v2105 = vsel %vm1276, %v1819, 0.0
        %v2106 = vadd.f32 %v2104, %v2105
        %v2107 = vsel %vm1276, %v1872, 0.0
        %v2108 = vadd.f32 %v2106, %v2107
        %v2109 = vsel %vm1276, %v1925, 0.0
        %v2110 = vadd.f32 %v2108, %v2109
        %v2111 = vsel %vm1276, %v1978, 0.0
        %v2112 = vadd.f32 %v2110, %v2111
        %v2113 = vsel %vm1276, %v2031, 0.0
        %v2114 = vadd.f32 %v2112, %v2113
        %v2115 = vsel %vm1276, %v2084, 0.0
        %v2116 = vadd.f32 %v2114, %v2115
        %v2117 = vsel %vm1276, %v2101, -inf
        %2118 = vmax.xlane.f32.xlu0 %v2117
        %v2119 = vpop.xlane.xlu0 %2118
        %v2120 = vsel %vm1276, %v2116, -inf
        %2121 = vmax.xlane.f32.xlu0 %v2120
        %v2122 = vpop.xlane.xlu0 %2121
        %v2123 = vsub.f32 %v2101, %v2119
        %v2124 = vsub.f32 %v2116, %v2122
        %v2125 = vmul.f32 %v2123, 1.442695
        %v2126 = vpow.pop %v2125
        %v2127 = vmul.f32 %v2124, 1.442695
        %v2128 = vpow.pop %v2127
        %v2129 = vsel %vm1276, %v2126, 0.0
        %2130 = vadd.xlane.f32.xlu0 %v2129
        %v2131 = vpop.xlane.xlu0 %2130
        %v2132 = vsel %vm1276, %v2128, 0.0
        %2133 = vadd.xlane.f32.xlu0 %v2132
        %v2134 = vpop.xlane.xlu0 %2133
        %v2135 = vrcp.pop %v2131
        %v2136 = vrcp.pop %v2134
        %v2137 = vmul.f32 %v2126, %v2135
        %v2138 = vmul.f32 %v2128, %v2136
        %s2139 = scalar_lea.vmem %s432, 16 [#allocation11]
        %2140 = vst.msk [vmem:[%s2139] sm:$0xff] %vm1276, %v2137
        %2141 = vst.msk [vmem:[%s2139 + $0x8] sm:$0xff] %vm1276, %v2138
        %v2142 = vpack.c.bf16 %v2138, %v2137
        %2144 = vrot.lane.b32.xlu0 %v891, 120
        %v2145 = vpop.permute.xlu0 %2144
        %v2148 = vsel %vm1276, %v2142, 0
        %2150 = vmatprep.subr.bf16.mxu0 0
        %2151 = vmatpush1.bf16.msra.mxu0 %v2145
        %2152 = vmatprep.subr.bf16.mxu0 0
        %2153 = vmatpush1.bf16.msra.mxu0 0
        %2154 = vmatprep.subr.bf16.mxu0 0
        %2155 = vmatpush1.bf16.msra.mxu0 0
        %2156 = vmatprep.subr.bf16.mxu0 0
        %2157 = vmatpush1.bf16.msra.mxu0 0
        %2158 = vmatprep.subr.bf16.mxu0 0
        %2159 = vmatpush1.bf16.msra.mxu0 0
        %2160 = vmatprep.subr.bf16.mxu0 0
        %2161 = vmatpush1.bf16.msra.mxu0 0
        %2162 = vmatprep.subr.bf16.mxu0 0
        %2163 = vmatpush1.bf16.msra.mxu0 0
        %2164 = vmatprep.subr.bf16.mxu0 0
        %2165 = vmatpush1.bf16.msra.mxu0 0
        %2166 = vmatprep.subr.bf16.mxu0 0
        %2167 = vmatpush1.bf16.msra.mxu0 0
        %2168 = vmatprep.subr.bf16.mxu0 0
        %2169 = vmatpush1.bf16.msra.mxu0 0
        %2170 = vmatprep.subr.bf16.mxu0 0
        %2171 = vmatpush1.bf16.msra.mxu0 0
        %2172 = vmatprep.subr.bf16.mxu0 0
        %2173 = vmatpush1.bf16.msra.mxu0 0
        %2174 = vmatprep.subr.bf16.mxu0 0
        %2175 = vmatpush1.bf16.msra.mxu0 0
        %2176 = vmatprep.subr.bf16.mxu0 0
        %2177 = vmatpush1.bf16.msra.mxu0 0
        %2178 = vmatprep.subr.bf16.mxu0 0
        %2179 = vmatpush1.bf16.msra.mxu0 0
        %2180 = vmatprep.subr.bf16.mxu0 0
        %2181 = vmatpush1.bf16.msra.mxu0 0
        %2182 = vmatprep.mubr.bf16.mxu0 0
        %2183 = vmatmul.mubr.bf16.gmra.mrb[0].mxu0 %v2148
        %v2184 = vpop.f32.mrb[0].mxu0
        %v2185 = vadd.f32 0.0, %v2184
        %v2186 = vpop.f32.mrb[0].mxu0
        %v2187 = vpop.f32.mrb[0].mxu0
        %v2188 = vadd.f32 0.0, %v2187
        %v2189 = vpop.f32.mrb[0].mxu0
        %2190 = vdwg.mxu0
        %2192 = vrot.lane.b32.xlu0 %v892, 120
        %v2193 = vpop.permute.xlu0 %2192
        %2195 = vmatprep.subr.bf16.mxu0 0
        %2196 = vmatpush1.bf16.msra.mxu0 %v2193
        %2197 = vmatprep.subr.bf16.mxu0 0
        %2198 = vmatpush1.bf16.msra.mxu0 0
        %2199 = vmatprep.subr.bf16.mxu0 0
        %2200 = vmatpush1.bf16.msra.mxu0 0
        %2201 = vmatprep.subr.bf16.mxu0 0
        %2202 = vmatpush1.bf16.msra.mxu0 0
        %2203 = vmatprep.subr.bf16.mxu0 0
        %2204 = vmatpush1.bf16.msra.mxu0 0
        %2205 = vmatprep.subr.bf16.mxu0 0
        %2206 = vmatpush1.bf16.msra.mxu0 0
        %2207 = vmatprep.subr.bf16.mxu0 0
        %2208 = vmatpush1.bf16.msra.mxu0 0
        %2209 = vmatprep.subr.bf16.mxu0 0
        %2210 = vmatpush1.bf16.msra.mxu0 0
        %2211 = vmatprep.subr.bf16.mxu0 0
        %2212 = vmatpush1.bf16.msra.mxu0 0
        %2213 = vmatprep.subr.bf16.mxu0 0
        %2214 = vmatpush1.bf16.msra.mxu0 0
        %2215 = vmatprep.subr.bf16.mxu0 0
        %2216 = vmatpush1.bf16.msra.mxu0 0
        %2217 = vmatprep.subr.bf16.mxu0 0
        %2218 = vmatpush1.bf16.msra.mxu0 0
        %2219 = vmatprep.subr.bf16.mxu0 0
        %2220 = vmatpush1.bf16.msra.mxu0 0
        %2221 = vmatprep.subr.bf16.mxu0 0
        %2222 = vmatpush1.bf16.msra.mxu0 0
        %2223 = vmatprep.subr.bf16.mxu0 0
        %2224 = vmatpush1.bf16.msra.mxu0 0
        %2225 = vmatprep.subr.bf16.mxu0 0
        %2226 = vmatpush1.bf16.msra.mxu0 0
        %2227 = vmatprep.mubr.bf16.mxu0 0
        %2228 = vmatmul.mubr.bf16.gmra.mrb[0].mxu0 %v2148
        %v2229 = vpop.f32.mrb[0].mxu0
        %v2230 = vadd.f32 0.0, %v2229
        %v2231 = vpop.f32.mrb[0].mxu0
        %v2232 = vpop.f32.mrb[0].mxu0
        %v2233 = vadd.f32 0.0, %v2232
        %v2234 = vpop.f32.mrb[0].mxu0
        %2235 = vdwg.mxu0
        %2237 = vrot.lane.b32.xlu0 %v893, 120
        %v2238 = vpop.permute.xlu0 %2237
        %2240 = vmatprep.subr.bf16.mxu0 0
        %2241 = vmatpush1.bf16.msra.mxu0 %v2238
        %2242 = vmatprep.subr.bf16.mxu0 0
        %2243 = vmatpush1.bf16.msra.mxu0 0
        %2244 = vmatprep.subr.bf16.mxu0 0
        %2245 = vmatpush1.bf16.msra.mxu0 0
        %2246 = vmatprep.subr.bf16.mxu0 0
        %2247 = vmatpush1.bf16.msra.mxu0 0
        %2248 = vmatprep.subr.bf16.mxu0 0
        %2249 = vmatpush1.bf16.msra.mxu0 0
        %2250 = vmatprep.subr.bf16.mxu0 0
        %2251 = vmatpush1.bf16.msra.mxu0 0
        %2252 = vmatprep.subr.bf16.mxu0 0
        %2253 = vmatpush1.bf16.msra.mxu0 0
        %2254 = vmatprep.subr.bf16.mxu0 0
        %2255 = vmatpush1.bf16.msra.mxu0 0
        %2256 = vmatprep.subr.bf16.mxu0 0
        %2257 = vmatpush1.bf16.msra.mxu0 0
        %2258 = vmatprep.subr.bf16.mxu0 0
        %2259 = vmatpush1.bf16.msra.mxu0 0
        %2260 = vmatprep.subr.bf16.mxu0 0
        %2261 = vmatpush1.bf16.msra.mxu0 0
        %2262 = vmatprep.subr.bf16.mxu0 0
        %2263 = vmatpush1.bf16.msra.mxu0 0
        %2264 = vmatprep.subr.bf16.mxu0 0
        %2265 = vmatpush1.bf16.msra.mxu0 0
        %2266 = vmatprep.subr.bf16.mxu0 0
        %2267 = vmatpush1.bf16.msra.mxu0 0
        %2268 = vmatprep.subr.bf16.mxu0 0
        %2269 = vmatpush1.bf16.msra.mxu0 0
        %2270 = vmatprep.subr.bf16.mxu0 0
        %2271 = vmatpush1.bf16.msra.mxu0 0
        %2272 = vmatprep.mubr.bf16.mxu0 0
        %2273 = vmatmul.mubr.bf16.gmra.mrb[0].mxu0 %v2148
        %v2274 = vpop.f32.mrb[0].mxu0
        %v2275 = vadd.f32 0.0, %v2274
        %v2276 = vpop.f32.mrb[0].mxu0
        %v2277 = vpop.f32.mrb[0].mxu0
        %v2278 = vadd.f32 0.0, %v2277
        %v2279 = vpop.f32.mrb[0].mxu0
        %2280 = vdwg.mxu0
        %2282 = vrot.lane.b32.xlu0 %v894, 120
        %v2283 = vpop.permute.xlu0 %2282
        %2285 = vmatprep.subr.bf16.mxu0 0
        %2286 = vmatpush1.bf16.msra.mxu0 %v2283
        %2287 = vmatprep.subr.bf16.mxu0 0
        %2288 = vmatpush1.bf16.msra.mxu0 0
        %2289 = vmatprep.subr.bf16.mxu0 0
        %2290 = vmatpush1.bf16.msra.mxu0 0
        %2291 = vmatprep.subr.bf16.mxu0 0
        %2292 = vmatpush1.bf16.msra.mxu0 0
        %2293 = vmatprep.subr.bf16.mxu0 0
        %2294 = vmatpush1.bf16.msra.mxu0 0
        %2295 = vmatprep.subr.bf16.mxu0 0
        %2296 = vmatpush1.bf16.msra.mxu0 0
        %2297 = vmatprep.subr.bf16.mxu0 0
        %2298 = vmatpush1.bf16.msra.mxu0 0
        %2299 = vmatprep.subr.bf16.mxu0 0
        %2300 = vmatpush1.bf16.msra.mxu0 0
        %2301 = vmatprep.subr.bf16.mxu0 0
        %2302 = vmatpush1.bf16.msra.mxu0 0
        %2303 = vmatprep.subr.bf16.mxu0 0
        %2304 = vmatpush1.bf16.msra.mxu0 0
        %2305 = vmatprep.subr.bf16.mxu0 0
        %2306 = vmatpush1.bf16.msra.mxu0 0
        %2307 = vmatprep.subr.bf16.mxu0 0
        %2308 = vmatpush1.bf16.msra.mxu0 0
        %2309 = vmatprep.subr.bf16.mxu0 0
        %2310 = vmatpush1.bf16.msra.mxu0 0
        %2311 = vmatprep.subr.bf16.mxu0 0
        %2312 = vmatpush1.bf16.msra.mxu0 0
        %2313 = vmatprep.subr.bf16.mxu0 0
        %2314 = vmatpush1.bf16.msra.mxu0 0
        %2315 = vmatprep.subr.bf16.mxu0 0
        %2316 = vmatpush1.bf16.msra.mxu0 0
        %2317 = vmatprep.mubr.bf16.mxu0 0
        %2318 = vmatmul.mubr.bf16.gmra.mrb[0].mxu0 %v2148
        %v2319 = vpop.f32.mrb[0].mxu0
        %v2320 = vadd.f32 0.0, %v2319
        %v2321 = vpop.f32.mrb[0].mxu0
        %v2322 = vpop.f32.mrb[0].mxu0
        %v2323 = vadd.f32 0.0, %v2322
        %v2324 = vpop.f32.mrb[0].mxu0
        %2325 = vdwg.mxu0
        %2327 = vrot.lane.b32.xlu0 %v895, 120
        %v2328 = vpop.permute.xlu0 %2327
        %2330 = vmatprep.subr.bf16.mxu0 0
        %2331 = vmatpush1.bf16.msra.mxu0 %v2328
        %2332 = vmatprep.subr.bf16.mxu0 0
        %2333 = vmatpush1.bf16.msra.mxu0 0
        %2334 = vmatprep.subr.bf16.mxu0 0
        %2335 = vmatpush1.bf16.msra.mxu0 0
        %2336 = vmatprep.subr.bf16.mxu0 0
        %2337 = vmatpush1.bf16.msra.mxu0 0
        %2338 = vmatprep.subr.bf16.mxu0 0
        %2339 = vmatpush1.bf16.msra.mxu0 0
        %2340 = vmatprep.subr.bf16.mxu0 0
        %2341 = vmatpush1.bf16.msra.mxu0 0
        %2342 = vmatprep.subr.bf16.mxu0 0
        %2343 = vmatpush1.bf16.msra.mxu0 0
        %2344 = vmatprep.subr.bf16.mxu0 0
        %2345 = vmatpush1.bf16.msra.mxu0 0
        %2346 = vmatprep.subr.bf16.mxu0 0
        %2347 = vmatpush1.bf16.msra.mxu0 0
        %2348 = vmatprep.subr.bf16.mxu0 0
        %2349 = vmatpush1.bf16.msra.mxu0 0
        %2350 = vmatprep.subr.bf16.mxu0 0
        %2351 = vmatpush1.bf16.msra.mxu0 0
        %2352 = vmatprep.subr.bf16.mxu0 0
        %2353 = vmatpush1.bf16.msra.mxu0 0
        %2354 = vmatprep.subr.bf16.mxu0 0
        %2355 = vmatpush1.bf16.msra.mxu0 0
        %2356 = vmatprep.subr.bf16.mxu0 0
        %2357 = vmatpush1.bf16.msra.mxu0 0
        %2358 = vmatprep.subr.bf16.mxu0 0
        %2359 = vmatpush1.bf16.msra.mxu0 0
        %2360 = vmatprep.subr.bf16.mxu0 0
        %2361 = vmatpush1.bf16.msra.mxu0 0
        %2362 = vmatprep.mubr.bf16.mxu0 0
        %2363 = vmatmul.mubr.bf16.gmra.mrb[0].mxu0 %v2148
        %v2364 = vpop.f32.mrb[0].mxu0
        %v2365 = vadd.f32 0.0, %v2364
        %v2366 = vpop.f32.mrb[0].mxu0
        %v2367 = vpop.f32.mrb[0].mxu0
        %v2368 = vadd.f32 0.0, %v2367
        %v2369 = vpop.f32.mrb[0].mxu0
        %2370 = vdwg.mxu0
        %2372 = vrot.lane.b32.xlu0 %v896, 120
        %v2373 = vpop.permute.xlu0 %2372
        %2375 = vmatprep.subr.bf16.mxu0 0
        %2376 = vmatpush1.bf16.msra.mxu0 %v2373
        %2377 = vmatprep.subr.bf16.mxu0 0
        %2378 = vmatpush1.bf16.msra.mxu0 0
        %2379 = vmatprep.subr.bf16.mxu0 0
        %2380 = vmatpush1.bf16.msra.mxu0 0
        %2381 = vmatprep.subr.bf16.mxu0 0
        %2382 = vmatpush1.bf16.msra.mxu0 0
        %2383 = vmatprep.subr.bf16.mxu0 0
        %2384 = vmatpush1.bf16.msra.mxu0 0
        %2385 = vmatprep.subr.bf16.mxu0 0
        %2386 = vmatpush1.bf16.msra.mxu0 0
        %2387 = vmatprep.subr.bf16.mxu0 0
        %2388 = vmatpush1.bf16.msra.mxu0 0
        %2389 = vmatprep.subr.bf16.mxu0 0
        %2390 = vmatpush1.bf16.msra.mxu0 0
        %2391 = vmatprep.subr.bf16.mxu0 0
        %2392 = vmatpush1.bf16.msra.mxu0 0
        %2393 = vmatprep.subr.bf16.mxu0 0
        %2394 = vmatpush1.bf16.msra.mxu0 0
        %2395 = vmatprep.subr.bf16.mxu0 0
        %2396 = vmatpush1.bf16.msra.mxu0 0
        %2397 = vmatprep.subr.bf16.mxu0 0
        %2398 = vmatpush1.bf16.msra.mxu0 0
        %2399 = vmatprep.subr.bf16.mxu0 0
        %2400 = vmatpush1.bf16.msra.mxu0 0
        %2401 = vmatprep.subr.bf16.mxu0 0
        %2402 = vmatpush1.bf16.msra.mxu0 0
        %2403 = vmatprep.subr.bf16.mxu0 0
        %2404 = vmatpush1.bf16.msra.mxu0 0
        %2405 = vmatprep.subr.bf16.mxu0 0
        %2406 = vmatpush1.bf16.msra.mxu0 0
        %2407 = vmatprep.mubr.bf16.mxu0 0
        %2408 = vmatmul.mubr.bf16.gmra.mrb[0].mxu0 %v2148
        %v2409 = vpop.f32.mrb[0].mxu0
        %v2410 = vadd.f32 0.0, %v2409
        %v2411 = vpop.f32.mrb[0].mxu0
        %v2412 = vpop.f32.mrb[0].mxu0
        %v2413 = vadd.f32 0.0, %v2412
        %v2414 = vpop.f32.mrb[0].mxu0
        %2415 = vdwg.mxu0
        %2417 = vrot.lane.b32.xlu0 %v897, 120
        %v2418 = vpop.permute.xlu0 %2417
        %2420 = vmatprep.subr.bf16.mxu0 0
        %2421 = vmatpush1.bf16.msra.mxu0 %v2418
        %2422 = vmatprep.subr.bf16.mxu0 0
        %2423 = vmatpush1.bf16.msra.mxu0 0
        %2424 = vmatprep.subr.bf16.mxu0 0
        %2425 = vmatpush1.bf16.msra.mxu0 0
        %2426 = vmatprep.subr.bf16.mxu0 0
        %2427 = vmatpush1.bf16.msra.mxu0 0
        %2428 = vmatprep.subr.bf16.mxu0 0
        %2429 = vmatpush1.bf16.msra.mxu0 0
        %2430 = vmatprep.subr.bf16.mxu0 0
        %2431 = vmatpush1.bf16.msra.mxu0 0
        %2432 = vmatprep.subr.bf16.mxu0 0
        %2433 = vmatpush1.bf16.msra.mxu0 0
        %2434 = vmatprep.subr.bf16.mxu0 0
        %2435 = vmatpush1.bf16.msra.mxu0 0
        %2436 = vmatprep.subr.bf16.mxu0 0
        %2437 = vmatpush1.bf16.msra.mxu0 0
        %2438 = vmatprep.subr.bf16.mxu0 0
        %2439 = vmatpush1.bf16.msra.mxu0 0
        %2440 = vmatprep.subr.bf16.mxu0 0
        %2441 = vmatpush1.bf16.msra.mxu0 0
        %2442 = vmatprep.subr.bf16.mxu0 0
        %2443 = vmatpush1.bf16.msra.mxu0 0
        %2444 = vmatprep.subr.bf16.mxu0 0
        %2445 = vmatpush1.bf16.msra.mxu0 0
        %2446 = vmatprep.subr.bf16.mxu0 0
        %2447 = vmatpush1.bf16.msra.mxu0 0
        %2448 = vmatprep.subr.bf16.mxu0 0
        %2449 = vmatpush1.bf16.msra.mxu0 0
        %2450 = vmatprep.subr.bf16.mxu0 0
        %2451 = vmatpush1.bf16.msra.mxu0 0
        %2452 = vmatprep.mubr.bf16.mxu0 0
        %2453 = vmatmul.mubr.bf16.gmra.mrb[0].mxu0 %v2148
        %v2454 = vpop.f32.mrb[0].mxu0
        %v2455 = vadd.f32 0.0, %v2454
        %v2456 = vpop.f32.mrb[0].mxu0
        %v2457 = vpop.f32.mrb[0].mxu0
        %v2458 = vadd.f32 0.0, %v2457
        %v2459 = vpop.f32.mrb[0].mxu0
        %2460 = vdwg.mxu0
        %2462 = vrot.lane.b32.xlu0 %v898, 120
        %v2463 = vpop.permute.xlu0 %2462
        %2465 = vmatprep.subr.bf16.mxu0 0
        %2466 = vmatpush1.bf16.msra.mxu0 %v2463
        %2467 = vmatprep.subr.bf16.mxu0 0
        %2468 = vmatpush1.bf16.msra.mxu0 0
        %2469 = vmatprep.subr.bf16.mxu0 0
        %2470 = vmatpush1.bf16.msra.mxu0 0
        %2471 = vmatprep.subr.bf16.mxu0 0
        %2472 = vmatpush1.bf16.msra.mxu0 0
        %2473 = vmatprep.subr.bf16.mxu0 0
        %2474 = vmatpush1.bf16.msra.mxu0 0
        %2475 = vmatprep.subr.bf16.mxu0 0
        %2476 = vmatpush1.bf16.msra.mxu0 0
        %2477 = vmatprep.subr.bf16.mxu0 0
        %2478 = vmatpush1.bf16.msra.mxu0 0
        %2479 = vmatprep.subr.bf16.mxu0 0
        %2480 = vmatpush1.bf16.msra.mxu0 0
        %2481 = vmatprep.subr.bf16.mxu0 0
        %2482 = vmatpush1.bf16.msra.mxu0 0
        %2483 = vmatprep.subr.bf16.mxu0 0
        %2484 = vmatpush1.bf16.msra.mxu0 0
        %2485 = vmatprep.subr.bf16.mxu0 0
        %2486 = vmatpush1.bf16.msra.mxu0 0
        %2487 = vmatprep.subr.bf16.mxu0 0
        %2488 = vmatpush1.bf16.msra.mxu0 0
        %2489 = vmatprep.subr.bf16.mxu0 0
        %2490 = vmatpush1.bf16.msra.mxu0 0
        %2491 = vmatprep.subr.bf16.mxu0 0
        %2492 = vmatpush1.bf16.msra.mxu0 0
        %2493 = vmatprep.subr.bf16.mxu0 0
        %2494 = vmatpush1.bf16.msra.mxu0 0
        %2495 = vmatprep.subr.bf16.mxu0 0
        %2496 = vmatpush1.bf16.msra.mxu0 0
        %2497 = vmatprep.mubr.bf16.mxu0 0
        %2498 = vmatmul.mubr.bf16.gmra.mrb[0].mxu0 %v2148
        %v2499 = vpop.f32.mrb[0].mxu0
        %v2500 = vadd.f32 0.0, %v2499
        %v2501 = vpop.f32.mrb[0].mxu0
        %v2502 = vpop.f32.mrb[0].mxu0
        %v2503 = vadd.f32 0.0, %v2502
        %v2504 = vpop.f32.mrb[0].mxu0
        %2505 = vdwg.mxu0
        %2506 = vrot.lane.b32.xlu0 %v875, 112
        %v2507 = vpop.permute.xlu0 %2506
        %2508 = vrot.lane.b32.xlu0 %v883, 112
        %v2509 = vpop.permute.xlu0 %2508
        %v2511 = vsel %vm899, %v2507, 0
        %v2514 = vsel %vm899, %v2509, 0
        %2516 = vmatprep.subr.bf16.mxu0 0
        %2517 = vmatpush1.bf16.xpose.msra.mxu0 %v2514
        %2518 = vmatprep.subr.bf16.mxu0 0
        %2519 = vmatpush1.bf16.xpose.msra.mxu0 0
        %2520 = vmatprep.subr.bf16.mxu0 0
        %2521 = vmatpush1.bf16.xpose.msra.mxu0 0
        %2522 = vmatprep.subr.bf16.mxu0 0
        %2523 = vmatpush1.bf16.xpose.msra.mxu0 0
        %2524 = vmatprep.subr.bf16.mxu0 0
        %2525 = vmatpush1.bf16.xpose.msra.mxu0 0
        %2526 = vmatprep.subr.bf16.mxu0 0
        %2527 = vmatpush1.bf16.xpose.msra.mxu0 0
        %2528 = vmatprep.subr.bf16.mxu0 0
        %2529 = vmatpush1.bf16.xpose.msra.mxu0 0
        %2530 = vmatprep.subr.bf16.mxu0 0
        %2531 = vmatpush1.bf16.xpose.msra.mxu0 0
        %2532 = vmatprep.subr.bf16.mxu0 0
        %2533 = vmatpush1.bf16.xpose.msra.mxu0 0
        %2534 = vmatprep.subr.bf16.mxu0 0
        %2535 = vmatpush1.bf16.xpose.msra.mxu0 0
        %2536 = vmatprep.subr.bf16.mxu0 0
        %2537 = vmatpush1.bf16.xpose.msra.mxu0 0
        %2538 = vmatprep.subr.bf16.mxu0 0
        %2539 = vmatpush1.bf16.xpose.msra.mxu0 0
        %2540 = vmatprep.subr.bf16.mxu0 0
        %2541 = vmatpush1.bf16.xpose.msra.mxu0 0
        %2542 = vmatprep.subr.bf16.mxu0 0
        %2543 = vmatpush1.bf16.xpose.msra.mxu0 0
        %2544 = vmatprep.subr.bf16.mxu0 0
        %2545 = vmatpush1.bf16.xpose.msra.mxu0 0
        %2546 = vmatprep.subr.bf16.mxu0 0
        %2547 = vmatpush1.bf16.xpose.msra.mxu0 0
        %2548 = vmatprep.mubr.bf16.mxu0 0
        %2549 = vmatmul.mubr.bf16.gmra.mrb[0].mxu0 %v2511
        %v2550 = vpop.f32.mrb[0].mxu0
        %v2551 = vadd.f32 0.0, %v2550
        %v2552 = vpop.f32.mrb[0].mxu0
        %v2553 = vpop.f32.mrb[0].mxu0
        %v2554 = vadd.f32 0.0, %v2553
        %v2555 = vpop.f32.mrb[0].mxu0
        %2556 = vdwg.mxu0
        %2557 = vrot.lane.b32.xlu0 %v876, 112
        %v2558 = vpop.permute.xlu0 %2557
        %2559 = vrot.lane.b32.xlu0 %v884, 112
        %v2560 = vpop.permute.xlu0 %2559
        %v2562 = vsel %vm899, %v2558, 0
        %v2565 = vsel %vm899, %v2560, 0
        %2567 = vmatprep.subr.bf16.mxu0 0
        %2568 = vmatpush1.bf16.xpose.msra.mxu0 %v2565
        %2569 = vmatprep.subr.bf16.mxu0 0
        %2570 = vmatpush1.bf16.xpose.msra.mxu0 0
        %2571 = vmatprep.subr.bf16.mxu0 0
        %2572 = vmatpush1.bf16.xpose.msra.mxu0 0
        %2573 = vmatprep.subr.bf16.mxu0 0
        %2574 = vmatpush1.bf16.xpose.msra.mxu0 0
        %2575 = vmatprep.subr.bf16.mxu0 0
        %2576 = vmatpush1.bf16.xpose.msra.mxu0 0
        %2577 = vmatprep.subr.bf16.mxu0 0
        %2578 = vmatpush1.bf16.xpose.msra.mxu0 0
        %2579 = vmatprep.subr.bf16.mxu0 0
        %2580 = vmatpush1.bf16.xpose.msra.mxu0 0
        %2581 = vmatprep.subr.bf16.mxu0 0
        %2582 = vmatpush1.bf16.xpose.msra.mxu0 0
        %2583 = vmatprep.subr.bf16.mxu0 0
        %2584 = vmatpush1.bf16.xpose.msra.mxu0 0
        %2585 = vmatprep.subr.bf16.mxu0 0
        %2586 = vmatpush1.bf16.xpose.msra.mxu0 0
        %2587 = vmatprep.subr.bf16.mxu0 0
        %2588 = vmatpush1.bf16.xpose.msra.mxu0 0
        %2589 = vmatprep.subr.bf16.mxu0 0
        %2590 = vmatpush1.bf16.xpose.msra.mxu0 0
        %2591 = vmatprep.subr.bf16.mxu0 0
        %2592 = vmatpush1.bf16.xpose.msra.mxu0 0
        %2593 = vmatprep.subr.bf16.mxu0 0
        %2594 = vmatpush1.bf16.xpose.msra.mxu0 0
        %2595 = vmatprep.subr.bf16.mxu0 0
        %2596 = vmatpush1.bf16.xpose.msra.mxu0 0
        %2597 = vmatprep.subr.bf16.mxu0 0
        %2598 = vmatpush1.bf16.xpose.msra.mxu0 0
        %2599 = vmatprep.mubr.bf16.mxu0 0
        %2600 = vmatmul.mubr.bf16.gmra.mrb[0].mxu0 %v2562
        %v2601 = vpop.f32.mrb[0].mxu0
        %v2602 = vadd.f32 0.0, %v2601
        %v2603 = vpop.f32.mrb[0].mxu0
        %v2604 = vpop.f32.mrb[0].mxu0
        %v2605 = vadd.f32 0.0, %v2604
        %v2606 = vpop.f32.mrb[0].mxu0
        %2607 = vdwg.mxu0
        %2608 = vrot.lane.b32.xlu0 %v877, 112
        %v2609 = vpop.permute.xlu0 %2608
        %2610 = vrot.lane.b32.xlu0 %v885, 112
        %v2611 = vpop.permute.xlu0 %2610
        %v2613 = vsel %vm899, %v2609, 0
        %v2616 = vsel %vm899, %v2611, 0
        %2618 = vmatprep.subr.bf16.mxu0 0
        %2619 = vmatpush1.bf16.xpose.msra.mxu0 %v2616
        %2620 = vmatprep.subr.bf16.mxu0 0
        %2621 = vmatpush1.bf16.xpose.msra.mxu0 0
        %2622 = vmatprep.subr.bf16.mxu0 0
        %2623 = vmatpush1.bf16.xpose.msra.mxu0 0
        %2624 = vmatprep.subr.bf16.mxu0 0
        %2625 = vmatpush1.bf16.xpose.msra.mxu0 0
        %2626 = vmatprep.subr.bf16.mxu0 0
        %2627 = vmatpush1.bf16.xpose.msra.mxu0 0
        %2628 = vmatprep.subr.bf16.mxu0 0
        %2629 = vmatpush1.bf16.xpose.msra.mxu0 0
        %2630 = vmatprep.subr.bf16.mxu0 0
        %2631 = vmatpush1.bf16.xpose.msra.mxu0 0
        %2632 = vmatprep.subr.bf16.mxu0 0
        %2633 = vmatpush1.bf16.xpose.msra.mxu0 0
        %2634 = vmatprep.subr.bf16.mxu0 0
        %2635 = vmatpush1.bf16.xpose.msra.mxu0 0
        %2636 = vmatprep.subr.bf16.mxu0 0
        %2637 = vmatpush1.bf16.xpose.msra.mxu0 0
        %2638 = vmatprep.subr.bf16.mxu0 0
        %2639 = vmatpush1.bf16.xpose.msra.mxu0 0
        %2640 = vmatprep.subr.bf16.mxu0 0
        %2641 = vmatpush1.bf16.xpose.msra.mxu0 0
        %2642 = vmatprep.subr.bf16.mxu0 0
        %2643 = vmatpush1.bf16.xpose.msra.mxu0 0
        %2644 = vmatprep.subr.bf16.mxu0 0
        %2645 = vmatpush1.bf16.xpose.msra.mxu0 0
        %2646 = vmatprep.subr.bf16.mxu0 0
        %2647 = vmatpush1.bf16.xpose.msra.mxu0 0
        %2648 = vmatprep.subr.bf16.mxu0 0
        %2649 = vmatpush1.bf16.xpose.msra.mxu0 0
        %2650 = vmatprep.mubr.bf16.mxu0 0
        %2651 = vmatmul.mubr.bf16.gmra.mrb[0].mxu0 %v2613
        %v2652 = vpop.f32.mrb[0].mxu0
        %v2653 = vadd.f32 0.0, %v2652
        %v2654 = vpop.f32.mrb[0].mxu0
        %v2655 = vpop.f32.mrb[0].mxu0
        %v2656 = vadd.f32 0.0, %v2655
        %v2657 = vpop.f32.mrb[0].mxu0
        %2658 = vdwg.mxu0
        %2659 = vrot.lane.b32.xlu0 %v878, 112
        %v2660 = vpop.permute.xlu0 %2659
        %2661 = vrot.lane.b32.xlu0 %v886, 112
        %v2662 = vpop.permute.xlu0 %2661
        %v2664 = vsel %vm899, %v2660, 0
        %v2667 = vsel %vm899, %v2662, 0
        %2669 = vmatprep.subr.bf16.mxu0 0
        %2670 = vmatpush1.bf16.xpose.msra.mxu0 %v2667
        %2671 = vmatprep.subr.bf16.mxu0 0
        %2672 = vmatpush1.bf16.xpose.msra.mxu0 0
        %2673 = vmatprep.subr.bf16.mxu0 0
        %2674 = vmatpush1.bf16.xpose.msra.mxu0 0
        %2675 = vmatprep.subr.bf16.mxu0 0
        %2676 = vmatpush1.bf16.xpose.msra.mxu0 0
        %2677 = vmatprep.subr.bf16.mxu0 0
        %2678 = vmatpush1.bf16.xpose.msra.mxu0 0
        %2679 = vmatprep.subr.bf16.mxu0 0
        %2680 = vmatpush1.bf16.xpose.msra.mxu0 0
        %2681 = vmatprep.subr.bf16.mxu0 0
        %2682 = vmatpush1.bf16.xpose.msra.mxu0 0
        %2683 = vmatprep.subr.bf16.mxu0 0
        %2684 = vmatpush1.bf16.xpose.msra.mxu0 0
        %2685 = vmatprep.subr.bf16.mxu0 0
        %2686 = vmatpush1.bf16.xpose.msra.mxu0 0
        %2687 = vmatprep.subr.bf16.mxu0 0
        %2688 = vmatpush1.bf16.xpose.msra.mxu0 0
        %2689 = vmatprep.subr.bf16.mxu0 0
        %2690 = vmatpush1.bf16.xpose.msra.mxu0 0
        %2691 = vmatprep.subr.bf16.mxu0 0
        %2692 = vmatpush1.bf16.xpose.msra.mxu0 0
        %2693 = vmatprep.subr.bf16.mxu0 0
        %2694 = vmatpush1.bf16.xpose.msra.mxu0 0
        %2695 = vmatprep.subr.bf16.mxu0 0
        %2696 = vmatpush1.bf16.xpose.msra.mxu0 0
        %2697 = vmatprep.subr.bf16.mxu0 0
        %2698 = vmatpush1.bf16.xpose.msra.mxu0 0
        %2699 = vmatprep.subr.bf16.mxu0 0
        %2700 = vmatpush1.bf16.xpose.msra.mxu0 0
        %2701 = vmatprep.mubr.bf16.mxu0 0
        %2702 = vmatmul.mubr.bf16.gmra.mrb[0].mxu0 %v2664
        %v2703 = vpop.f32.mrb[0].mxu0
        %v2704 = vadd.f32 0.0, %v2703
        %v2705 = vpop.f32.mrb[0].mxu0
        %v2706 = vpop.f32.mrb[0].mxu0
        %v2707 = vadd.f32 0.0, %v2706
        %v2708 = vpop.f32.mrb[0].mxu0
        %2709 = vdwg.mxu0
        %2710 = vrot.lane.b32.xlu0 %v879, 112
        %v2711 = vpop.permute.xlu0 %2710
        %2712 = vrot.lane.b32.xlu0 %v887, 112
        %v2713 = vpop.permute.xlu0 %2712
        %v2715 = vsel %vm899, %v2711, 0
        %v2718 = vsel %vm899, %v2713, 0
        %2720 = vmatprep.subr.bf16.mxu0 0
        %2721 = vmatpush1.bf16.xpose.msra.mxu0 %v2718
        %2722 = vmatprep.subr.bf16.mxu0 0
        %2723 = vmatpush1.bf16.xpose.msra.mxu0 0
        %2724 = vmatprep.subr.bf16.mxu0 0
        %2725 = vmatpush1.bf16.xpose.msra.mxu0 0
        %2726 = vmatprep.subr.bf16.mxu0 0
        %2727 = vmatpush1.bf16.xpose.msra.mxu0 0
        %2728 = vmatprep.subr.bf16.mxu0 0
        %2729 = vmatpush1.bf16.xpose.msra.mxu0 0
        %2730 = vmatprep.subr.bf16.mxu0 0
        %2731 = vmatpush1.bf16.xpose.msra.mxu0 0
        %2732 = vmatprep.subr.bf16.mxu0 0
        %2733 = vmatpush1.bf16.xpose.msra.mxu0 0
        %2734 = vmatprep.subr.bf16.mxu0 0
        %2735 = vmatpush1.bf16.xpose.msra.mxu0 0
        %2736 = vmatprep.subr.bf16.mxu0 0
        %2737 = vmatpush1.bf16.xpose.msra.mxu0 0
        %2738 = vmatprep.subr.bf16.mxu0 0
        %2739 = vmatpush1.bf16.xpose.msra.mxu0 0
        %2740 = vmatprep.subr.bf16.mxu0 0
        %2741 = vmatpush1.bf16.xpose.msra.mxu0 0
        %2742 = vmatprep.subr.bf16.mxu0 0
        %2743 = vmatpush1.bf16.xpose.msra.mxu0 0
        %2744 = vmatprep.subr.bf16.mxu0 0
        %2745 = vmatpush1.bf16.xpose.msra.mxu0 0
        %2746 = vmatprep.subr.bf16.mxu0 0
        %2747 = vmatpush1.bf16.xpose.msra.mxu0 0
        %2748 = vmatprep.subr.bf16.mxu0 0
        %2749 = vmatpush1.bf16.xpose.msra.mxu0 0
        %2750 = vmatprep.subr.bf16.mxu0 0
        %2751 = vmatpush1.bf16.xpose.msra.mxu0 0
        %2752 = vmatprep.mubr.bf16.mxu0 0
        %2753 = vmatmul.mubr.bf16.gmra.mrb[0].mxu0 %v2715
        %v2754 = vpop.f32.mrb[0].mxu0
        %v2755 = vadd.f32 0.0, %v2754
        %v2756 = vpop.f32.mrb[0].mxu0
        %v2757 = vpop.f32.mrb[0].mxu0
        %v2758 = vadd.f32 0.0, %v2757
        %v2759 = vpop.f32.mrb[0].mxu0
        %2760 = vdwg.mxu0
        %2761 = vrot.lane.b32.xlu0 %v880, 112
        %v2762 = vpop.permute.xlu0 %2761
        %2763 = vrot.lane.b32.xlu0 %v888, 112
        %v2764 = vpop.permute.xlu0 %2763
        %v2766 = vsel %vm899, %v2762, 0
        %v2769 = vsel %vm899, %v2764, 0
        %2771 = vmatprep.subr.bf16.mxu0 0
        %2772 = vmatpush1.bf16.xpose.msra.mxu0 %v2769
        %2773 = vmatprep.subr.bf16.mxu0 0
        %2774 = vmatpush1.bf16.xpose.msra.mxu0 0
        %2775 = vmatprep.subr.bf16.mxu0 0
        %2776 = vmatpush1.bf16.xpose.msra.mxu0 0
        %2777 = vmatprep.subr.bf16.mxu0 0
        %2778 = vmatpush1.bf16.xpose.msra.mxu0 0
        %2779 = vmatprep.subr.bf16.mxu0 0
        %2780 = vmatpush1.bf16.xpose.msra.mxu0 0
        %2781 = vmatprep.subr.bf16.mxu0 0
        %2782 = vmatpush1.bf16.xpose.msra.mxu0 0
        %2783 = vmatprep.subr.bf16.mxu0 0
        %2784 = vmatpush1.bf16.xpose.msra.mxu0 0
        %2785 = vmatprep.subr.bf16.mxu0 0
        %2786 = vmatpush1.bf16.xpose.msra.mxu0 0
        %2787 = vmatprep.subr.bf16.mxu0 0
        %2788 = vmatpush1.bf16.xpose.msra.mxu0 0
        %2789 = vmatprep.subr.bf16.mxu0 0
        %2790 = vmatpush1.bf16.xpose.msra.mxu0 0
        %2791 = vmatprep.subr.bf16.mxu0 0
        %2792 = vmatpush1.bf16.xpose.msra.mxu0 0
        %2793 = vmatprep.subr.bf16.mxu0 0
        %2794 = vmatpush1.bf16.xpose.msra.mxu0 0
        %2795 = vmatprep.subr.bf16.mxu0 0
        %2796 = vmatpush1.bf16.xpose.msra.mxu0 0
        %2797 = vmatprep.subr.bf16.mxu0 0
        %2798 = vmatpush1.bf16.xpose.msra.mxu0 0
        %2799 = vmatprep.subr.bf16.mxu0 0
        %2800 = vmatpush1.bf16.xpose.msra.mxu0 0
        %2801 = vmatprep.subr.bf16.mxu0 0
        %2802 = vmatpush1.bf16.xpose.msra.mxu0 0
        %2803 = vmatprep.mubr.bf16.mxu0 0
        %2804 = vmatmul.mubr.bf16.gmra.mrb[0].mxu0 %v2766
        %v2805 = vpop.f32.mrb[0].mxu0
        %v2806 = vadd.f32 0.0, %v2805
        %v2807 = vpop.f32.mrb[0].mxu0
        %v2808 = vpop.f32.mrb[0].mxu0
        %v2809 = vadd.f32 0.0, %v2808
        %v2810 = vpop.f32.mrb[0].mxu0
        %2811 = vdwg.mxu0
        %2812 = vrot.lane.b32.xlu0 %v881, 112
        %v2813 = vpop.permute.xlu0 %2812
        %2814 = vrot.lane.b32.xlu0 %v889, 112
        %v2815 = vpop.permute.xlu0 %2814
        %v2817 = vsel %vm899, %v2813, 0
        %v2820 = vsel %vm899, %v2815, 0
        %2822 = vmatprep.subr.bf16.mxu0 0
        %2823 = vmatpush1.bf16.xpose.msra.mxu0 %v2820
        %2824 = vmatprep.subr.bf16.mxu0 0
        %2825 = vmatpush1.bf16.xpose.msra.mxu0 0
        %2826 = vmatprep.subr.bf16.mxu0 0
        %2827 = vmatpush1.bf16.xpose.msra.mxu0 0
        %2828 = vmatprep.subr.bf16.mxu0 0
        %2829 = vmatpush1.bf16.xpose.msra.mxu0 0
        %2830 = vmatprep.subr.bf16.mxu0 0
        %2831 = vmatpush1.bf16.xpose.msra.mxu0 0
        %2832 = vmatprep.subr.bf16.mxu0 0
        %2833 = vmatpush1.bf16.xpose.msra.mxu0 0
        %2834 = vmatprep.subr.bf16.mxu0 0
        %2835 = vmatpush1.bf16.xpose.msra.mxu0 0
        %2836 = vmatprep.subr.bf16.mxu0 0
        %2837 = vmatpush1.bf16.xpose.msra.mxu0 0
        %2838 = vmatprep.subr.bf16.mxu0 0
        %2839 = vmatpush1.bf16.xpose.msra.mxu0 0
        %2840 = vmatprep.subr.bf16.mxu0 0
        %2841 = vmatpush1.bf16.xpose.msra.mxu0 0
        %2842 = vmatprep.subr.bf16.mxu0 0
        %2843 = vmatpush1.bf16.xpose.msra.mxu0 0
        %2844 = vmatprep.subr.bf16.mxu0 0
        %2845 = vmatpush1.bf16.xpose.msra.mxu0 0
        %2846 = vmatprep.subr.bf16.mxu0 0
        %2847 = vmatpush1.bf16.xpose.msra.mxu0 0
        %2848 = vmatprep.subr.bf16.mxu0 0
        %2849 = vmatpush1.bf16.xpose.msra.mxu0 0
        %2850 = vmatprep.subr.bf16.mxu0 0
        %2851 = vmatpush1.bf16.xpose.msra.mxu0 0
        %2852 = vmatprep.subr.bf16.mxu0 0
        %2853 = vmatpush1.bf16.xpose.msra.mxu0 0
        %2854 = vmatprep.mubr.bf16.mxu0 0
        %2855 = vmatmul.mubr.bf16.gmra.mrb[0].mxu0 %v2817
        %v2856 = vpop.f32.mrb[0].mxu0
        %v2857 = vadd.f32 0.0, %v2856
        %v2858 = vpop.f32.mrb[0].mxu0
        %v2859 = vpop.f32.mrb[0].mxu0
        %v2860 = vadd.f32 0.0, %v2859
        %v2861 = vpop.f32.mrb[0].mxu0
        %2862 = vdwg.mxu0
        %2863 = vrot.lane.b32.xlu0 %v882, 112
        %v2864 = vpop.permute.xlu0 %2863
        %2865 = vrot.lane.b32.xlu0 %v890, 112
        %v2866 = vpop.permute.xlu0 %2865
        %v2868 = vsel %vm899, %v2864, 0
        %v2871 = vsel %vm899, %v2866, 0
        %2873 = vmatprep.subr.bf16.mxu0 0
        %2874 = vmatpush1.bf16.xpose.msra.mxu0 %v2871
        %2875 = vmatprep.subr.bf16.mxu0 0
        %2876 = vmatpush1.bf16.xpose.msra.mxu0 0
        %2877 = vmatprep.subr.bf16.mxu0 0
        %2878 = vmatpush1.bf16.xpose.msra.mxu0 0
        %2879 = vmatprep.subr.bf16.mxu0 0
        %2880 = vmatpush1.bf16.xpose.msra.mxu0 0
        %2881 = vmatprep.subr.bf16.mxu0 0
        %2882 = vmatpush1.bf16.xpose.msra.mxu0 0
        %2883 = vmatprep.subr.bf16.mxu0 0
        %2884 = vmatpush1.bf16.xpose.msra.mxu0 0
        %2885 = vmatprep.subr.bf16.mxu0 0
        %2886 = vmatpush1.bf16.xpose.msra.mxu0 0
        %2887 = vmatprep.subr.bf16.mxu0 0
        %2888 = vmatpush1.bf16.xpose.msra.mxu0 0
        %2889 = vmatprep.subr.bf16.mxu0 0
        %2890 = vmatpush1.bf16.xpose.msra.mxu0 0
        %2891 = vmatprep.subr.bf16.mxu0 0
        %2892 = vmatpush1.bf16.xpose.msra.mxu0 0
        %2893 = vmatprep.subr.bf16.mxu0 0
        %2894 = vmatpush1.bf16.xpose.msra.mxu0 0
        %2895 = vmatprep.subr.bf16.mxu0 0
        %2896 = vmatpush1.bf16.xpose.msra.mxu0 0
        %2897 = vmatprep.subr.bf16.mxu0 0
        %2898 = vmatpush1.bf16.xpose.msra.mxu0 0
        %2899 = vmatprep.subr.bf16.mxu0 0
        %2900 = vmatpush1.bf16.xpose.msra.mxu0 0
        %2901 = vmatprep.subr.bf16.mxu0 0
        %2902 = vmatpush1.bf16.xpose.msra.mxu0 0
        %2903 = vmatprep.subr.bf16.mxu0 0
        %2904 = vmatpush1.bf16.xpose.msra.mxu0 0
        %2905 = vmatprep.mubr.bf16.mxu0 0
        %2906 = vmatmul.mubr.bf16.gmra.mrb[0].mxu0 %v2868
        %v2907 = vpop.f32.mrb[0].mxu0
        %v2908 = vadd.f32 0.0, %v2907
        %v2909 = vpop.f32.mrb[0].mxu0
        %v2910 = vpop.f32.mrb[0].mxu0
        %v2911 = vadd.f32 0.0, %v2910
        %v2912 = vpop.f32.mrb[0].mxu0
        %2913 = vdwg.mxu0
        %v2914 = vsel %vm1276, %v2551, 0.0
        %v2915 = vsel %vm1276, %v2602, 0.0
        %v2916 = vadd.f32 %v2914, %v2915
        %v2917 = vsel %vm1276, %v2653, 0.0
        %v2918 = vadd.f32 %v2916, %v2917
        %v2919 = vsel %vm1276, %v2704, 0.0
        %v2920 = vadd.f32 %v2918, %v2919
        %v2921 = vsel %vm1276, %v2755, 0.0
        %v2922 = vadd.f32 %v2920, %v2921
        %v2923 = vsel %vm1276, %v2806, 0.0
        %v2924 = vadd.f32 %v2922, %v2923
        %v2925 = vsel %vm1276, %v2857, 0.0
        %v2926 = vadd.f32 %v2924, %v2925
        %v2927 = vsel %vm1276, %v2908, 0.0
        %v2928 = vadd.f32 %v2926, %v2927
        %v2929 = vsel %vm1276, %v2554, 0.0
        %v2930 = vsel %vm1276, %v2605, 0.0
        %v2931 = vadd.f32 %v2929, %v2930
        %v2932 = vsel %vm1276, %v2656, 0.0
        %v2933 = vadd.f32 %v2931, %v2932
        %v2934 = vsel %vm1276, %v2707, 0.0
        %v2935 = vadd.f32 %v2933, %v2934
        %v2936 = vsel %vm1276, %v2758, 0.0
        %v2937 = vadd.f32 %v2935, %v2936
        %v2938 = vsel %vm1276, %v2809, 0.0
        %v2939 = vadd.f32 %v2937, %v2938
        %v2940 = vsel %vm1276, %v2860, 0.0
        %v2941 = vadd.f32 %v2939, %v2940
        %v2942 = vsel %vm1276, %v2911, 0.0
        %v2943 = vadd.f32 %v2941, %v2942
        %v2944 = vsel %vm1276, %v2928, -inf
        %2945 = vmax.xlane.f32.xlu0 %v2944
        %v2946 = vpop.xlane.xlu0 %2945
        %v2947 = vsel %vm1276, %v2943, -inf
        %2948 = vmax.xlane.f32.xlu0 %v2947
        %v2949 = vpop.xlane.xlu0 %2948
        %v2950 = vsub.f32 %v2928, %v2946
        %v2951 = vsub.f32 %v2943, %v2949
        %v2952 = vmul.f32 %v2950, 1.442695
        %v2953 = vpow.pop %v2952
        %v2954 = vmul.f32 %v2951, 1.442695
        %v2955 = vpow.pop %v2954
        %v2956 = vsel %vm1276, %v2953, 0.0
        %2957 = vadd.xlane.f32.xlu0 %v2956
        %v2958 = vpop.xlane.xlu0 %2957
        %v2959 = vsel %vm1276, %v2955, 0.0
        %2960 = vadd.xlane.f32.xlu0 %v2959
        %v2961 = vpop.xlane.xlu0 %2960
        %v2962 = vrcp.pop %v2958
        %v2963 = vrcp.pop %v2961
        %v2964 = vmul.f32 %v2953, %v2962
        %v2965 = vmul.f32 %v2955, %v2963
        %s2966 = scalar_lea.vmem %s432, 32 [#allocation11]
        %2967 = vst.msk [vmem:[%s2966] sm:$0xff] %vm1276, %v2964
        %2968 = vst.msk [vmem:[%s2966 + $0x8] sm:$0xff] %vm1276, %v2965
        %v2969 = vpack.c.bf16 %v2965, %v2964
        %2970 = vrot.lane.b32.xlu0 %v891, 112
        %v2971 = vpop.permute.xlu0 %2970
        %v2974 = vsel %vm1276, %v2969, 0
        %2976 = vmatprep.subr.bf16.mxu0 0
        %2977 = vmatpush1.bf16.msra.mxu0 %v2971
        %2978 = vmatprep.subr.bf16.mxu0 0
        %2979 = vmatpush1.bf16.msra.mxu0 0
        %2980 = vmatprep.subr.bf16.mxu0 0
        %2981 = vmatpush1.bf16.msra.mxu0 0
        %2982 = vmatprep.subr.bf16.mxu0 0
        %2983 = vmatpush1.bf16.msra.mxu0 0
        %2984 = vmatprep.subr.bf16.mxu0 0
        %2985 = vmatpush1.bf16.msra.mxu0 0
        %2986 = vmatprep.subr.bf16.mxu0 0
        %2987 = vmatpush1.bf16.msra.mxu0 0
        %2988 = vmatprep.subr.bf16.mxu0 0
        %2989 = vmatpush1.bf16.msra.mxu0 0
        %2990 = vmatprep.subr.bf16.mxu0 0
        %2991 = vmatpush1.bf16.msra.mxu0 0
        %2992 = vmatprep.subr.bf16.mxu0 0
        %2993 = vmatpush1.bf16.msra.mxu0 0
        %2994 = vmatprep.subr.bf16.mxu0 0
        %2995 = vmatpush1.bf16.msra.mxu0 0
        %2996 = vmatprep.subr.bf16.mxu0 0
        %2997 = vmatpush1.bf16.msra.mxu0 0
        %2998 = vmatprep.subr.bf16.mxu0 0
        %2999 = vmatpush1.bf16.msra.mxu0 0
        %3000 = vmatprep.subr.bf16.mxu0 0
        %3001 = vmatpush1.bf16.msra.mxu0 0
        %3002 = vmatprep.subr.bf16.mxu0 0
        %3003 = vmatpush1.bf16.msra.mxu0 0
        %3004 = vmatprep.subr.bf16.mxu0 0
        %3005 = vmatpush1.bf16.msra.mxu0 0
        %3006 = vmatprep.subr.bf16.mxu0 0
        %3007 = vmatpush1.bf16.msra.mxu0 0
        %3008 = vmatprep.mubr.bf16.mxu0 0
        %3009 = vmatmul.mubr.bf16.gmra.mrb[0].mxu0 %v2974
        %v3010 = vpop.f32.mrb[0].mxu0
        %v3011 = vadd.f32 0.0, %v3010
        %v3012 = vpop.f32.mrb[0].mxu0
        %v3013 = vpop.f32.mrb[0].mxu0
        %v3014 = vadd.f32 0.0, %v3013
        %v3015 = vpop.f32.mrb[0].mxu0
        %3016 = vdwg.mxu0
        %3017 = vrot.lane.b32.xlu0 %v892, 112
        %v3018 = vpop.permute.xlu0 %3017
        %3020 = vmatprep.subr.bf16.mxu0 0
        %3021 = vmatpush1.bf16.msra.mxu0 %v3018
        %3022 = vmatprep.subr.bf16.mxu0 0
        %3023 = vmatpush1.bf16.msra.mxu0 0
        %3024 = vmatprep.subr.bf16.mxu0 0
        %3025 = vmatpush1.bf16.msra.mxu0 0
        %3026 = vmatprep.subr.bf16.mxu0 0
        %3027 = vmatpush1.bf16.msra.mxu0 0
        %3028 = vmatprep.subr.bf16.mxu0 0
        %3029 = vmatpush1.bf16.msra.mxu0 0
        %3030 = vmatprep.subr.bf16.mxu0 0
        %3031 = vmatpush1.bf16.msra.mxu0 0
        %3032 = vmatprep.subr.bf16.mxu0 0
        %3033 = vmatpush1.bf16.msra.mxu0 0
        %3034 = vmatprep.subr.bf16.mxu0 0
        %3035 = vmatpush1.bf16.msra.mxu0 0
        %3036 = vmatprep.subr.bf16.mxu0 0
        %3037 = vmatpush1.bf16.msra.mxu0 0
        %3038 = vmatprep.subr.bf16.mxu0 0
        %3039 = vmatpush1.bf16.msra.mxu0 0
        %3040 = vmatprep.subr.bf16.mxu0 0
        %3041 = vmatpush1.bf16.msra.mxu0 0
        %3042 = vmatprep.subr.bf16.mxu0 0
        %3043 = vmatpush1.bf16.msra.mxu0 0
        %3044 = vmatprep.subr.bf16.mxu0 0
        %3045 = vmatpush1.bf16.msra.mxu0 0
        %3046 = vmatprep.subr.bf16.mxu0 0
        %3047 = vmatpush1.bf16.msra.mxu0 0
        %3048 = vmatprep.subr.bf16.mxu0 0
        %3049 = vmatpush1.bf16.msra.mxu0 0
        %3050 = vmatprep.subr.bf16.mxu0 0
        %3051 = vmatpush1.bf16.msra.mxu0 0
        %3052 = vmatprep.mubr.bf16.mxu0 0
        %3053 = vmatmul.mubr.bf16.gmra.mrb[0].mxu0 %v2974
        %v3054 = vpop.f32.mrb[0].mxu0
        %v3055 = vadd.f32 0.0, %v3054
        %v3056 = vpop.f32.mrb[0].mxu0
        %v3057 = vpop.f32.mrb[0].mxu0
        %v3058 = vadd.f32 0.0, %v3057
        %v3059 = vpop.f32.mrb[0].mxu0
        %3060 = vdwg.mxu0
        %3061 = vrot.lane.b32.xlu0 %v893, 112
        %v3062 = vpop.permute.xlu0 %3061
        %3064 = vmatprep.subr.bf16.mxu0 0
        %3065 = vmatpush1.bf16.msra.mxu0 %v3062
        %3066 = vmatprep.subr.bf16.mxu0 0
        %3067 = vmatpush1.bf16.msra.mxu0 0
        %3068 = vmatprep.subr.bf16.mxu0 0
        %3069 = vmatpush1.bf16.msra.mxu0 0
        %3070 = vmatprep.subr.bf16.mxu0 0
        %3071 = vmatpush1.bf16.msra.mxu0 0
        %3072 = vmatprep.subr.bf16.mxu0 0
        %3073 = vmatpush1.bf16.msra.mxu0 0
        %3074 = vmatprep.subr.bf16.mxu0 0
        %3075 = vmatpush1.bf16.msra.mxu0 0
        %3076 = vmatprep.subr.bf16.mxu0 0
        %3077 = vmatpush1.bf16.msra.mxu0 0
        %3078 = vmatprep.subr.bf16.mxu0 0
        %3079 = vmatpush1.bf16.msra.mxu0 0
        %3080 = vmatprep.subr.bf16.mxu0 0
        %3081 = vmatpush1.bf16.msra.mxu0 0
        %3082 = vmatprep.subr.bf16.mxu0 0
        %3083 = vmatpush1.bf16.msra.mxu0 0
        %3084 = vmatprep.subr.bf16.mxu0 0
        %3085 = vmatpush1.bf16.msra.mxu0 0
        %3086 = vmatprep.subr.bf16.mxu0 0
        %3087 = vmatpush1.bf16.msra.mxu0 0
        %3088 = vmatprep.subr.bf16.mxu0 0
        %3089 = vmatpush1.bf16.msra.mxu0 0
        %3090 = vmatprep.subr.bf16.mxu0 0
        %3091 = vmatpush1.bf16.msra.mxu0 0
        %3092 = vmatprep.subr.bf16.mxu0 0
        %3093 = vmatpush1.bf16.msra.mxu0 0
        %3094 = vmatprep.subr.bf16.mxu0 0
        %3095 = vmatpush1.bf16.msra.mxu0 0
        %3096 = vmatprep.mubr.bf16.mxu0 0
        %3097 = vmatmul.mubr.bf16.gmra.mrb[0].mxu0 %v2974
        %v3098 = vpop.f32.mrb[0].mxu0
        %v3099 = vadd.f32 0.0, %v3098
        %v3100 = vpop.f32.mrb[0].mxu0
        %v3101 = vpop.f32.mrb[0].mxu0
        %v3102 = vadd.f32 0.0, %v3101
        %v3103 = vpop.f32.mrb[0].mxu0
        %3104 = vdwg.mxu0
        %3105 = vrot.lane.b32.xlu0 %v894, 112
        %v3106 = vpop.permute.xlu0 %3105
        %3108 = vmatprep.subr.bf16.mxu0 0
        %3109 = vmatpush1.bf16.msra.mxu0 %v3106
        %3110 = vmatprep.subr.bf16.mxu0 0
        %3111 = vmatpush1.bf16.msra.mxu0 0
        %3112 = vmatprep.subr.bf16.mxu0 0
        %3113 = vmatpush1.bf16.msra.mxu0 0
        %3114 = vmatprep.subr.bf16.mxu0 0
        %3115 = vmatpush1.bf16.msra.mxu0 0
        %3116 = vmatprep.subr.bf16.mxu0 0
        %3117 = vmatpush1.bf16.msra.mxu0 0
        %3118 = vmatprep.subr.bf16.mxu0 0
        %3119 = vmatpush1.bf16.msra.mxu0 0
        %3120 = vmatprep.subr.bf16.mxu0 0
        %3121 = vmatpush1.bf16.msra.mxu0 0
        %3122 = vmatprep.subr.bf16.mxu0 0
        %3123 = vmatpush1.bf16.msra.mxu0 0
        %3124 = vmatprep.subr.bf16.mxu0 0
        %3125 = vmatpush1.bf16.msra.mxu0 0
        %3126 = vmatprep.subr.bf16.mxu0 0
        %3127 = vmatpush1.bf16.msra.mxu0 0
        %3128 = vmatprep.subr.bf16.mxu0 0
        %3129 = vmatpush1.bf16.msra.mxu0 0
        %3130 = vmatprep.subr.bf16.mxu0 0
        %3131 = vmatpush1.bf16.msra.mxu0 0
        %3132 = vmatprep.subr.bf16.mxu0 0
        %3133 = vmatpush1.bf16.msra.mxu0 0
        %3134 = vmatprep.subr.bf16.mxu0 0
        %3135 = vmatpush1.bf16.msra.mxu0 0
        %3136 = vmatprep.subr.bf16.mxu0 0
        %3137 = vmatpush1.bf16.msra.mxu0 0
        %3138 = vmatprep.subr.bf16.mxu0 0
        %3139 = vmatpush1.bf16.msra.mxu0 0
        %3140 = vmatprep.mubr.bf16.mxu0 0
        %3141 = vmatmul.mubr.bf16.gmra.mrb[0].mxu0 %v2974
        %v3142 = vpop.f32.mrb[0].mxu0
        %v3143 = vadd.f32 0.0, %v3142
        %v3144 = vpop.f32.mrb[0].mxu0
        %v3145 = vpop.f32.mrb[0].mxu0
        %v3146 = vadd.f32 0.0, %v3145
        %v3147 = vpop.f32.mrb[0].mxu0
        %3148 = vdwg.mxu0
        %3149 = vrot.lane.b32.xlu0 %v895, 112
        %v3150 = vpop.permute.xlu0 %3149
        %3152 = vmatprep.subr.bf16.mxu0 0
        %3153 = vmatpush1.bf16.msra.mxu0 %v3150
        %3154 = vmatprep.subr.bf16.mxu0 0
        %3155 = vmatpush1.bf16.msra.mxu0 0
        %3156 = vmatprep.subr.bf16.mxu0 0
        %3157 = vmatpush1.bf16.msra.mxu0 0
        %3158 = vmatprep.subr.bf16.mxu0 0
        %3159 = vmatpush1.bf16.msra.mxu0 0
        %3160 = vmatprep.subr.bf16.mxu0 0
        %3161 = vmatpush1.bf16.msra.mxu0 0
        %3162 = vmatprep.subr.bf16.mxu0 0
        %3163 = vmatpush1.bf16.msra.mxu0 0
        %3164 = vmatprep.subr.bf16.mxu0 0
        %3165 = vmatpush1.bf16.msra.mxu0 0
        %3166 = vmatprep.subr.bf16.mxu0 0
        %3167 = vmatpush1.bf16.msra.mxu0 0
        %3168 = vmatprep.subr.bf16.mxu0 0
        %3169 = vmatpush1.bf16.msra.mxu0 0
        %3170 = vmatprep.subr.bf16.mxu0 0
        %3171 = vmatpush1.bf16.msra.mxu0 0
        %3172 = vmatprep.subr.bf16.mxu0 0
        %3173 = vmatpush1.bf16.msra.mxu0 0
        %3174 = vmatprep.subr.bf16.mxu0 0
        %3175 = vmatpush1.bf16.msra.mxu0 0
        %3176 = vmatprep.subr.bf16.mxu0 0
        %3177 = vmatpush1.bf16.msra.mxu0 0
        %3178 = vmatprep.subr.bf16.mxu0 0
        %3179 = vmatpush1.bf16.msra.mxu0 0
        %3180 = vmatprep.subr.bf16.mxu0 0
        %3181 = vmatpush1.bf16.msra.mxu0 0
        %3182 = vmatprep.subr.bf16.mxu0 0
        %3183 = vmatpush1.bf16.msra.mxu0 0
        %3184 = vmatprep.mubr.bf16.mxu0 0
        %3185 = vmatmul.mubr.bf16.gmra.mrb[0].mxu0 %v2974
        %v3186 = vpop.f32.mrb[0].mxu0
        %v3187 = vadd.f32 0.0, %v3186
        %v3188 = vpop.f32.mrb[0].mxu0
        %v3189 = vpop.f32.mrb[0].mxu0
        %v3190 = vadd.f32 0.0, %v3189
        %v3191 = vpop.f32.mrb[0].mxu0
        %3192 = vdwg.mxu0
        %3193 = vrot.lane.b32.xlu0 %v896, 112
        %v3194 = vpop.permute.xlu0 %3193
        %3196 = vmatprep.subr.bf16.mxu0 0
        %3197 = vmatpush1.bf16.msra.mxu0 %v3194
        %3198 = vmatprep.subr.bf16.mxu0 0
        %3199 = vmatpush1.bf16.msra.mxu0 0
        %3200 = vmatprep.subr.bf16.mxu0 0
        %3201 = vmatpush1.bf16.msra.mxu0 0
        %3202 = vmatprep.subr.bf16.mxu0 0
        %3203 = vmatpush1.bf16.msra.mxu0 0
        %3204 = vmatprep.subr.bf16.mxu0 0
        %3205 = vmatpush1.bf16.msra.mxu0 0
        %3206 = vmatprep.subr.bf16.mxu0 0
        %3207 = vmatpush1.bf16.msra.mxu0 0
        %3208 = vmatprep.subr.bf16.mxu0 0
        %3209 = vmatpush1.bf16.msra.mxu0 0
        %3210 = vmatprep.subr.bf16.mxu0 0
        %3211 = vmatpush1.bf16.msra.mxu0 0
        %3212 = vmatprep.subr.bf16.mxu0 0
        %3213 = vmatpush1.bf16.msra.mxu0 0
        %3214 = vmatprep.subr.bf16.mxu0 0
        %3215 = vmatpush1.bf16.msra.mxu0 0
        %3216 = vmatprep.subr.bf16.mxu0 0
        %3217 = vmatpush1.bf16.msra.mxu0 0
        %3218 = vmatprep.subr.bf16.mxu0 0
        %3219 = vmatpush1.bf16.msra.mxu0 0
        %3220 = vmatprep.subr.bf16.mxu0 0
        %3221 = vmatpush1.bf16.msra.mxu0 0
        %3222 = vmatprep.subr.bf16.mxu0 0
        %3223 = vmatpush1.bf16.msra.mxu0 0
        %3224 = vmatprep.subr.bf16.mxu0 0
        %3225 = vmatpush1.bf16.msra.mxu0 0
        %3226 = vmatprep.subr.bf16.mxu0 0
        %3227 = vmatpush1.bf16.msra.mxu0 0
        %3228 = vmatprep.mubr.bf16.mxu0 0
        %3229 = vmatmul.mubr.bf16.gmra.mrb[0].mxu0 %v2974
        %v3230 = vpop.f32.mrb[0].mxu0
        %v3231 = vadd.f32 0.0, %v3230
        %v3232 = vpop.f32.mrb[0].mxu0
        %v3233 = vpop.f32.mrb[0].mxu0
        %v3234 = vadd.f32 0.0, %v3233
        %v3235 = vpop.f32.mrb[0].mxu0
        %3236 = vdwg.mxu0
        %3237 = vrot.lane.b32.xlu0 %v897, 112
        %v3238 = vpop.permute.xlu0 %3237
        %3240 = vmatprep.subr.bf16.mxu0 0
        %3241 = vmatpush1.bf16.msra.mxu0 %v3238
        %3242 = vmatprep.subr.bf16.mxu0 0
        %3243 = vmatpush1.bf16.msra.mxu0 0
        %3244 = vmatprep.subr.bf16.mxu0 0
        %3245 = vmatpush1.bf16.msra.mxu0 0
        %3246 = vmatprep.subr.bf16.mxu0 0
        %3247 = vmatpush1.bf16.msra.mxu0 0
        %3248 = vmatprep.subr.bf16.mxu0 0
        %3249 = vmatpush1.bf16.msra.mxu0 0
        %3250 = vmatprep.subr.bf16.mxu0 0
        %3251 = vmatpush1.bf16.msra.mxu0 0
        %3252 = vmatprep.subr.bf16.mxu0 0
        %3253 = vmatpush1.bf16.msra.mxu0 0
        %3254 = vmatprep.subr.bf16.mxu0 0
        %3255 = vmatpush1.bf16.msra.mxu0 0
        %3256 = vmatprep.subr.bf16.mxu0 0
        %3257 = vmatpush1.bf16.msra.mxu0 0
        %3258 = vmatprep.subr.bf16.mxu0 0
        %3259 = vmatpush1.bf16.msra.mxu0 0
        %3260 = vmatprep.subr.bf16.mxu0 0
        %3261 = vmatpush1.bf16.msra.mxu0 0
        %3262 = vmatprep.subr.bf16.mxu0 0
        %3263 = vmatpush1.bf16.msra.mxu0 0
        %3264 = vmatprep.subr.bf16.mxu0 0
        %3265 = vmatpush1.bf16.msra.mxu0 0
        %3266 = vmatprep.subr.bf16.mxu0 0
        %3267 = vmatpush1.bf16.msra.mxu0 0
        %3268 = vmatprep.subr.bf16.mxu0 0
        %3269 = vmatpush1.bf16.msra.mxu0 0
        %3270 = vmatprep.subr.bf16.mxu0 0
        %3271 = vmatpush1.bf16.msra.mxu0 0
        %3272 = vmatprep.mubr.bf16.mxu0 0
        %3273 = vmatmul.mubr.bf16.gmra.mrb[0].mxu0 %v2974
        %v3274 = vpop.f32.mrb[0].mxu0
        %v3275 = vadd.f32 0.0, %v3274
        %v3276 = vpop.f32.mrb[0].mxu0
        %v3277 = vpop.f32.mrb[0].mxu0
        %v3278 = vadd.f32 0.0, %v3277
        %v3279 = vpop.f32.mrb[0].mxu0
        %3280 = vdwg.mxu0
        %3281 = vrot.lane.b32.xlu0 %v898, 112
        %v3282 = vpop.permute.xlu0 %3281
        %3284 = vmatprep.subr.bf16.mxu0 0
        %3285 = vmatpush1.bf16.msra.mxu0 %v3282
        %3286 = vmatprep.subr.bf16.mxu0 0
        %3287 = vmatpush1.bf16.msra.mxu0 0
        %3288 = vmatprep.subr.bf16.mxu0 0
        %3289 = vmatpush1.bf16.msra.mxu0 0
        %3290 = vmatprep.subr.bf16.mxu0 0
        %3291 = vmatpush1.bf16.msra.mxu0 0
        %3292 = vmatprep.subr.bf16.mxu0 0
        %3293 = vmatpush1.bf16.msra.mxu0 0
        %3294 = vmatprep.subr.bf16.mxu0 0
        %3295 = vmatpush1.bf16.msra.mxu0 0
        %3296 = vmatprep.subr.bf16.mxu0 0
        %3297 = vmatpush1.bf16.msra.mxu0 0
        %3298 = vmatprep.subr.bf16.mxu0 0
        %3299 = vmatpush1.bf16.msra.mxu0 0
        %3300 = vmatprep.subr.bf16.mxu0 0
        %3301 = vmatpush1.bf16.msra.mxu0 0
        %3302 = vmatprep.subr.bf16.mxu0 0
        %3303 = vmatpush1.bf16.msra.mxu0 0
        %3304 = vmatprep.subr.bf16.mxu0 0
        %3305 = vmatpush1.bf16.msra.mxu0 0
        %3306 = vmatprep.subr.bf16.mxu0 0
        %3307 = vmatpush1.bf16.msra.mxu0 0
        %3308 = vmatprep.subr.bf16.mxu0 0
        %3309 = vmatpush1.bf16.msra.mxu0 0
        %3310 = vmatprep.subr.bf16.mxu0 0
        %3311 = vmatpush1.bf16.msra.mxu0 0
        %3312 = vmatprep.subr.bf16.mxu0 0
        %3313 = vmatpush1.bf16.msra.mxu0 0
        %3314 = vmatprep.subr.bf16.mxu0 0
        %3315 = vmatpush1.bf16.msra.mxu0 0
        %3316 = vmatprep.mubr.bf16.mxu0 0
        %3317 = vmatmul.mubr.bf16.gmra.mrb[0].mxu0 %v2974
        %v3318 = vpop.f32.mrb[0].mxu0
        %v3319 = vadd.f32 0.0, %v3318
        %v3320 = vpop.f32.mrb[0].mxu0
        %v3321 = vpop.f32.mrb[0].mxu0
        %v3322 = vadd.f32 0.0, %v3321
        %v3323 = vpop.f32.mrb[0].mxu0
        %3324 = vdwg.mxu0
        %3325 = vrot.lane.b32.xlu0 %v875, 104
        %v3326 = vpop.permute.xlu0 %3325
        %3327 = vrot.lane.b32.xlu0 %v883, 104
        %v3328 = vpop.permute.xlu0 %3327
        %v3330 = vsel %vm899, %v3326, 0
        %v3333 = vsel %vm899, %v3328, 0
        %3335 = vmatprep.subr.bf16.mxu0 0
        %3336 = vmatpush1.bf16.xpose.msra.mxu0 %v3333
        %3337 = vmatprep.subr.bf16.mxu0 0
        %3338 = vmatpush1.bf16.xpose.msra.mxu0 0
        %3339 = vmatprep.subr.bf16.mxu0 0
        %3340 = vmatpush1.bf16.xpose.msra.mxu0 0
        %3341 = vmatprep.subr.bf16.mxu0 0
        %3342 = vmatpush1.bf16.xpose.msra.mxu0 0
        %3343 = vmatprep.subr.bf16.mxu0 0
        %3344 = vmatpush1.bf16.xpose.msra.mxu0 0
        %3345 = vmatprep.subr.bf16.mxu0 0
        %3346 = vmatpush1.bf16.xpose.msra.mxu0 0
        %3347 = vmatprep.subr.bf16.mxu0 0
        %3348 = vmatpush1.bf16.xpose.msra.mxu0 0
        %3349 = vmatprep.subr.bf16.mxu0 0
        %3350 = vmatpush1.bf16.xpose.msra.mxu0 0
        %3351 = vmatprep.subr.bf16.mxu0 0
        %3352 = vmatpush1.bf16.xpose.msra.mxu0 0
        %3353 = vmatprep.subr.bf16.mxu0 0
        %3354 = vmatpush1.bf16.xpose.msra.mxu0 0
        %3355 = vmatprep.subr.bf16.mxu0 0
        %3356 = vmatpush1.bf16.xpose.msra.mxu0 0
        %3357 = vmatprep.subr.bf16.mxu0 0
        %3358 = vmatpush1.bf16.xpose.msra.mxu0 0
        %3359 = vmatprep.subr.bf16.mxu0 0
        %3360 = vmatpush1.bf16.xpose.msra.mxu0 0
        %3361 = vmatprep.subr.bf16.mxu0 0
        %3362 = vmatpush1.bf16.xpose.msra.mxu0 0
        %3363 = vmatprep.subr.bf16.mxu0 0
        %3364 = vmatpush1.bf16.xpose.msra.mxu0 0
        %3365 = vmatprep.subr.bf16.mxu0 0
        %3366 = vmatpush1.bf16.xpose.msra.mxu0 0
        %3367 = vmatprep.mubr.bf16.mxu0 0
        %3368 = vmatmul.mubr.bf16.gmra.mrb[0].mxu0 %v3330
        %v3369 = vpop.f32.mrb[0].mxu0
        %v3370 = vadd.f32 0.0, %v3369
        %v3371 = vpop.f32.mrb[0].mxu0
        %v3372 = vpop.f32.mrb[0].mxu0
        %v3373 = vadd.f32 0.0, %v3372
        %v3374 = vpop.f32.mrb[0].mxu0
        %3375 = vdwg.mxu0
        %3376 = vrot.lane.b32.xlu0 %v876, 104
        %v3377 = vpop.permute.xlu0 %3376
        %3378 = vrot.lane.b32.xlu0 %v884, 104
        %v3379 = vpop.permute.xlu0 %3378
        %v3381 = vsel %vm899, %v3377, 0
        %v3384 = vsel %vm899, %v3379, 0
        %3386 = vmatprep.subr.bf16.mxu0 0
        %3387 = vmatpush1.bf16.xpose.msra.mxu0 %v3384
        %3388 = vmatprep.subr.bf16.mxu0 0
        %3389 = vmatpush1.bf16.xpose.msra.mxu0 0
        %3390 = vmatprep.subr.bf16.mxu0 0
        %3391 = vmatpush1.bf16.xpose.msra.mxu0 0
        %3392 = vmatprep.subr.bf16.mxu0 0
        %3393 = vmatpush1.bf16.xpose.msra.mxu0 0
        %3394 = vmatprep.subr.bf16.mxu0 0
        %3395 = vmatpush1.bf16.xpose.msra.mxu0 0
        %3396 = vmatprep.subr.bf16.mxu0 0
        %3397 = vmatpush1.bf16.xpose.msra.mxu0 0
        %3398 = vmatprep.subr.bf16.mxu0 0
        %3399 = vmatpush1.bf16.xpose.msra.mxu0 0
        %3400 = vmatprep.subr.bf16.mxu0 0
        %3401 = vmatpush1.bf16.xpose.msra.mxu0 0
        %3402 = vmatprep.subr.bf16.mxu0 0
        %3403 = vmatpush1.bf16.xpose.msra.mxu0 0
        %3404 = vmatprep.subr.bf16.mxu0 0
        %3405 = vmatpush1.bf16.xpose.msra.mxu0 0
        %3406 = vmatprep.subr.bf16.mxu0 0
        %3407 = vmatpush1.bf16.xpose.msra.mxu0 0
        %3408 = vmatprep.subr.bf16.mxu0 0
        %3409 = vmatpush1.bf16.xpose.msra.mxu0 0
        %3410 = vmatprep.subr.bf16.mxu0 0
        %3411 = vmatpush1.bf16.xpose.msra.mxu0 0
        %3412 = vmatprep.subr.bf16.mxu0 0
        %3413 = vmatpush1.bf16.xpose.msra.mxu0 0
        %3414 = vmatprep.subr.bf16.mxu0 0
        %3415 = vmatpush1.bf16.xpose.msra.mxu0 0
        %3416 = vmatprep.subr.bf16.mxu0 0
        %3417 = vmatpush1.bf16.xpose.msra.mxu0 0
        %3418 = vmatprep.mubr.bf16.mxu0 0
        %3419 = vmatmul.mubr.bf16.gmra.mrb[0].mxu0 %v3381
        %v3420 = vpop.f32.mrb[0].mxu0
        %v3421 = vadd.f32 0.0, %v3420
        %v3422 = vpop.f32.mrb[0].mxu0
        %v3423 = vpop.f32.mrb[0].mxu0
        %v3424 = vadd.f32 0.0, %v3423
        %v3425 = vpop.f32.mrb[0].mxu0
        %3426 = vdwg.mxu0
        %3427 = vrot.lane.b32.xlu0 %v877, 104
        %v3428 = vpop.permute.xlu0 %3427
        %3429 = vrot.lane.b32.xlu0 %v885, 104
        %v3430 = vpop.permute.xlu0 %3429
        %v3432 = vsel %vm899, %v3428, 0
        %v3435 = vsel %vm899, %v3430, 0
        %3437 = vmatprep.subr.bf16.mxu0 0
        %3438 = vmatpush1.bf16.xpose.msra.mxu0 %v3435
        %3439 = vmatprep.subr.bf16.mxu0 0
        %3440 = vmatpush1.bf16.xpose.msra.mxu0 0
        %3441 = vmatprep.subr.bf16.mxu0 0
        %3442 = vmatpush1.bf16.xpose.msra.mxu0 0
        %3443 = vmatprep.subr.bf16.mxu0 0
        %3444 = vmatpush1.bf16.xpose.msra.mxu0 0
        %3445 = vmatprep.subr.bf16.mxu0 0
        %3446 = vmatpush1.bf16.xpose.msra.mxu0 0
        %3447 = vmatprep.subr.bf16.mxu0 0
        %3448 = vmatpush1.bf16.xpose.msra.mxu0 0
        %3449 = vmatprep.subr.bf16.mxu0 0
        %3450 = vmatpush1.bf16.xpose.msra.mxu0 0
        %3451 = vmatprep.subr.bf16.mxu0 0
        %3452 = vmatpush1.bf16.xpose.msra.mxu0 0
        %3453 = vmatprep.subr.bf16.mxu0 0
        %3454 = vmatpush1.bf16.xpose.msra.mxu0 0
        %3455 = vmatprep.subr.bf16.mxu0 0
        %3456 = vmatpush1.bf16.xpose.msra.mxu0 0
        %3457 = vmatprep.subr.bf16.mxu0 0
        %3458 = vmatpush1.bf16.xpose.msra.mxu0 0
        %3459 = vmatprep.subr.bf16.mxu0 0
        %3460 = vmatpush1.bf16.xpose.msra.mxu0 0
        %3461 = vmatprep.subr.bf16.mxu0 0
        %3462 = vmatpush1.bf16.xpose.msra.mxu0 0
        %3463 = vmatprep.subr.bf16.mxu0 0
        %3464 = vmatpush1.bf16.xpose.msra.mxu0 0
        %3465 = vmatprep.subr.bf16.mxu0 0
        %3466 = vmatpush1.bf16.xpose.msra.mxu0 0
        %3467 = vmatprep.subr.bf16.mxu0 0
        %3468 = vmatpush1.bf16.xpose.msra.mxu0 0
        %3469 = vmatprep.mubr.bf16.mxu0 0
        %3470 = vmatmul.mubr.bf16.gmra.mrb[0].mxu0 %v3432
        %v3471 = vpop.f32.mrb[0].mxu0
        %v3472 = vadd.f32 0.0, %v3471
        %v3473 = vpop.f32.mrb[0].mxu0
        %v3474 = vpop.f32.mrb[0].mxu0
        %v3475 = vadd.f32 0.0, %v3474
        %v3476 = vpop.f32.mrb[0].mxu0
        %3477 = vdwg.mxu0
        %3478 = vrot.lane.b32.xlu0 %v878, 104
        %v3479 = vpop.permute.xlu0 %3478
        %3480 = vrot.lane.b32.xlu0 %v886, 104
        %v3481 = vpop.permute.xlu0 %3480
        %v3483 = vsel %vm899, %v3479, 0
        %v3486 = vsel %vm899, %v3481, 0
        %3488 = vmatprep.subr.bf16.mxu0 0
        %3489 = vmatpush1.bf16.xpose.msra.mxu0 %v3486
        %3490 = vmatprep.subr.bf16.mxu0 0
        %3491 = vmatpush1.bf16.xpose.msra.mxu0 0
        %3492 = vmatprep.subr.bf16.mxu0 0
        %3493 = vmatpush1.bf16.xpose.msra.mxu0 0
        %3494 = vmatprep.subr.bf16.mxu0 0
        %3495 = vmatpush1.bf16.xpose.msra.mxu0 0
        %3496 = vmatprep.subr.bf16.mxu0 0
        %3497 = vmatpush1.bf16.xpose.msra.mxu0 0
        %3498 = vmatprep.subr.bf16.mxu0 0
        %3499 = vmatpush1.bf16.xpose.msra.mxu0 0
        %3500 = vmatprep.subr.bf16.mxu0 0
        %3501 = vmatpush1.bf16.xpose.msra.mxu0 0
        %3502 = vmatprep.subr.bf16.mxu0 0
        %3503 = vmatpush1.bf16.xpose.msra.mxu0 0
        %3504 = vmatprep.subr.bf16.mxu0 0
        %3505 = vmatpush1.bf16.xpose.msra.mxu0 0
        %3506 = vmatprep.subr.bf16.mxu0 0
        %3507 = vmatpush1.bf16.xpose.msra.mxu0 0
        %3508 = vmatprep.subr.bf16.mxu0 0
        %3509 = vmatpush1.bf16.xpose.msra.mxu0 0
        %3510 = vmatprep.subr.bf16.mxu0 0
        %3511 = vmatpush1.bf16.xpose.msra.mxu0 0
        %3512 = vmatprep.subr.bf16.mxu0 0
        %3513 = vmatpush1.bf16.xpose.msra.mxu0 0
        %3514 = vmatprep.subr.bf16.mxu0 0
        %3515 = vmatpush1.bf16.xpose.msra.mxu0 0
        %3516 = vmatprep.subr.bf16.mxu0 0
        %3517 = vmatpush1.bf16.xpose.msra.mxu0 0
        %3518 = vmatprep.subr.bf16.mxu0 0
        %3519 = vmatpush1.bf16.xpose.msra.mxu0 0
        %3520 = vmatprep.mubr.bf16.mxu0 0
        %3521 = vmatmul.mubr.bf16.gmra.mrb[0].mxu0 %v3483
        %v3522 = vpop.f32.mrb[0].mxu0
        %v3523 = vadd.f32 0.0, %v3522
        %v3524 = vpop.f32.mrb[0].mxu0
        %v3525 = vpop.f32.mrb[0].mxu0
        %v3526 = vadd.f32 0.0, %v3525
        %v3527 = vpop.f32.mrb[0].mxu0
        %3528 = vdwg.mxu0
        %3529 = vrot.lane.b32.xlu0 %v879, 104
        %v3530 = vpop.permute.xlu0 %3529
        %3531 = vrot.lane.b32.xlu0 %v887, 104
        %v3532 = vpop.permute.xlu0 %3531
        %v3534 = vsel %vm899, %v3530, 0
        %v3537 = vsel %vm899, %v3532, 0
        %3539 = vmatprep.subr.bf16.mxu0 0
        %3540 = vmatpush1.bf16.xpose.msra.mxu0 %v3537
        %3541 = vmatprep.subr.bf16.mxu0 0
        %3542 = vmatpush1.bf16.xpose.msra.mxu0 0
        %3543 = vmatprep.subr.bf16.mxu0 0
        %3544 = vmatpush1.bf16.xpose.msra.mxu0 0
        %3545 = vmatprep.subr.bf16.mxu0 0
        %3546 = vmatpush1.bf16.xpose.msra.mxu0 0
        %3547 = vmatprep.subr.bf16.mxu0 0
        %3548 = vmatpush1.bf16.xpose.msra.mxu0 0
        %3549 = vmatprep.subr.bf16.mxu0 0
        %3550 = vmatpush1.bf16.xpose.msra.mxu0 0
        %3551 = vmatprep.subr.bf16.mxu0 0
        %3552 = vmatpush1.bf16.xpose.msra.mxu0 0
        %3553 = vmatprep.subr.bf16.mxu0 0
        %3554 = vmatpush1.bf16.xpose.msra.mxu0 0
        %3555 = vmatprep.subr.bf16.mxu0 0
        %3556 = vmatpush1.bf16.xpose.msra.mxu0 0
        %3557 = vmatprep.subr.bf16.mxu0 0
        %3558 = vmatpush1.bf16.xpose.msra.mxu0 0
        %3559 = vmatprep.subr.bf16.mxu0 0
        %3560 = vmatpush1.bf16.xpose.msra.mxu0 0
        %3561 = vmatprep.subr.bf16.mxu0 0
        %3562 = vmatpush1.bf16.xpose.msra.mxu0 0
        %3563 = vmatprep.subr.bf16.mxu0 0
        %3564 = vmatpush1.bf16.xpose.msra.mxu0 0
        %3565 = vmatprep.subr.bf16.mxu0 0
        %3566 = vmatpush1.bf16.xpose.msra.mxu0 0
        %3567 = vmatprep.subr.bf16.mxu0 0
        %3568 = vmatpush1.bf16.xpose.msra.mxu0 0
        %3569 = vmatprep.subr.bf16.mxu0 0
        %3570 = vmatpush1.bf16.xpose.msra.mxu0 0
        %3571 = vmatprep.mubr.bf16.mxu0 0
        %3572 = vmatmul.mubr.bf16.gmra.mrb[0].mxu0 %v3534
        %v3573 = vpop.f32.mrb[0].mxu0
        %v3574 = vadd.f32 0.0, %v3573
        %v3575 = vpop.f32.mrb[0].mxu0
        %v3576 = vpop.f32.mrb[0].mxu0
        %v3577 = vadd.f32 0.0, %v3576
        %v3578 = vpop.f32.mrb[0].mxu0
        %3579 = vdwg.mxu0
        %3580 = vrot.lane.b32.xlu0 %v880, 104
        %v3581 = vpop.permute.xlu0 %3580
        %3582 = vrot.lane.b32.xlu0 %v888, 104
        %v3583 = vpop.permute.xlu0 %3582
        %v3585 = vsel %vm899, %v3581, 0
        %v3588 = vsel %vm899, %v3583, 0
        %3590 = vmatprep.subr.bf16.mxu0 0
        %3591 = vmatpush1.bf16.xpose.msra.mxu0 %v3588
        %3592 = vmatprep.subr.bf16.mxu0 0
        %3593 = vmatpush1.bf16.xpose.msra.mxu0 0
        %3594 = vmatprep.subr.bf16.mxu0 0
        %3595 = vmatpush1.bf16.xpose.msra.mxu0 0
        %3596 = vmatprep.subr.bf16.mxu0 0
        %3597 = vmatpush1.bf16.xpose.msra.mxu0 0
        %3598 = vmatprep.subr.bf16.mxu0 0
        %3599 = vmatpush1.bf16.xpose.msra.mxu0 0
        %3600 = vmatprep.subr.bf16.mxu0 0
        %3601 = vmatpush1.bf16.xpose.msra.mxu0 0
        %3602 = vmatprep.subr.bf16.mxu0 0
        %3603 = vmatpush1.bf16.xpose.msra.mxu0 0
        %3604 = vmatprep.subr.bf16.mxu0 0
        %3605 = vmatpush1.bf16.xpose.msra.mxu0 0
        %3606 = vmatprep.subr.bf16.mxu0 0
        %3607 = vmatpush1.bf16.xpose.msra.mxu0 0
        %3608 = vmatprep.subr.bf16.mxu0 0
        %3609 = vmatpush1.bf16.xpose.msra.mxu0 0
        %3610 = vmatprep.subr.bf16.mxu0 0
        %3611 = vmatpush1.bf16.xpose.msra.mxu0 0
        %3612 = vmatprep.subr.bf16.mxu0 0
        %3613 = vmatpush1.bf16.xpose.msra.mxu0 0
        %3614 = vmatprep.subr.bf16.mxu0 0
        %3615 = vmatpush1.bf16.xpose.msra.mxu0 0
        %3616 = vmatprep.subr.bf16.mxu0 0
        %3617 = vmatpush1.bf16.xpose.msra.mxu0 0
        %3618 = vmatprep.subr.bf16.mxu0 0
        %3619 = vmatpush1.bf16.xpose.msra.mxu0 0
        %3620 = vmatprep.subr.bf16.mxu0 0
        %3621 = vmatpush1.bf16.xpose.msra.mxu0 0
        %3622 = vmatprep.mubr.bf16.mxu0 0
        %3623 = vmatmul.mubr.bf16.gmra.mrb[0].mxu0 %v3585
        %v3624 = vpop.f32.mrb[0].mxu0
        %v3625 = vadd.f32 0.0, %v3624
        %v3626 = vpop.f32.mrb[0].mxu0
        %v3627 = vpop.f32.mrb[0].mxu0
        %v3628 = vadd.f32 0.0, %v3627
        %v3629 = vpop.f32.mrb[0].mxu0
        %3630 = vdwg.mxu0
        %3631 = vrot.lane.b32.xlu0 %v881, 104
        %v3632 = vpop.permute.xlu0 %3631
        %3633 = vrot.lane.b32.xlu0 %v889, 104
        %v3634 = vpop.permute.xlu0 %3633
        %v3636 = vsel %vm899, %v3632, 0
        %v3639 = vsel %vm899, %v3634, 0
        %3641 = vmatprep.subr.bf16.mxu0 0
        %3642 = vmatpush1.bf16.xpose.msra.mxu0 %v3639
        %3643 = vmatprep.subr.bf16.mxu0 0
        %3644 = vmatpush1.bf16.xpose.msra.mxu0 0
        %3645 = vmatprep.subr.bf16.mxu0 0
        %3646 = vmatpush1.bf16.xpose.msra.mxu0 0
        %3647 = vmatprep.subr.bf16.mxu0 0
        %3648 = vmatpush1.bf16.xpose.msra.mxu0 0
        %3649 = vmatprep.subr.bf16.mxu0 0
        %3650 = vmatpush1.bf16.xpose.msra.mxu0 0
        %3651 = vmatprep.subr.bf16.mxu0 0
        %3652 = vmatpush1.bf16.xpose.msra.mxu0 0
        %3653 = vmatprep.subr.bf16.mxu0 0
        %3654 = vmatpush1.bf16.xpose.msra.mxu0 0
        %3655 = vmatprep.subr.bf16.mxu0 0
        %3656 = vmatpush1.bf16.xpose.msra.mxu0 0
        %3657 = vmatprep.subr.bf16.mxu0 0
        %3658 = vmatpush1.bf16.xpose.msra.mxu0 0
        %3659 = vmatprep.subr.bf16.mxu0 0
        %3660 = vmatpush1.bf16.xpose.msra.mxu0 0
        %3661 = vmatprep.subr.bf16.mxu0 0
        %3662 = vmatpush1.bf16.xpose.msra.mxu0 0
        %3663 = vmatprep.subr.bf16.mxu0 0
        %3664 = vmatpush1.bf16.xpose.msra.mxu0 0
        %3665 = vmatprep.subr.bf16.mxu0 0
        %3666 = vmatpush1.bf16.xpose.msra.mxu0 0
        %3667 = vmatprep.subr.bf16.mxu0 0
        %3668 = vmatpush1.bf16.xpose.msra.mxu0 0
        %3669 = vmatprep.subr.bf16.mxu0 0
        %3670 = vmatpush1.bf16.xpose.msra.mxu0 0
        %3671 = vmatprep.subr.bf16.mxu0 0
        %3672 = vmatpush1.bf16.xpose.msra.mxu0 0
        %3673 = vmatprep.mubr.bf16.mxu0 0
        %3674 = vmatmul.mubr.bf16.gmra.mrb[0].mxu0 %v3636
        %v3675 = vpop.f32.mrb[0].mxu0
        %v3676 = vadd.f32 0.0, %v3675
        %v3677 = vpop.f32.mrb[0].mxu0
        %v3678 = vpop.f32.mrb[0].mxu0
        %v3679 = vadd.f32 0.0, %v3678
        %v3680 = vpop.f32.mrb[0].mxu0
        %3681 = vdwg.mxu0
        %3682 = vrot.lane.b32.xlu0 %v882, 104
        %v3683 = vpop.permute.xlu0 %3682
        %3684 = vrot.lane.b32.xlu0 %v890, 104
        %v3685 = vpop.permute.xlu0 %3684
        %v3687 = vsel %vm899, %v3683, 0
        %v3690 = vsel %vm899, %v3685, 0
        %3692 = vmatprep.subr.bf16.mxu0 0
        %3693 = vmatpush1.bf16.xpose.msra.mxu0 %v3690
        %3694 = vmatprep.subr.bf16.mxu0 0
        %3695 = vmatpush1.bf16.xpose.msra.mxu0 0
        %3696 = vmatprep.subr.bf16.mxu0 0
        %3697 = vmatpush1.bf16.xpose.msra.mxu0 0
        %3698 = vmatprep.subr.bf16.mxu0 0
        %3699 = vmatpush1.bf16.xpose.msra.mxu0 0
        %3700 = vmatprep.subr.bf16.mxu0 0
        %3701 = vmatpush1.bf16.xpose.msra.mxu0 0
        %3702 = vmatprep.subr.bf16.mxu0 0
        %3703 = vmatpush1.bf16.xpose.msra.mxu0 0
        %3704 = vmatprep.subr.bf16.mxu0 0
        %3705 = vmatpush1.bf16.xpose.msra.mxu0 0
        %3706 = vmatprep.subr.bf16.mxu0 0
        %3707 = vmatpush1.bf16.xpose.msra.mxu0 0
        %3708 = vmatprep.subr.bf16.mxu0 0
        %3709 = vmatpush1.bf16.xpose.msra.mxu0 0
        %3710 = vmatprep.subr.bf16.mxu0 0
        %3711 = vmatpush1.bf16.xpose.msra.mxu0 0
        %3712 = vmatprep.subr.bf16.mxu0 0
        %3713 = vmatpush1.bf16.xpose.msra.mxu0 0
        %3714 = vmatprep.subr.bf16.mxu0 0
        %3715 = vmatpush1.bf16.xpose.msra.mxu0 0
        %3716 = vmatprep.subr.bf16.mxu0 0
        %3717 = vmatpush1.bf16.xpose.msra.mxu0 0
        %3718 = vmatprep.subr.bf16.mxu0 0
        %3719 = vmatpush1.bf16.xpose.msra.mxu0 0
        %3720 = vmatprep.subr.bf16.mxu0 0
        %3721 = vmatpush1.bf16.xpose.msra.mxu0 0
        %3722 = vmatprep.subr.bf16.mxu0 0
        %3723 = vmatpush1.bf16.xpose.msra.mxu0 0
        %3724 = vmatprep.mubr.bf16.mxu0 0
        %3725 = vmatmul.mubr.bf16.gmra.mrb[0].mxu0 %v3687
        %v3726 = vpop.f32.mrb[0].mxu0
        %v3727 = vadd.f32 0.0, %v3726
        %v3728 = vpop.f32.mrb[0].mxu0
        %v3729 = vpop.f32.mrb[0].mxu0
        %v3730 = vadd.f32 0.0, %v3729
        %v3731 = vpop.f32.mrb[0].mxu0
        %3732 = vdwg.mxu0
        %v3733 = vsel %vm1276, %v3370, 0.0
        %v3734 = vsel %vm1276, %v3421, 0.0
        %v3735 = vadd.f32 %v3733, %v3734
        %v3736 = vsel %vm1276, %v3472, 0.0
        %v3737 = vadd.f32 %v3735, %v3736
        %v3738 = vsel %vm1276, %v3523, 0.0
        %v3739 = vadd.f32 %v3737, %v3738
        %v3740 = vsel %vm1276, %v3574, 0.0
        %v3741 = vadd.f32 %v3739, %v3740
        %v3742 = vsel %vm1276, %v3625, 0.0
        %v3743 = vadd.f32 %v3741, %v3742
        %v3744 = vsel %vm1276, %v3676, 0.0
        %v3745 = vadd.f32 %v3743, %v3744
        %v3746 = vsel %vm1276, %v3727, 0.0
        %v3747 = vadd.f32 %v3745, %v3746
        %v3748 = vsel %vm1276, %v3373, 0.0
        %v3749 = vsel %vm1276, %v3424, 0.0
        %v3750 = vadd.f32 %v3748, %v3749
        %v3751 = vsel %vm1276, %v3475, 0.0
        %v3752 = vadd.f32 %v3750, %v3751
        %v3753 = vsel %vm1276, %v3526, 0.0
        %v3754 = vadd.f32 %v3752, %v3753
        %v3755 = vsel %vm1276, %v3577, 0.0
        %v3756 = vadd.f32 %v3754, %v3755
        %v3757 = vsel %vm1276, %v3628, 0.0
        %v3758 = vadd.f32 %v3756, %v3757
        %v3759 = vsel %vm1276, %v3679, 0.0
        %v3760 = vadd.f32 %v3758, %v3759
        %v3761 = vsel %vm1276, %v3730, 0.0
        %v3762 = vadd.f32 %v3760, %v3761
        %v3763 = vsel %vm1276, %v3747, -inf
        %3764 = vmax.xlane.f32.xlu0 %v3763
        %v3765 = vpop.xlane.xlu0 %3764
        %v3766 = vsel %vm1276, %v3762, -inf
        %3767 = vmax.xlane.f32.xlu0 %v3766
        %v3768 = vpop.xlane.xlu0 %3767
        %v3769 = vsub.f32 %v3747, %v3765
        %v3770 = vsub.f32 %v3762, %v3768
        %v3771 = vmul.f32 %v3769, 1.442695
        %v3772 = vpow.pop %v3771
        %v3773 = vmul.f32 %v3770, 1.442695
        %v3774 = vpow.pop %v3773
        %v3775 = vsel %vm1276, %v3772, 0.0
        %3776 = vadd.xlane.f32.xlu0 %v3775
        %v3777 = vpop.xlane.xlu0 %3776
        %v3778 = vsel %vm1276, %v3774, 0.0
        %3779 = vadd.xlane.f32.xlu0 %v3778
        %v3780 = vpop.xlane.xlu0 %3779
        %v3781 = vrcp.pop %v3777
        %v3782 = vrcp.pop %v3780
        %v3783 = vmul.f32 %v3772, %v3781
        %v3784 = vmul.f32 %v3774, %v3782
        %s3785 = scalar_lea.vmem %s432, 48 [#allocation11]
        %3786 = vst.msk [vmem:[%s3785] sm:$0xff] %vm1276, %v3783
        %3787 = vst.msk [vmem:[%s3785 + $0x8] sm:$0xff] %vm1276, %v3784
        %v3788 = vpack.c.bf16 %v3784, %v3783
        %3789 = vrot.lane.b32.xlu0 %v891, 104
        %v3790 = vpop.permute.xlu0 %3789
        %v3793 = vsel %vm1276, %v3788, 0
        %3795 = vmatprep.subr.bf16.mxu0 0
        %3796 = vmatpush1.bf16.msra.mxu0 %v3790
        %3797 = vmatprep.subr.bf16.mxu0 0
        %3798 = vmatpush1.bf16.msra.mxu0 0
        %3799 = vmatprep.subr.bf16.mxu0 0
        %3800 = vmatpush1.bf16.msra.mxu0 0
        %3801 = vmatprep.subr.bf16.mxu0 0
        %3802 = vmatpush1.bf16.msra.mxu0 0
        %3803 = vmatprep.subr.bf16.mxu0 0
        %3804 = vmatpush1.bf16.msra.mxu0 0
        %3805 = vmatprep.subr.bf16.mxu0 0
        %3806 = vmatpush1.bf16.msra.mxu0 0
        %3807 = vmatprep.subr.bf16.mxu0 0
        %3808 = vmatpush1.bf16.msra.mxu0 0
        %3809 = vmatprep.subr.bf16.mxu0 0
        %3810 = vmatpush1.bf16.msra.mxu0 0
        %3811 = vmatprep.subr.bf16.mxu0 0
        %3812 = vmatpush1.bf16.msra.mxu0 0
        %3813 = vmatprep.subr.bf16.mxu0 0
        %3814 = vmatpush1.bf16.msra.mxu0 0
        %3815 = vmatprep.subr.bf16.mxu0 0
        %3816 = vmatpush1.bf16.msra.mxu0 0
        %3817 = vmatprep.subr.bf16.mxu0 0
        %3818 = vmatpush1.bf16.msra.mxu0 0
        %3819 = vmatprep.subr.bf16.mxu0 0
        %3820 = vmatpush1.bf16.msra.mxu0 0
        %3821 = vmatprep.subr.bf16.mxu0 0
        %3822 = vmatpush1.bf16.msra.mxu0 0
        %3823 = vmatprep.subr.bf16.mxu0 0
        %3824 = vmatpush1.bf16.msra.mxu0 0
        %3825 = vmatprep.subr.bf16.mxu0 0
        %3826 = vmatpush1.bf16.msra.mxu0 0
        %3827 = vmatprep.mubr.bf16.mxu0 0
        %3828 = vmatmul.mubr.bf16.gmra.mrb[0].mxu0 %v3793
        %v3829 = vpop.f32.mrb[0].mxu0
        %v3830 = vadd.f32 0.0, %v3829
        %v3831 = vpop.f32.mrb[0].mxu0
        %v3832 = vpop.f32.mrb[0].mxu0
        %v3833 = vadd.f32 0.0, %v3832
        %v3834 = vpop.f32.mrb[0].mxu0
        %3835 = vdwg.mxu0
        %3836 = vrot.lane.b32.xlu0 %v892, 104
        %v3837 = vpop.permute.xlu0 %3836
        %3839 = vmatprep.subr.bf16.mxu0 0
        %3840 = vmatpush1.bf16.msra.mxu0 %v3837
        %3841 = vmatprep.subr.bf16.mxu0 0
        %3842 = vmatpush1.bf16.msra.mxu0 0
        %3843 = vmatprep.subr.bf16.mxu0 0
        %3844 = vmatpush1.bf16.msra.mxu0 0
        %3845 = vmatprep.subr.bf16.mxu0 0
        %3846 = vmatpush1.bf16.msra.mxu0 0
        %3847 = vmatprep.subr.bf16.mxu0 0
        %3848 = vmatpush1.bf16.msra.mxu0 0
        %3849 = vmatprep.subr.bf16.mxu0 0
        %3850 = vmatpush1.bf16.msra.mxu0 0
        %3851 = vmatprep.subr.bf16.mxu0 0
        %3852 = vmatpush1.bf16.msra.mxu0 0
        %3853 = vmatprep.subr.bf16.mxu0 0
        %3854 = vmatpush1.bf16.msra.mxu0 0
        %3855 = vmatprep.subr.bf16.mxu0 0
        %3856 = vmatpush1.bf16.msra.mxu0 0
        %3857 = vmatprep.subr.bf16.mxu0 0
        %3858 = vmatpush1.bf16.msra.mxu0 0
        %3859 = vmatprep.subr.bf16.mxu0 0
        %3860 = vmatpush1.bf16.msra.mxu0 0
        %3861 = vmatprep.subr.bf16.mxu0 0
        %3862 = vmatpush1.bf16.msra.mxu0 0
        %3863 = vmatprep.subr.bf16.mxu0 0
        %3864 = vmatpush1.bf16.msra.mxu0 0
        %3865 = vmatprep.subr.bf16.mxu0 0
        %3866 = vmatpush1.bf16.msra.mxu0 0
        %3867 = vmatprep.subr.bf16.mxu0 0
        %3868 = vmatpush1.bf16.msra.mxu0 0
        %3869 = vmatprep.subr.bf16.mxu0 0
        %3870 = vmatpush1.bf16.msra.mxu0 0
        %3871 = vmatprep.mubr.bf16.mxu0 0
        %3872 = vmatmul.mubr.bf16.gmra.mrb[0].mxu0 %v3793
        %v3873 = vpop.f32.mrb[0].mxu0
        %v3874 = vadd.f32 0.0, %v3873
        %v3875 = vpop.f32.mrb[0].mxu0
        %v3876 = vpop.f32.mrb[0].mxu0
        %v3877 = vadd.f32 0.0, %v3876
        %v3878 = vpop.f32.mrb[0].mxu0
        %3879 = vdwg.mxu0
        %3880 = vrot.lane.b32.xlu0 %v893, 104
        %v3881 = vpop.permute.xlu0 %3880
        %3883 = vmatprep.subr.bf16.mxu0 0
        %3884 = vmatpush1.bf16.msra.mxu0 %v3881
        %3885 = vmatprep.subr.bf16.mxu0 0
        %3886 = vmatpush1.bf16.msra.mxu0 0
        %3887 = vmatprep.subr.bf16.mxu0 0
        %3888 = vmatpush1.bf16.msra.mxu0 0
        %3889 = vmatprep.subr.bf16.mxu0 0
        %3890 = vmatpush1.bf16.msra.mxu0 0
        %3891 = vmatprep.subr.bf16.mxu0 0
        %3892 = vmatpush1.bf16.msra.mxu0 0
        %3893 = vmatprep.subr.bf16.mxu0 0
        %3894 = vmatpush1.bf16.msra.mxu0 0
        %3895 = vmatprep.subr.bf16.mxu0 0
        %3896 = vmatpush1.bf16.msra.mxu0 0
        %3897 = vmatprep.subr.bf16.mxu0 0
        %3898 = vmatpush1.bf16.msra.mxu0 0
        %3899 = vmatprep.subr.bf16.mxu0 0
        %3900 = vmatpush1.bf16.msra.mxu0 0
        %3901 = vmatprep.subr.bf16.mxu0 0
        %3902 = vmatpush1.bf16.msra.mxu0 0
        %3903 = vmatprep.subr.bf16.mxu0 0
        %3904 = vmatpush1.bf16.msra.mxu0 0
        %3905 = vmatprep.subr.bf16.mxu0 0
        %3906 = vmatpush1.bf16.msra.mxu0 0
        %3907 = vmatprep.subr.bf16.mxu0 0
        %3908 = vmatpush1.bf16.msra.mxu0 0
        %3909 = vmatprep.subr.bf16.mxu0 0
        %3910 = vmatpush1.bf16.msra.mxu0 0
        %3911 = vmatprep.subr.bf16.mxu0 0
        %3912 = vmatpush1.bf16.msra.mxu0 0
        %3913 = vmatprep.subr.bf16.mxu0 0
        %3914 = vmatpush1.bf16.msra.mxu0 0
        %3915 = vmatprep.mubr.bf16.mxu0 0
        %3916 = vmatmul.mubr.bf16.gmra.mrb[0].mxu0 %v3793
        %v3917 = vpop.f32.mrb[0].mxu0
        %v3918 = vadd.f32 0.0, %v3917
        %v3919 = vpop.f32.mrb[0].mxu0
        %v3920 = vpop.f32.mrb[0].mxu0
        %v3921 = vadd.f32 0.0, %v3920
        %v3922 = vpop.f32.mrb[0].mxu0
        %3923 = vdwg.mxu0
        %3924 = vrot.lane.b32.xlu0 %v894, 104
        %v3925 = vpop.permute.xlu0 %3924
        %3927 = vmatprep.subr.bf16.mxu0 0
        %3928 = vmatpush1.bf16.msra.mxu0 %v3925
        %3929 = vmatprep.subr.bf16.mxu0 0
        %3930 = vmatpush1.bf16.msra.mxu0 0
        %3931 = vmatprep.subr.bf16.mxu0 0
        %3932 = vmatpush1.bf16.msra.mxu0 0
        %3933 = vmatprep.subr.bf16.mxu0 0
        %3934 = vmatpush1.bf16.msra.mxu0 0
        %3935 = vmatprep.subr.bf16.mxu0 0
        %3936 = vmatpush1.bf16.msra.mxu0 0
        %3937 = vmatprep.subr.bf16.mxu0 0
        %3938 = vmatpush1.bf16.msra.mxu0 0
        %3939 = vmatprep.subr.bf16.mxu0 0
        %3940 = vmatpush1.bf16.msra.mxu0 0
        %3941 = vmatprep.subr.bf16.mxu0 0
        %3942 = vmatpush1.bf16.msra.mxu0 0
        %3943 = vmatprep.subr.bf16.mxu0 0
        %3944 = vmatpush1.bf16.msra.mxu0 0
        %3945 = vmatprep.subr.bf16.mxu0 0
        %3946 = vmatpush1.bf16.msra.mxu0 0
        %3947 = vmatprep.subr.bf16.mxu0 0
        %3948 = vmatpush1.bf16.msra.mxu0 0
        %3949 = vmatprep.subr.bf16.mxu0 0
        %3950 = vmatpush1.bf16.msra.mxu0 0
        %3951 = vmatprep.subr.bf16.mxu0 0
        %3952 = vmatpush1.bf16.msra.mxu0 0
        %3953 = vmatprep.subr.bf16.mxu0 0
        %3954 = vmatpush1.bf16.msra.mxu0 0
        %3955 = vmatprep.subr.bf16.mxu0 0
        %3956 = vmatpush1.bf16.msra.mxu0 0
        %3957 = vmatprep.subr.bf16.mxu0 0
        %3958 = vmatpush1.bf16.msra.mxu0 0
        %3959 = vmatprep.mubr.bf16.mxu0 0
        %3960 = vmatmul.mubr.bf16.gmra.mrb[0].mxu0 %v3793
        %v3961 = vpop.f32.mrb[0].mxu0
        %v3962 = vadd.f32 0.0, %v3961
        %v3963 = vpop.f32.mrb[0].mxu0
        %v3964 = vpop.f32.mrb[0].mxu0
        %v3965 = vadd.f32 0.0, %v3964
        %v3966 = vpop.f32.mrb[0].mxu0
        %3967 = vdwg.mxu0
        %3968 = vrot.lane.b32.xlu0 %v895, 104
        %v3969 = vpop.permute.xlu0 %3968
        %3971 = vmatprep.subr.bf16.mxu0 0
        %3972 = vmatpush1.bf16.msra.mxu0 %v3969
        %3973 = vmatprep.subr.bf16.mxu0 0
        %3974 = vmatpush1.bf16.msra.mxu0 0
        %3975 = vmatprep.subr.bf16.mxu0 0
        %3976 = vmatpush1.bf16.msra.mxu0 0
        %3977 = vmatprep.subr.bf16.mxu0 0
        %3978 = vmatpush1.bf16.msra.mxu0 0
        %3979 = vmatprep.subr.bf16.mxu0 0
        %3980 = vmatpush1.bf16.msra.mxu0 0
        %3981 = vmatprep.subr.bf16.mxu0 0
        %3982 = vmatpush1.bf16.msra.mxu0 0
        %3983 = vmatprep.subr.bf16.mxu0 0
        %3984 = vmatpush1.bf16.msra.mxu0 0
        %3985 = vmatprep.subr.bf16.mxu0 0
        %3986 = vmatpush1.bf16.msra.mxu0 0
        %3987 = vmatprep.subr.bf16.mxu0 0
        %3988 = vmatpush1.bf16.msra.mxu0 0
        %3989 = vmatprep.subr.bf16.mxu0 0
        %3990 = vmatpush1.bf16.msra.mxu0 0
        %3991 = vmatprep.subr.bf16.mxu0 0
        %3992 = vmatpush1.bf16.msra.mxu0 0
        %3993 = vmatprep.subr.bf16.mxu0 0
        %3994 = vmatpush1.bf16.msra.mxu0 0
        %3995 = vmatprep.subr.bf16.mxu0 0
        %3996 = vmatpush1.bf16.msra.mxu0 0
        %3997 = vmatprep.subr.bf16.mxu0 0
        %3998 = vmatpush1.bf16.msra.mxu0 0
        %3999 = vmatprep.subr.bf16.mxu0 0
        %4000 = vmatpush1.bf16.msra.mxu0 0
        %4001 = vmatprep.subr.bf16.mxu0 0
        %4002 = vmatpush1.bf16.msra.mxu0 0
        %4003 = vmatprep.mubr.bf16.mxu0 0
        %4004 = vmatmul.mubr.bf16.gmra.mrb[0].mxu0 %v3793
        %v4005 = vpop.f32.mrb[0].mxu0
        %v4006 = vadd.f32 0.0, %v4005
        %v4007 = vpop.f32.mrb[0].mxu0
        %v4008 = vpop.f32.mrb[0].mxu0
        %v4009 = vadd.f32 0.0, %v4008
        %v4010 = vpop.f32.mrb[0].mxu0
        %4011 = vdwg.mxu0
        %4012 = vrot.lane.b32.xlu0 %v896, 104
        %v4013 = vpop.permute.xlu0 %4012
        %4015 = vmatprep.subr.bf16.mxu0 0
        %4016 = vmatpush1.bf16.msra.mxu0 %v4013
        %4017 = vmatprep.subr.bf16.mxu0 0
        %4018 = vmatpush1.bf16.msra.mxu0 0
        %4019 = vmatprep.subr.bf16.mxu0 0
        %4020 = vmatpush1.bf16.msra.mxu0 0
        %4021 = vmatprep.subr.bf16.mxu0 0
        %4022 = vmatpush1.bf16.msra.mxu0 0
        %4023 = vmatprep.subr.bf16.mxu0 0
        %4024 = vmatpush1.bf16.msra.mxu0 0
        %4025 = vmatprep.subr.bf16.mxu0 0
        %4026 = vmatpush1.bf16.msra.mxu0 0
        %4027 = vmatprep.subr.bf16.mxu0 0
        %4028 = vmatpush1.bf16.msra.mxu0 0
        %4029 = vmatprep.subr.bf16.mxu0 0
        %4030 = vmatpush1.bf16.msra.mxu0 0
        %4031 = vmatprep.subr.bf16.mxu0 0
        %4032 = vmatpush1.bf16.msra.mxu0 0
        %4033 = vmatprep.subr.bf16.mxu0 0
        %4034 = vmatpush1.bf16.msra.mxu0 0
        %4035 = vmatprep.subr.bf16.mxu0 0
        %4036 = vmatpush1.bf16.msra.mxu0 0
        %4037 = vmatprep.subr.bf16.mxu0 0
        %4038 = vmatpush1.bf16.msra.mxu0 0
        %4039 = vmatprep.subr.bf16.mxu0 0
        %4040 = vmatpush1.bf16.msra.mxu0 0
        %4041 = vmatprep.subr.bf16.mxu0 0
        %4042 = vmatpush1.bf16.msra.mxu0 0
        %4043 = vmatprep.subr.bf16.mxu0 0
        %4044 = vmatpush1.bf16.msra.mxu0 0
        %4045 = vmatprep.subr.bf16.mxu0 0
        %4046 = vmatpush1.bf16.msra.mxu0 0
        %4047 = vmatprep.mubr.bf16.mxu0 0
        %4048 = vmatmul.mubr.bf16.gmra.mrb[0].mxu0 %v3793
        %v4049 = vpop.f32.mrb[0].mxu0
        %v4050 = vadd.f32 0.0, %v4049
        %v4051 = vpop.f32.mrb[0].mxu0
        %v4052 = vpop.f32.mrb[0].mxu0
        %v4053 = vadd.f32 0.0, %v4052
        %v4054 = vpop.f32.mrb[0].mxu0
        %4055 = vdwg.mxu0
        %4056 = vrot.lane.b32.xlu0 %v897, 104
        %v4057 = vpop.permute.xlu0 %4056
        %4059 = vmatprep.subr.bf16.mxu0 0
        %4060 = vmatpush1.bf16.msra.mxu0 %v4057
        %4061 = vmatprep.subr.bf16.mxu0 0
        %4062 = vmatpush1.bf16.msra.mxu0 0
        %4063 = vmatprep.subr.bf16.mxu0 0
        %4064 = vmatpush1.bf16.msra.mxu0 0
        %4065 = vmatprep.subr.bf16.mxu0 0
        %4066 = vmatpush1.bf16.msra.mxu0 0
        %4067 = vmatprep.subr.bf16.mxu0 0
        %4068 = vmatpush1.bf16.msra.mxu0 0
        %4069 = vmatprep.subr.bf16.mxu0 0
        %4070 = vmatpush1.bf16.msra.mxu0 0
        %4071 = vmatprep.subr.bf16.mxu0 0
        %4072 = vmatpush1.bf16.msra.mxu0 0
        %4073 = vmatprep.subr.bf16.mxu0 0
        %4074 = vmatpush1.bf16.msra.mxu0 0
        %4075 = vmatprep.subr.bf16.mxu0 0
        %4076 = vmatpush1.bf16.msra.mxu0 0
        %4077 = vmatprep.subr.bf16.mxu0 0
        %4078 = vmatpush1.bf16.msra.mxu0 0
        %4079 = vmatprep.subr.bf16.mxu0 0
        %4080 = vmatpush1.bf16.msra.mxu0 0
        %4081 = vmatprep.subr.bf16.mxu0 0
        %4082 = vmatpush1.bf16.msra.mxu0 0
        %4083 = vmatprep.subr.bf16.mxu0 0
        %4084 = vmatpush1.bf16.msra.mxu0 0
        %4085 = vmatprep.subr.bf16.mxu0 0
        %4086 = vmatpush1.bf16.msra.mxu0 0
        %4087 = vmatprep.subr.bf16.mxu0 0
        %4088 = vmatpush1.bf16.msra.mxu0 0
        %4089 = vmatprep.subr.bf16.mxu0 0
        %4090 = vmatpush1.bf16.msra.mxu0 0
        %4091 = vmatprep.mubr.bf16.mxu0 0
        %4092 = vmatmul.mubr.bf16.gmra.mrb[0].mxu0 %v3793
        %v4093 = vpop.f32.mrb[0].mxu0
        %v4094 = vadd.f32 0.0, %v4093
        %v4095 = vpop.f32.mrb[0].mxu0
        %v4096 = vpop.f32.mrb[0].mxu0
        %v4097 = vadd.f32 0.0, %v4096
        %v4098 = vpop.f32.mrb[0].mxu0
        %4099 = vdwg.mxu0
        %4100 = vrot.lane.b32.xlu0 %v898, 104
        %v4101 = vpop.permute.xlu0 %4100
        %4103 = vmatprep.subr.bf16.mxu0 0
        %4104 = vmatpush1.bf16.msra.mxu0 %v4101
        %4105 = vmatprep.subr.bf16.mxu0 0
        %4106 = vmatpush1.bf16.msra.mxu0 0
        %4107 = vmatprep.subr.bf16.mxu0 0
        %4108 = vmatpush1.bf16.msra.mxu0 0
        %4109 = vmatprep.subr.bf16.mxu0 0
        %4110 = vmatpush1.bf16.msra.mxu0 0
        %4111 = vmatprep.subr.bf16.mxu0 0
        %4112 = vmatpush1.bf16.msra.mxu0 0
        %4113 = vmatprep.subr.bf16.mxu0 0
        %4114 = vmatpush1.bf16.msra.mxu0 0
        %4115 = vmatprep.subr.bf16.mxu0 0
        %4116 = vmatpush1.bf16.msra.mxu0 0
        %4117 = vmatprep.subr.bf16.mxu0 0
        %4118 = vmatpush1.bf16.msra.mxu0 0
        %4119 = vmatprep.subr.bf16.mxu0 0
        %4120 = vmatpush1.bf16.msra.mxu0 0
        %4121 = vmatprep.subr.bf16.mxu0 0
        %4122 = vmatpush1.bf16.msra.mxu0 0
        %4123 = vmatprep.subr.bf16.mxu0 0
        %4124 = vmatpush1.bf16.msra.mxu0 0
        %4125 = vmatprep.subr.bf16.mxu0 0
        %4126 = vmatpush1.bf16.msra.mxu0 0
        %4127 = vmatprep.subr.bf16.mxu0 0
        %4128 = vmatpush1.bf16.msra.mxu0 0
        %4129 = vmatprep.subr.bf16.mxu0 0
        %4130 = vmatpush1.bf16.msra.mxu0 0
        %4131 = vmatprep.subr.bf16.mxu0 0
        %4132 = vmatpush1.bf16.msra.mxu0 0
        %4133 = vmatprep.subr.bf16.mxu0 0
        %4134 = vmatpush1.bf16.msra.mxu0 0
        %4135 = vmatprep.mubr.bf16.mxu0 0
        %4136 = vmatmul.mubr.bf16.gmra.mrb[0].mxu0 %v3793
        %v4137 = vpop.f32.mrb[0].mxu0
        %v4138 = vadd.f32 0.0, %v4137
        %v4139 = vpop.f32.mrb[0].mxu0
        %v4140 = vpop.f32.mrb[0].mxu0
        %v4141 = vadd.f32 0.0, %v4140
        %v4142 = vpop.f32.mrb[0].mxu0
        %4143 = vdwg.mxu0
        %4160 = vrot.lane.b32.xlu0 %v2185, 8
        %v4161 = vpop.permute.xlu0 %4160
        %4162 = vrot.lane.b32.xlu0 %v2188, 8
        %v4163 = vpop.permute.xlu0 %4162
        %4164 = vrot.lane.b32.xlu0 %v2230, 8
        %v4165 = vpop.permute.xlu0 %4164
        %4166 = vrot.lane.b32.xlu0 %v2233, 8
        %v4167 = vpop.permute.xlu0 %4166
        %4168 = vrot.lane.b32.xlu0 %v2275, 8
        %v4169 = vpop.permute.xlu0 %4168
        %4170 = vrot.lane.b32.xlu0 %v2278, 8
        %v4171 = vpop.permute.xlu0 %4170
        %4172 = vrot.lane.b32.xlu0 %v2320, 8
        %v4173 = vpop.permute.xlu0 %4172
        %4174 = vrot.lane.b32.xlu0 %v2323, 8
        %v4175 = vpop.permute.xlu0 %4174
        %4176 = vrot.lane.b32.xlu0 %v2365, 8
        %v4177 = vpop.permute.xlu0 %4176
        %4178 = vrot.lane.b32.xlu0 %v2368, 8
        %v4179 = vpop.permute.xlu0 %4178
        %4180 = vrot.lane.b32.xlu0 %v2410, 8
        %v4181 = vpop.permute.xlu0 %4180
        %4182 = vrot.lane.b32.xlu0 %v2413, 8
        %v4183 = vpop.permute.xlu0 %4182
        %4184 = vrot.lane.b32.xlu0 %v2455, 8
        %v4185 = vpop.permute.xlu0 %4184
        %4186 = vrot.lane.b32.xlu0 %v2458, 8
        %v4187 = vpop.permute.xlu0 %4186
        %4188 = vrot.lane.b32.xlu0 %v2500, 8
        %v4189 = vpop.permute.xlu0 %4188
        %4190 = vrot.lane.b32.xlu0 %v2503, 8
        %v4191 = vpop.permute.xlu0 %4190
        %4224 = vrot.lane.b32.xlu0 %v3011, 16
        %v4225 = vpop.permute.xlu0 %4224
        %4226 = vrot.lane.b32.xlu0 %v3014, 16
        %v4227 = vpop.permute.xlu0 %4226
        %4228 = vrot.lane.b32.xlu0 %v3055, 16
        %v4229 = vpop.permute.xlu0 %4228
        %4230 = vrot.lane.b32.xlu0 %v3058, 16
        %v4231 = vpop.permute.xlu0 %4230
        %4232 = vrot.lane.b32.xlu0 %v3099, 16
        %v4233 = vpop.permute.xlu0 %4232
        %4234 = vrot.lane.b32.xlu0 %v3102, 16
        %v4235 = vpop.permute.xlu0 %4234
        %4236 = vrot.lane.b32.xlu0 %v3143, 16
        %v4237 = vpop.permute.xlu0 %4236
        %4238 = vrot.lane.b32.xlu0 %v3146, 16
        %v4239 = vpop.permute.xlu0 %4238
        %4240 = vrot.lane.b32.xlu0 %v3187, 16
        %v4241 = vpop.permute.xlu0 %4240
        %4242 = vrot.lane.b32.xlu0 %v3190, 16
        %v4243 = vpop.permute.xlu0 %4242
        %4244 = vrot.lane.b32.xlu0 %v3231, 16
        %v4245 = vpop.permute.xlu0 %4244
        %4246 = vrot.lane.b32.xlu0 %v3234, 16
        %v4247 = vpop.permute.xlu0 %4246
        %4248 = vrot.lane.b32.xlu0 %v3275, 16
        %v4249 = vpop.permute.xlu0 %4248
        %4250 = vrot.lane.b32.xlu0 %v3278, 16
        %v4251 = vpop.permute.xlu0 %4250
        %4252 = vrot.lane.b32.xlu0 %v3319, 16
        %v4253 = vpop.permute.xlu0 %4252
        %4254 = vrot.lane.b32.xlu0 %v3322, 16
        %v4255 = vpop.permute.xlu0 %4254
        %4288 = vrot.lane.b32.xlu0 %v3830, 24
        %v4289 = vpop.permute.xlu0 %4288
        %4290 = vrot.lane.b32.xlu0 %v3833, 24
        %v4291 = vpop.permute.xlu0 %4290
        %4292 = vrot.lane.b32.xlu0 %v3874, 24
        %v4293 = vpop.permute.xlu0 %4292
        %4294 = vrot.lane.b32.xlu0 %v3877, 24
        %v4295 = vpop.permute.xlu0 %4294
        %4296 = vrot.lane.b32.xlu0 %v3918, 24
        %v4297 = vpop.permute.xlu0 %4296
        %4298 = vrot.lane.b32.xlu0 %v3921, 24
        %v4299 = vpop.permute.xlu0 %4298
        %4300 = vrot.lane.b32.xlu0 %v3962, 24
        %v4301 = vpop.permute.xlu0 %4300
        %4302 = vrot.lane.b32.xlu0 %v3965, 24
        %v4303 = vpop.permute.xlu0 %4302
        %4304 = vrot.lane.b32.xlu0 %v4006, 24
        %v4305 = vpop.permute.xlu0 %4304
        %4306 = vrot.lane.b32.xlu0 %v4009, 24
        %v4307 = vpop.permute.xlu0 %4306
        %4308 = vrot.lane.b32.xlu0 %v4050, 24
        %v4309 = vpop.permute.xlu0 %4308
        %4310 = vrot.lane.b32.xlu0 %v4053, 24
        %v4311 = vpop.permute.xlu0 %4310
        %4312 = vrot.lane.b32.xlu0 %v4094, 24
        %v4313 = vpop.permute.xlu0 %4312
        %4314 = vrot.lane.b32.xlu0 %v4097, 24
        %v4315 = vpop.permute.xlu0 %4314
        %4316 = vrot.lane.b32.xlu0 %v4138, 24
        %v4317 = vpop.permute.xlu0 %4316
        %4318 = vrot.lane.b32.xlu0 %v4141, 24
        %v4319 = vpop.permute.xlu0 %4318
        %v4336 = vsel %vm899, %v1370, %v4161
        %v4337 = vsel %vm899, %v1373, %v4163
        %v4338 = vsel %vm899, %v1411, %v4165
        %v4339 = vsel %vm899, %v1414, %v4167
        %v4340 = vsel %vm899, %v1452, %v4169
        %v4341 = vsel %vm899, %v1455, %v4171
        %v4342 = vsel %vm899, %v1493, %v4173
        %v4343 = vsel %vm899, %v1496, %v4175
        %v4344 = vsel %vm899, %v1534, %v4177
        %v4345 = vsel %vm899, %v1537, %v4179
        %v4346 = vsel %vm899, %v1575, %v4181
        %v4347 = vsel %vm899, %v1578, %v4183
        %v4348 = vsel %vm899, %v1616, %v4185
        %v4349 = vsel %vm899, %v1619, %v4187
        %v4350 = vsel %vm899, %v1657, %v4189
        %v4351 = vsel %vm899, %v1660, %v4191
        %v4352 = vsel %vm1276, %v4336, %v4225
        %v4353 = vsel %vm1276, %v4337, %v4227
        %v4354 = vsel %vm1276, %v4338, %v4229
        %v4355 = vsel %vm1276, %v4339, %v4231
        %v4356 = vsel %vm1276, %v4340, %v4233
        %v4357 = vsel %vm1276, %v4341, %v4235
        %v4358 = vsel %vm1276, %v4342, %v4237
        %v4359 = vsel %vm1276, %v4343, %v4239
        %v4360 = vsel %vm1276, %v4344, %v4241
        %v4361 = vsel %vm1276, %v4345, %v4243
        %v4362 = vsel %vm1276, %v4346, %v4245
        %v4363 = vsel %vm1276, %v4347, %v4247
        %v4364 = vsel %vm1276, %v4348, %v4249
        %v4365 = vsel %vm1276, %v4349, %v4251
        %v4366 = vsel %vm1276, %v4350, %v4253
        %v4367 = vsel %vm1276, %v4351, %v4255
        %vm4368 = vcmask 195584
        %v4369 = vsel %vm4368, %v4352, %v4289
        %v4370 = vsel %vm4368, %v4353, %v4291
        %v4371 = vsel %vm4368, %v4354, %v4293
        %v4372 = vsel %vm4368, %v4355, %v4295
        %v4373 = vsel %vm4368, %v4356, %v4297
        %v4374 = vsel %vm4368, %v4357, %v4299
        %v4375 = vsel %vm4368, %v4358, %v4301
        %v4376 = vsel %vm4368, %v4359, %v4303
        %v4377 = vsel %vm4368, %v4360, %v4305
        %v4378 = vsel %vm4368, %v4361, %v4307
        %v4379 = vsel %vm4368, %v4362, %v4309
        %v4380 = vsel %vm4368, %v4363, %v4311
        %v4381 = vsel %vm4368, %v4364, %v4313
        %v4382 = vsel %vm4368, %v4365, %v4315
        %v4383 = vsel %vm4368, %v4366, %v4317
        %v4384 = vsel %vm4368, %v4367, %v4319
        %v4385 = vpack.c.bf16 %v4370, %v4369
        %v4386 = vpack.c.bf16 %v4372, %v4371
        %v4387 = vpack.c.bf16 %v4374, %v4373
        %v4388 = vpack.c.bf16 %v4376, %v4375
        %v4389 = vpack.c.bf16 %v4378, %v4377
        %v4390 = vpack.c.bf16 %v4380, %v4379
        %v4391 = vpack.c.bf16 %v4382, %v4381
        %v4392 = vpack.c.bf16 %v4384, %v4383
        %v4393 = vld [vmem:[#allocation8] sm:$0xf]
        %v4394 = vld [vmem:[#allocation8 + $0x4] sm:$0xf]
        %v4395 = vld [vmem:[#allocation8 + $0x8] sm:$0xf]
        %v4396 = vld [vmem:[#allocation8 + $0xc] sm:$0xf]
        %v4397 = vld [vmem:[%s8] sm:$0x1]
        %v4399 = vlaneseq
        %v4400 = vshrl.u32 %v4399, 7
        %v4401 = vsub.s32 0, %v4400
        %v4402 = vrot.slane %v4397, %v4401
        %v4408 = vunpack.c.l.b16 %v4393
        %v4409 = vunpack.c.l.b16 %v4394
        %v4410 = vunpack.c.l.b16 %v4395
        %v4411 = vunpack.c.l.b16 %v4396
        %v4412 = vpack.c.b16 %v4409, %v4408
        %v4413 = vpack.c.b16 %v4411, %v4410
        %v4417 = vsel %vm513, %v4385, 0
        %v4420 = vsel %vm513, %v4386, 0
        %v4423 = vsel %vm513, %v4387, 0
        %v4426 = vsel %vm513, %v4388, 0
        %v4429 = vsel %vm513, %v4389, 0
        %v4432 = vsel %vm513, %v4390, 0
        %v4435 = vsel %vm513, %v4391, 0
        %v4438 = vsel %vm513, %v4392, 0
        %4440 = vmatprep.subr.bf16.mxu0 0
        %4441 = vmatpush1.bf16.msra.mxu0 %v4412
        %4442 = vmatprep.subr.bf16.mxu0 0
        %4443 = vmatpush1.bf16.msra.mxu0 %v4413
        %4444 = vmatprep.subr.bf16.mxu0 0
        %4445 = vmatpush1.bf16.msra.mxu0 0
        %4446 = vmatprep.subr.bf16.mxu0 0
        %4447 = vmatpush1.bf16.msra.mxu0 0
        %4448 = vmatprep.subr.bf16.mxu0 0
        %4449 = vmatpush1.bf16.msra.mxu0 0
        %4450 = vmatprep.subr.bf16.mxu0 0
        %4451 = vmatpush1.bf16.msra.mxu0 0
        %4452 = vmatprep.subr.bf16.mxu0 0
        %4453 = vmatpush1.bf16.msra.mxu0 0
        %4454 = vmatprep.subr.bf16.mxu0 0
        %4455 = vmatpush1.bf16.msra.mxu0 0
        %4456 = vmatprep.subr.bf16.mxu0 0
        %4457 = vmatpush1.bf16.msra.mxu0 0
        %4458 = vmatprep.subr.bf16.mxu0 0
        %4459 = vmatpush1.bf16.msra.mxu0 0
        %4460 = vmatprep.subr.bf16.mxu0 0
        %4461 = vmatpush1.bf16.msra.mxu0 0
        %4462 = vmatprep.subr.bf16.mxu0 0
        %4463 = vmatpush1.bf16.msra.mxu0 0
        %4464 = vmatprep.subr.bf16.mxu0 0
        %4465 = vmatpush1.bf16.msra.mxu0 0
        %4466 = vmatprep.subr.bf16.mxu0 0
        %4467 = vmatpush1.bf16.msra.mxu0 0
        %4468 = vmatprep.subr.bf16.mxu0 0
        %4469 = vmatpush1.bf16.msra.mxu0 0
        %4470 = vmatprep.subr.bf16.mxu0 0
        %4471 = vmatpush1.bf16.msra.mxu0 0
        %4472 = vmatprep.mubr.bf16.mxu0 0
        %4473 = vmatmul.mubr.bf16.gmra.mrb[0].mxu0 %v4417
        %v4474 = vpop.f32.mrb[0].mxu0
        %v4475 = vadd.f32 %v4402, %v4474
        %v4476 = vpop.f32.mrb[0].mxu0
        %v4477 = vpop.f32.mrb[0].mxu0
        %v4478 = vadd.f32 %v4402, %v4477
        %v4479 = vpop.f32.mrb[0].mxu0
        %4480 = vmatprep.mubr.bf16.mxu0 0
        %4481 = vmatmul.mubr.bf16.gmra.mrb[0].mxu0 %v4420
        %v4482 = vpop.f32.mrb[0].mxu0
        %v4483 = vadd.f32 %v4402, %v4482
        %v4484 = vpop.f32.mrb[0].mxu0
        %v4485 = vpop.f32.mrb[0].mxu0
        %v4486 = vadd.f32 %v4402, %v4485
        %v4487 = vpop.f32.mrb[0].mxu0
        %4488 = vmatprep.mubr.bf16.mxu0 0
        %4489 = vmatmul.mubr.bf16.gmra.mrb[0].mxu0 %v4423
        %v4490 = vpop.f32.mrb[0].mxu0
        %v4491 = vadd.f32 %v4402, %v4490
        %v4492 = vpop.f32.mrb[0].mxu0
        %v4493 = vpop.f32.mrb[0].mxu0
        %v4494 = vadd.f32 %v4402, %v4493
        %v4495 = vpop.f32.mrb[0].mxu0
        %4496 = vmatprep.mubr.bf16.mxu0 0
        %4497 = vmatmul.mubr.bf16.gmra.mrb[0].mxu0 %v4426
        %v4498 = vpop.f32.mrb[0].mxu0
        %v4499 = vadd.f32 %v4402, %v4498
        %v4500 = vpop.f32.mrb[0].mxu0
        %v4501 = vpop.f32.mrb[0].mxu0
        %v4502 = vadd.f32 %v4402, %v4501
        %v4503 = vpop.f32.mrb[0].mxu0
        %4504 = vmatprep.mubr.bf16.mxu0 0
        %4505 = vmatmul.mubr.bf16.gmra.mrb[0].mxu0 %v4429
        %v4506 = vpop.f32.mrb[0].mxu0
        %v4507 = vadd.f32 %v4402, %v4506
        %v4508 = vpop.f32.mrb[0].mxu0
        %v4509 = vpop.f32.mrb[0].mxu0
        %v4510 = vadd.f32 %v4402, %v4509
        %v4511 = vpop.f32.mrb[0].mxu0
        %4512 = vmatprep.mubr.bf16.mxu0 0
        %4513 = vmatmul.mubr.bf16.gmra.mrb[0].mxu0 %v4432
        %v4514 = vpop.f32.mrb[0].mxu0
        %v4515 = vadd.f32 %v4402, %v4514
        %v4516 = vpop.f32.mrb[0].mxu0
        %v4517 = vpop.f32.mrb[0].mxu0
        %v4518 = vadd.f32 %v4402, %v4517
        %v4519 = vpop.f32.mrb[0].mxu0
        %4520 = vmatprep.mubr.bf16.mxu0 0
        %4521 = vmatmul.mubr.bf16.gmra.mrb[0].mxu0 %v4435
        %v4522 = vpop.f32.mrb[0].mxu0
        %v4523 = vadd.f32 %v4402, %v4522
        %v4524 = vpop.f32.mrb[0].mxu0
        %v4525 = vpop.f32.mrb[0].mxu0
        %v4526 = vadd.f32 %v4402, %v4525
        %v4527 = vpop.f32.mrb[0].mxu0
        %4528 = vmatprep.mubr.bf16.mxu0 0
        %4529 = vmatmul.mubr.bf16.gmra.mrb[0].mxu0 %v4438
        %v4530 = vpop.f32.mrb[0].mxu0
        %v4531 = vadd.f32 %v4402, %v4530
        %v4532 = vpop.f32.mrb[0].mxu0
        %v4533 = vpop.f32.mrb[0].mxu0
        %v4534 = vadd.f32 %v4402, %v4533
        %v4535 = vpop.f32.mrb[0].mxu0
        %4536 = vdwg.mxu0
        %4537 = vst.msk [vmem:[%s425] sm:$0xff] %vm513, %v4475
        %4538 = vst.msk [vmem:[%s425 + $0x8] sm:$0xff] %vm513, %v4478
        %4539 = vst.msk [vmem:[%s425 + $0x10] sm:$0xff] %vm513, %v4483
        %4540 = vst.msk [vmem:[%s425 + $0x18] sm:$0xff] %vm513, %v4486
        %4541 = vst.msk [vmem:[%s425 + $0x20] sm:$0xff] %vm513, %v4491
        %4542 = vst.msk [vmem:[%s425 + $0x28] sm:$0xff] %vm513, %v4494
        %4543 = vst.msk [vmem:[%s425 + $0x30] sm:$0xff] %vm513, %v4499
        %4544 = vst.msk [vmem:[%s425 + $0x38] sm:$0xff] %vm513, %v4502
        %4545 = vst.msk [vmem:[%s425 + $0x40] sm:$0xff] %vm513, %v4507
        %4546 = vst.msk [vmem:[%s425 + $0x48] sm:$0xff] %vm513, %v4510
        %4547 = vst.msk [vmem:[%s425 + $0x50] sm:$0xff] %vm513, %v4515
        %4548 = vst.msk [vmem:[%s425 + $0x58] sm:$0xff] %vm513, %v4518
        %4549 = vst.msk [vmem:[%s425 + $0x60] sm:$0xff] %vm513, %v4523
        %4550 = vst.msk [vmem:[%s425 + $0x68] sm:$0xff] %vm513, %v4526
        %4551 = vst.msk [vmem:[%s425 + $0x70] sm:$0xff] %vm513, %v4531
        %4552 = vst.msk [vmem:[%s425 + $0x78] sm:$0xff] %vm513, %v4534
        %s4553 = sand.u32 %s235, 1
        %s4554 = scalar_lea.sflag [#allocation4], %s4553
        %s4555 = sand.u32 %s235, 1
        %s4556 = smul.addr %s4555, 128
        %s4557 = scalar_lea.vmem [#allocation10], %s4556
        %s4558 = sand.u32 %s261, 1
        %s4559 = scalar_lea.sflag [#allocation12], %s4558
        %s4560 = sand.u32 %s261, 1
        %s4561 = smul.addr %s4560, 64
        %s4562 = scalar_lea.vmem [#allocation11], %s4561
        // Predicated region
        $region73: #{tpu_custom_call.1} parent=55 // pred_check
          %p4563 = pneg %p245
        $region74: #{tpu_custom_call.1} parent=55 // pred_check_branch
          %4565 = sbr.rel (%p4563) target = $region76
        $region75: #{tpu_custom_call.1} parent=55 // pred_region
          %s4567 = ssub.s32 2048, 2048
          %4568 = vsyncadd %s4554, %s4567
          %s4569 = smul.addr %s33, 16
          %s4570 = smul.addr %s4569, 128
          %s4571 = scalar_lea.hbm %s9, %s4570
          %s4572 = sshll.u32 %s4557, 4
          %s4573 = int_to_ptr.vmem [resolvable:$true] %s4572
          %4578 = dma.vmem_to_hbm [thread:$0]  %s4573, 2048, %s4571, %s4554, 128, 128, 8
        $region76: #{tpu_custom_call.1} parent=55 // pred_fallthru
          _
        // Predicated region
        $region77: #{tpu_custom_call.1} parent=55 // pred_check
          %p4579 = pneg %p271
        $region78: #{tpu_custom_call.1} parent=55 // pred_check_branch
          %4581 = sbr.rel (%p4579) target = $region80
        $region79: #{tpu_custom_call.1} parent=55 // pred_region
          #allocation14 [shape = 'u32[6]{0}', space=smem, size = 0x18, scoped, tag = 'DMA stride descriptor']
          %s4583 = ssub.s32 1024, 1024
          %4584 = vsyncadd %s4559, %s4583
          %s4585 = smul.addr %s33, 2
          %s4586 = smul.addr %s4585, 128
          %s4587 = scalar_lea.hbm %s10, %s4586
          %s4589 = sshll.u32 1, 14
          %s4590 = sxor.u32 4294967295, %s4589
          %s4593 = sshll.u32 7, 18
          %s4594 = sxor.u32 4294967295, %s4593
          %s4595 = sand.u32 0, %s4594
          %s4597 = sor.u32 %s4595, 0
          %s4599 = sshll.u32 3, 24
          %s4600 = sxor.u32 4294967295, %s4599
          %s4601 = sand.u32 %s4597, %s4600
          %s4603 = sor.u32 %s4601, 0
          %s4604 = sshll.u32 %s4562, 4
          %s4605 = int_to_ptr.vmem [resolvable:$true] %s4604
          %4611 = sst [smem:[#allocation14]] 256
          %s4612 = scalar_lea.smem [#allocation14], 1
          %4613 = sst [smem:[%s4612]] 512
          %s4614 = scalar_lea.smem [#allocation14], 2
          %4615 = sst [smem:[%s4614]] 2
          %s4616 = scalar_lea.smem [#allocation14], 3
          %4617 = sst [smem:[%s4616]] 128
          %s4618 = scalar_lea.smem [#allocation14], 4
          %4619 = sst [smem:[%s4618]] 128
          %s4620 = scalar_lea.smem [#allocation14], 5
          %4621 = sst [smem:[%s4620]] 8
          %4623 = dma.general %s4605, 1024, %s4587, %s4559, [#allocation13], [#allocation14], %s4603, 0
        $region80: #{tpu_custom_call.1} parent=55 // pred_fallthru
          _
      $region56: #{tpu_custom_call.1} parent=5 // pred_fallthru
        _
      %p4624 = scmp.le.s32.totalorder 2, %s28
      // Predicated region
      $region81: #{tpu_custom_call.1} parent=5 // pred_check
        %p4625 = pneg %p4624
      $region82: #{tpu_custom_call.1} parent=5 // pred_check_branch
        %4627 = sbr.rel (%p4625) target = $region84
      $region83: #{tpu_custom_call.1} parent=5 // pred_region
        %s4628 = ssub.s32 %s28, 2
        // Predicated region
        $region85: #{tpu_custom_call.1} parent=83 // pred_check
          %p4629 = pneg %p251
        $region86: #{tpu_custom_call.1} parent=83 // pred_check_branch
          %4631 = sbr.rel (%p4629) target = $region88
        $region87: #{tpu_custom_call.1} parent=83 // pred_region
          %s4632 = sand.u32 %s236, 1
          %s4633 = scalar_lea.sflag [#allocation4], %s4632
          %s4634 = sand.u32 %s236, 1
          %s4635 = smul.addr %s4634, 128
          %s4636 = scalar_lea.vmem [#allocation10], %s4635
          %4637 = dma.done %s4633, 2048
        $region88: #{tpu_custom_call.1} parent=83 // pred_fallthru
          _
        // Predicated region
        $region89: #{tpu_custom_call.1} parent=83 // pred_check
          %p4638 = pneg %p277
        $region90: #{tpu_custom_call.1} parent=83 // pred_check_branch
          %4640 = sbr.rel (%p4638) target = $region92
        $region91: #{tpu_custom_call.1} parent=83 // pred_region
          %s4641 = sand.u32 %s262, 1
          %s4642 = scalar_lea.sflag [#allocation12], %s4641
          %s4643 = sand.u32 %s262, 1
          %s4644 = smul.addr %s4643, 64
          %s4645 = scalar_lea.vmem [#allocation11], %s4644
          %4646 = dma.done %s4642, 1024
        $region92: #{tpu_custom_call.1} parent=83 // pred_fallthru
          _
      $region84: #{tpu_custom_call.1} parent=5 // pred_fallthru
        _
    $region6: #{tpu_custom_call.1} parent=1 // loop_footer
      %s32 = sadd.s32 1, %s28
    $region7: #{tpu_custom_call.1} parent=1 // loop_footer_branch
      %27 = sbr.rel target = $region3
    $region8: #{tpu_custom_call.1} parent=1 // loop_exit
      _
    %4647 = vsyncpa [#allocation3], 1
    %s4648 = scalar_lea.sflag [#allocation3], 1
    %4649 = vsyncpa %s4648, 1
    %4650 = vsyncpa [#allocation6], 1
    %4651 = vsyncpa [#allocation9], 1
    %4652 = vsyncpa [#allocation4], 1
    %s4653 = scalar_lea.sflag [#allocation4], 1
    %4654 = vsyncpa %s4653, 1
    %4655 = vsyncpa [#allocation12], 1
    %s4656 = scalar_lea.sflag [#allocation12], 1
    %4657 = vsyncpa %s4656, 1

</llo_original>
